<compile_context>
chip_gen: v5e
topology: v5e:2x2
jax: 0.10.0
libtpu: 0.0.40
codegen_flags: <defaults>
</compile_context>

<pallas_src>
import jax
import jax.numpy as jnp
from jax.experimental import pallas as pl
from jax.experimental.pallas import tpu as pltpu

EPS = 1e-6
NUM_GROUPS = 32


# --------------------------------------------------------------------------
# Pass 1: per-tile GroupNorm statistics (tile sum + tile-centered sum of squares)
# --------------------------------------------------------------------------
def _gn_stats_kernel(x_ref, s1_ref, s2_ref):
    n = pl.program_id(1)
    x = x_ref[0]                                            # (tn, C) f32
    s = jnp.sum(x, axis=0, keepdims=True)                   # (1, C)
    mu = s * (1.0 / x.shape[0])                             # per-tile channel mean
    d = x - mu
    # Output block (1, nt, C) is revisited across the n axis; write row n.
    s1_ref[0, pl.ds(n, 1), :] = s
    s2_ref[0, pl.ds(n, 1), :] = jnp.sum(d * d, axis=0, keepdims=True)


# --------------------------------------------------------------------------
# Pass 2: GroupNorm apply + fused K/V projection (bf16 MXU, f32 accumulate)
# --------------------------------------------------------------------------
def _gn_kv_kernel(x_ref, scale_ref, shift_ref, wkv_ref, bkv_ref, k_ref, v_ref):
    c = x_ref.shape[-1]
    hn = (x_ref[0] * scale_ref[0] + shift_ref[0]).astype(jnp.bfloat16)     # (tn, C)
    kv = jnp.dot(hn, wkv_ref[...], preferred_element_type=jnp.float32)
    kv = kv + bkv_ref[...]                                                 # (tn, 2C)
    k_ref[0] = kv[:, :c].astype(jnp.bfloat16)     # aligned lane slices when C%128==0
    v_ref[0] = kv[:, c:].astype(jnp.bfloat16)


# --------------------------------------------------------------------------
# Pass 3: GroupNorm + Q projection + flash attention + proj_out + residual
# --------------------------------------------------------------------------
def _flash_attn_proj_kernel(x_ref, scale_ref, shift_ref, wq_ref, bq_ref,
                            k_ref, v_ref, wp_ref, bp_ref, o_ref,
                            q_scr, m_scr, l_scr, acc_scr):
    ki = pl.program_id(2)

    @pl.when(ki == 0)
    def _():
        # The x tile is loaded anyway for the residual -> fuse GN apply + Wq here
        # (1/sqrt(C) scale is pre-folded into Wq/bq in the wrapper).
        hn = (x_ref[0] * scale_ref[0] + shift_ref[0]).astype(jnp.bfloat16)  # (tq, C)
        q = jnp.dot(hn, wq_ref[...], preferred_element_type=jnp.float32)
        q_scr[...] = (q + bq_ref[...]).astype(jnp.bfloat16)
        m_scr[...] = jnp.full_like(m_scr, -jnp.inf)
        l_scr[...] = jnp.zeros_like(l_scr)
        acc_scr[...] = jnp.zeros_like(acc_scr)

    q = q_scr[...]                                          # (tq, C)  bf16
    k = k_ref[0]                                            # (tkv, C) bf16
    # Contract channel dims directly (canonical flash-attention NT dot; no
    # in-kernel K transpose on the XLU).
    s = jax.lax.dot_general(q, k, (((1,), (1,)), ((), ())),
                            preferred_element_type=jnp.float32)   # (tq, tkv)

    m_prev = m_scr[...]
    m_new = jnp.maximum(m_prev, jnp.max(s, axis=-1, keepdims=True))
    alpha = jnp.exp(m_prev - m_new)
    p = jnp.exp(s - m_new)                                  # un-normalized (deferred)
    l_scr[...] = alpha * l_scr[...] + jnp.sum(p, axis=-1, keepdims=True)
    acc_scr[...] = alpha * acc_scr[...] + jnp.dot(
        p.astype(jnp.bfloat16), v_ref[0], preferred_element_type=jnp.float32)
    m_scr[...] = m_new

    @pl.when(ki == pl.num_programs(2) - 1)
    def _():
        inv_l = pl.reciprocal(l_scr[...], approx=True)      # EUP, finalize-only
        attn = (acc_scr[...] * inv_l).astype(jnp.bfloat16)  # (tq, C)
        proj = jnp.dot(attn, wp_ref[...], preferred_element_type=jnp.float32)
        o_ref[0] = x_ref[0] + proj + bp_ref[...]


# --------------------------------------------------------------------------
# Tile selection helpers
# --------------------------------------------------------------------------
def _pick_tile(n, target):
    """Largest divisor of n <= target, preferring multiples of 256 (MXU depth on
    v6e/v7x), then 128, then 8; falls back to n (full extent, always legal)."""
    if n <= target:
        return n
    for step in (256, 128, 8):
        start = target - (target % step)
        for cand in range(start, step - 1, -step):
            if n % cand == 0:
                return cand
    return n


def _choose_kv_block(n, c, tq, budget_bytes):
    """Largest divisor of n (prefer full extent / multiples of 256) whose pass-3
    VMEM-footprint estimate fits budget_bytes.  A full-extent block makes K/V
    VMEM-resident: DMA'd once per batch element instead of once per query tile."""
    fixed = 2 * 2 * (tq * c * 4)          # x in + out tiles, f32, double-buffered
    fixed += 2 * 2 * (c * c * 2)          # wq + wp, bf16, double-buffered
    fixed += tq * c * (2 + 4)             # q scratch (bf16) + acc scratch (f32)
    fixed += 8 * c * 4 + 8 * tq           # scale/shift/biases + m/l scratch
    divisors = sorted((d for d in range(1, n + 1) if n % d == 0), reverse=True)
    for step in (256, 128, 8):
        for d in divisors:
            if d != n and d % step != 0:
                continue
            kv = 2 * 2 * (d * c * 2)      # K + V tiles, bf16, double-buffered
            inter = tq * d * 6            # (tq, d) f32 logits + bf16 probabilities
            if fixed + kv + inter <= budget_bytes:
                return d
    return _pick_tile(n, 256)


# --------------------------------------------------------------------------
# Wrappers
# --------------------------------------------------------------------------
def spatial_self_attention_flat(x_bnc, params, *, tq=256, tkv=None, tn=512):
    """x_bnc: (B, N, C) float32, channels-last (spatial flattened)."""
    B, N, C = x_bnc.shape
    assert C % NUM_GROUPS == 0, "GroupNorm(32) requires C divisible by 32"
    gs = C // NUM_GROUPS
    x = x_bnc.astype(jnp.float32)

    tn = _pick_tile(N, tn)
    tq = _pick_tile(N, tq)
    # Keep >= 2 parallel (b, qi) grid cells so both TensorCores get work (v7x).
    while B * (N // tq) < 2 and tq % 2 == 0 and tq > 128 and (tq // 2) % 8 == 0:
        tq //= 2
    if tkv is None:
        tkv = _choose_kv_block(N, C, tq, budget_bytes=32 * 1024 * 1024)
    else:
        tkv = _pick_tile(N, tkv)
    nt = N // tn

    # ---- pass 1: per-tile centered GroupNorm statistics ----
    s1, s2c = pl.pallas_call(
        _gn_stats_kernel,
        out_shape=(jax.ShapeDtypeStruct((B, nt, C), jnp.float32),
                   jax.ShapeDtypeStruct((B, nt, C), jnp.float32)),
        grid_spec=pl.GridSpec(
            grid=(B, nt),
            in_specs=[pl.BlockSpec((1, tn, C), lambda b, n: (b, n, 0))],
            out_specs=[pl.BlockSpec((1, nt, C), lambda b, n: (b, 0, 0)),
                       pl.BlockSpec((1, nt, C), lambda b, n: (b, 0, 0))]),
        compiler_params=pltpu.CompilerParams(
            dimension_semantics=("parallel", "arbitrary")),
    )(x)

    # Tiny (B, *) math: Chan-combine per-tile stats -> per-channel scale / shift.
    cnt = jnp.float32(N * gs)
    tile_mean = s1 / jnp.float32(tn)                                   # (B, nt, C)
    g_mean = s1.reshape(B, nt, NUM_GROUPS, gs).sum(axis=(1, 3)) / cnt  # (B, G)
    delta = tile_mean.reshape(B, nt, NUM_GROUPS, gs) - g_mean[:, None, :, None]
    g_m2 = (s2c.reshape(B, nt, NUM_GROUPS, gs).sum(axis=(1, 3))
            + jnp.float32(tn) * (delta * delta).sum(axis=(1, 3)))
    var = jnp.maximum(g_m2, 0.0) / cnt
    rstd = jax.lax.rsqrt(var + EPS)                                    # (B, G)
    mu_c = jnp.repeat(g_mean, gs, axis=1).reshape(B, 1, C)
    rstd_c = jnp.repeat(rstd, gs, axis=1).reshape(B, 1, C)
    gamma = params["gamma"].reshape(1, 1, C).astype(jnp.float32)
    beta = params["beta"].reshape(1, 1, C).astype(jnp.float32)
    scale = rstd_c * gamma                                             # (B, 1, C)
    shift = beta - mu_c * scale                                        # (B, 1, C)

    # Weights: torch conv (Cout, Cin) -> (Cin, Cout); 1/sqrt(C) folded into Wq/bq.
    sc = float(C) ** -0.5
    wq = (params["wq"].astype(jnp.float32).T * sc).astype(jnp.bfloat16)        # (C, C)
    bq = (params["bq"].astype(jnp.float32) * sc).reshape(1, C)
    wkv = jnp.concatenate([params["wk"].astype(jnp.float32).T,
                           params["wv"].astype(jnp.float32).T],
                          axis=1).astype(jnp.bfloat16)                         # (C, 2C)
    bkv = jnp.concatenate([params["bk"].astype(jnp.float32),
                           params["bv"].astype(jnp.float32)]).reshape(1, 2 * C)
    wp = params["wp"].astype(jnp.float32).T.astype(jnp.bfloat16)               # (C, C)
    bp = params["bp"].astype(jnp.float32).reshape(1, C)

    # ---- pass 2: GroupNorm apply + fused K/V projection ----
    row_spec = pl.BlockSpec((1, tn, C), lambda b, n: (b, n, 0))
    bc_spec = pl.BlockSpec((1, 1, C), lambda b, n: (b, 0, 0))
    k, v = pl.pallas_call(
        _gn_kv_kernel,
        out_shape=(jax.ShapeDtypeStruct((B, N, C), jnp.bfloat16),) * 2,
        grid_spec=pl.GridSpec(
            grid=(B, nt),
            in_specs=[row_spec, bc_spec, bc_spec,
                      pl.BlockSpec((C, 2 * C), lambda b, n: (0, 0)),
                      pl.BlockSpec((1, 2 * C), lambda b, n: (0, 0))],
            out_specs=[row_spec, row_spec]),
        compiler_params=pltpu.CompilerParams(
            dimension_semantics=("parallel", "parallel")),
    )(x, scale, shift, wkv, bkv)

    # ---- pass 3: GN + Q proj + flash attention + proj_out + residual ----
    out = pl.pallas_call(
        _flash_attn_proj_kernel,
        out_shape=jax.ShapeDtypeStruct((B, N, C), jnp.float32),
        grid_spec=pltpu.PrefetchScalarGridSpec(
            num_scalar_prefetch=0,
            grid=(B, N // tq, N // tkv),
            in_specs=[pl.BlockSpec((1, tq, C), lambda b, qi, ki: (b, qi, 0)),   # x
                      pl.BlockSpec((1, 1, C), lambda b, qi, ki: (b, 0, 0)),     # scale
                      pl.BlockSpec((1, 1, C), lambda b, qi, ki: (b, 0, 0)),     # shift
                      pl.BlockSpec((C, C), lambda b, qi, ki: (0, 0)),           # wq
                      pl.BlockSpec((1, C), lambda b, qi, ki: (0, 0)),           # bq
                      pl.BlockSpec((1, tkv, C), lambda b, qi, ki: (b, ki, 0)),  # k
                      pl.BlockSpec((1, tkv, C), lambda b, qi, ki: (b, ki, 0)),  # v
                      pl.BlockSpec((C, C), lambda b, qi, ki: (0, 0)),           # wp
                      pl.BlockSpec((1, C), lambda b, qi, ki: (0, 0))],          # bp
            out_specs=pl.BlockSpec((1, tq, C), lambda b, qi, ki: (b, qi, 0)),
            scratch_shapes=[pltpu.VMEM((tq, C), jnp.bfloat16),   # q (per query tile)
                            pltpu.VMEM((tq, 1), jnp.float32),    # m
                            pltpu.VMEM((tq, 1), jnp.float32),    # l
                            pltpu.VMEM((tq, C), jnp.float32)]),  # acc
        compiler_params=pltpu.CompilerParams(
            dimension_semantics=("parallel", "parallel", "arbitrary"),
            vmem_limit_bytes=48 * 1024 * 1024),   # headroom on v7x's 64 MiB VMEM
        input_output_aliases={0: 0},              # reuse x's f32 HBM buffer for out
    )(x, scale, shift, wq, bq, k, v, wp, bp)
    return out


def spatial_self_attention(x_nchw, params, **kw):
    """NCHW (PyTorch layout) wrapper.  Channels-last callers should use
    spatial_self_attention_flat directly to avoid HBM transpose round trips."""
    B, C, H, W = x_nchw.shape
    x = jnp.transpose(x_nchw, (0, 2, 3, 1)).reshape(B, H * W, C)
    out = spatial_self_attention_flat(x, params, **kw)
    return jnp.transpose(out.reshape(B, H, W, C), (0, 3, 1, 2))


# --------------------------------------------------------------------------
# Pure-JAX f32 reference (mirror of the PyTorch forward) + demo
# --------------------------------------------------------------------------
def _reference(x, params):
    B, C, H, W = x.shape
    gs = C // NUM_GROUPS
    xr = x.reshape(B, NUM_GROUPS, gs, H, W)
    mu = xr.mean(axis=(2, 3, 4), keepdims=True)
    var = ((xr - mu) ** 2).mean(axis=(2, 3, 4), keepdims=True)
    hn = ((xr - mu) / jnp.sqrt(var + EPS)).reshape(B, C, H, W)
    hn = hn * params["gamma"][None, :, None, None] + params["beta"][None, :, None, None]

    def conv1x1(t, w, b):
        return jnp.einsum("oc,bchw->bohw", w, t) + b[None, :, None, None]

    q = conv1x1(hn, params["wq"], params["bq"])
    k = conv1x1(hn, params["wk"], params["bk"])
    v = conv1x1(hn, params["wv"], params["bv"])
    N = H * W
    qf = q.reshape(B, C, N).transpose(0, 2, 1)
    kf = k.reshape(B, C, N)
    w_ = jnp.einsum("bij,bjk->bik", qf, kf) * (int(C) ** (-0.5))
    w_ = jax.nn.softmax(w_, axis=2)
    vf = v.reshape(B, C, N)
    h_ = jnp.einsum("bij,bjk->bik", vf, w_.transpose(0, 2, 1)).reshape(B, C, H, W)
    h_ = conv1x1(h_, params["wp"], params["bp"])
    return x + h_


def _init_params(key, C):
    ks = jax.random.split(key, 10)
    s = 1.0 / jnp.sqrt(jnp.float32(C))
    return {
        "gamma": 1.0 + 0.1 * jax.random.normal(ks[0], (C,), jnp.float32),
        "beta": 0.1 * jax.random.normal(ks[1], (C,), jnp.float32),
        "wq": s * jax.random.normal(ks[2], (C, C), jnp.float32),
        "bq": 0.05 * jax.random.normal(ks[3], (C,), jnp.float32),
        "wk": s * jax.random.normal(ks[4], (C, C), jnp.float32),
        "bk": 0.05 * jax.random.normal(ks[5], (C,), jnp.float32),
        "wv": s * jax.random.normal(ks[6], (C, C), jnp.float32),
        "bv": 0.05 * jax.random.normal(ks[7], (C,), jnp.float32),
        "wp": s * jax.random.normal(ks[8], (C, C), jnp.float32),
        "bp": 0.05 * jax.random.normal(ks[9], (C,), jnp.float32),
    }


if __name__ == "__main__":
    # C >= 128 keeps the last dim lane-dense; N = 256 exercises the flash path
    # with a fully VMEM-resident K/V block (single kv grid step).
    B, C, H, W = 2, 128, 16, 16
    key = jax.random.PRNGKey(0)
    kx, kp = jax.random.split(key)
    x = jax.random.normal(kx, (B, C, H, W), jnp.float32)
    params = _init_params(kp, C)

    fwd = jax.jit(spatial_self_attention)
    y = jax.block_until_ready(fwd(x, params))
    y_ref = _reference(x, params)

    assert y.shape == x.shape
    max_err = float(jnp.max(jnp.abs(y - y_ref)))
    mean_err = float(jnp.mean(jnp.abs(y - y_ref)))
    # bf16 MXU matmuls (f32 accumulation) vs an all-f32 reference -> loose tolerance.
    assert max_err < 1.5e-1 and mean_err < 2e-2, (max_err, mean_err)
    print("KERNEL_OK")
</pallas_src>

<mosaic_0001>
module attributes {stable_mosaic.version = 11 : i64} {
  func.func @_gn_stats_kernel(%arg0: i32, %arg1: i32, %arg2: memref<1x256x128xf32, #tpu.memory_space<vmem>>, %arg3: memref<1x1x128xf32, #tpu.memory_space<vmem>>, %arg4: memref<1x1x128xf32, #tpu.memory_space<vmem>>) attributes {dimension_semantics = [#tpu.dimension_semantics<parallel>, #tpu.dimension_semantics<arbitrary>], iteration_bounds = array<i64: 2, 1>, scalar_prefetch = 0 : i64, scratch_operands = 0 : i64, tpu.core_type = #tpu.core_type<tc>, window_params = [{transform_indices = @transform_0, window_bounds = array<i64: 1, 256, 128>}, {transform_indices = @transform_1, window_bounds = array<i64: 1, 1, 128>}, {transform_indices = @transform_2, window_bounds = array<i64: 1, 1, 128>}]} {
    %c0 = arith.constant 0 : index
    %c0_0 = arith.constant 0 : index
    %c0_1 = arith.constant 0 : index
    %0 = vector.load %arg2[%c0, %c0_0, %c0_1] : memref<1x256x128xf32, #tpu.memory_space<vmem>>, vector<1x256x128xf32>
    %1 = vector.shape_cast %0 : vector<1x256x128xf32> to vector<256x128xf32>
    %cst = arith.constant dense<0.000000e+00> : vector<128xf32>
    %2 = vector.multi_reduction <add>, %1, %cst [0] : vector<256x128xf32> to vector<128xf32>
    %3 = vector.shape_cast %2 : vector<128xf32> to vector<1x128xf32>
    %cst_2 = arith.constant 3.906250e-03 : f32
    %4 = vector.broadcast %cst_2 : f32 to vector<1x128xf32>
    %5 = arith.mulf %3, %4 : vector<1x128xf32>
    %6 = vector.broadcast %5 : vector<1x128xf32> to vector<256x128xf32>
    %7 = arith.subf %1, %6 : vector<256x128xf32>
    %c0_3 = arith.constant 0 : index
    %8 = arith.index_cast %arg1 : i32 to index
    %c0_4 = arith.constant 0 : index
    %9 = vector.load %arg3[%c0_3, %8, %c0_4] : memref<1x1x128xf32, #tpu.memory_space<vmem>>, vector<1x1x128xf32>
    %10 = vector.shape_cast %9 : vector<1x1x128xf32> to vector<1x128xf32>
    %11 = vector.shape_cast %3 : vector<1x128xf32> to vector<1x1x128xf32>
    tpu.vector_store %arg3[%c0_3, %8, %c0_4], %11 {strides = array<i32>} : memref<1x1x128xf32, #tpu.memory_space<vmem>>, vector<1x1x128xf32>,
    %12 = arith.mulf %7, %7 : vector<256x128xf32>
    %cst_5 = arith.constant dense<0.000000e+00> : vector<128xf32>
    %13 = vector.multi_reduction <add>, %12, %cst_5 [0] : vector<256x128xf32> to vector<128xf32>
    %14 = vector.shape_cast %13 : vector<128xf32> to vector<1x128xf32>
    %c0_6 = arith.constant 0 : index
    %15 = arith.index_cast %arg1 : i32 to index
    %c0_7 = arith.constant 0 : index
    %16 = vector.load %arg4[%c0_6, %15, %c0_7] : memref<1x1x128xf32, #tpu.memory_space<vmem>>, vector<1x1x128xf32>
    %17 = vector.shape_cast %16 : vector<1x1x128xf32> to vector<1x128xf32>
    %18 = vector.shape_cast %14 : vector<1x128xf32> to vector<1x1x128xf32>
    tpu.vector_store %arg4[%c0_6, %15, %c0_7], %18 {strides = array<i32>} : memref<1x1x128xf32, #tpu.memory_space<vmem>>, vector<1x1x128xf32>,
    return
  }
  func.func @transform_0(%arg0: i32, %arg1: i32) -> (i32, i32, i32) {
    %c0_i32 = arith.constant 0 : i32
    %c0_i32_0 = arith.constant 0 : i32
    return %arg0, %arg1, %c0_i32 : i32, i32, i32
  }
  func.func @transform_1(%arg0: i32, %arg1: i32) -> (i32, i32, i32) {
    %c0_i32 = arith.constant 0 : i32
    %c0_i32_0 = arith.constant 0 : i32
    %c0_i32_1 = arith.constant 0 : i32
    return %arg0, %c0_i32, %c0_i32_0 : i32, i32, i32
  }
  func.func @transform_2(%arg0: i32, %arg1: i32) -> (i32, i32, i32) {
    %c0_i32 = arith.constant 0 : i32
    %c0_i32_0 = arith.constant 0 : i32
    %c0_i32_1 = arith.constant 0 : i32
    return %arg0, %c0_i32, %c0_i32_0 : i32, i32, i32
  }
}

module attributes {stable_mosaic.version = 11 : i64} {
  func.func @_gn_kv_kernel(%arg0: i32, %arg1: i32, %arg2: memref<1x256x128xf32, #tpu.memory_space<vmem>>, %arg3: memref<1x1x128xf32, #tpu.memory_space<vmem>>, %arg4: memref<1x1x128xf32, #tpu.memory_space<vmem>>, %arg5: memref<128x256xbf16, #tpu.memory_space<vmem>>, %arg6: memref<1x256xf32, #tpu.memory_space<vmem>>, %arg7: memref<1x256x128xbf16, #tpu.memory_space<vmem>>, %arg8: memref<1x256x128xbf16, #tpu.memory_space<vmem>>) attributes {dimension_semantics = [#tpu.dimension_semantics<parallel>, #tpu.dimension_semantics<parallel>], iteration_bounds = array<i64: 2, 1>, scalar_prefetch = 0 : i64, scratch_operands = 0 : i64, tpu.core_type = #tpu.core_type<tc>, window_params = [{transform_indices = @transform_0, window_bounds = array<i64: 1, 256, 128>}, {transform_indices = @transform_1, window_bounds = array<i64: 1, 1, 128>}, {transform_indices = @transform_2, window_bounds = array<i64: 1, 1, 128>}, {pipeline_mode = #tpu.pipeline_mode<synchronous>, transform_indices = @transform_3, window_bounds = array<i64: 128, 256>}, {pipeline_mode = #tpu.pipeline_mode<synchronous>, transform_indices = @transform_4, window_bounds = array<i64: 1, 256>}, {transform_indices = @transform_5, window_bounds = array<i64: 1, 256, 128>}, {transform_indices = @transform_6, window_bounds = array<i64: 1, 256, 128>}]} {
    %c0 = arith.constant 0 : index
    %c0_0 = arith.constant 0 : index
    %c0_1 = arith.constant 0 : index
    %0 = vector.load %arg2[%c0, %c0_0, %c0_1] : memref<1x256x128xf32, #tpu.memory_space<vmem>>, vector<1x256x128xf32>
    %1 = vector.shape_cast %0 : vector<1x256x128xf32> to vector<256x128xf32>
    %c0_2 = arith.constant 0 : index
    %c0_3 = arith.constant 0 : index
    %c0_4 = arith.constant 0 : index
    %2 = vector.load %arg3[%c0_2, %c0_3, %c0_4] : memref<1x1x128xf32, #tpu.memory_space<vmem>>, vector<1x1x128xf32>
    %3 = vector.shape_cast %2 : vector<1x1x128xf32> to vector<1x128xf32>
    %4 = vector.broadcast %3 : vector<1x128xf32> to vector<256x128xf32>
    %5 = arith.mulf %1, %4 : vector<256x128xf32>
    %c0_5 = arith.constant 0 : index
    %c0_6 = arith.constant 0 : index
    %c0_7 = arith.constant 0 : index
    %6 = vector.load %arg4[%c0_5, %c0_6, %c0_7] : memref<1x1x128xf32, #tpu.memory_space<vmem>>, vector<1x1x128xf32>
    %7 = vector.shape_cast %6 : vector<1x1x128xf32> to vector<1x128xf32>
    %8 = vector.broadcast %7 : vector<1x128xf32> to vector<256x128xf32>
    %9 = arith.addf %5, %8 : vector<256x128xf32>
    %10 = arith.truncf %9 : vector<256x128xf32> to vector<256x128xbf16>
    %c0_8 = arith.constant 0 : index
    %c0_9 = arith.constant 0 : index
    %11 = vector.load %arg5[%c0_8, %c0_9] : memref<128x256xbf16, #tpu.memory_space<vmem>>, vector<128x256xbf16>
    %cst = arith.constant dense<0.000000e+00> : vector<256x256xf32>
    %12 = tpu.matmul %10, %11, %cst {dimension_numbers = #tpu.dot_dimension_numbers<[1], [0], [0], [1], [0, 0, 1, 1], [], []>} : vector<256x128xbf16>, vector<128x256xbf16>, vector<256x256xf32> -> vector<256x256xf32>
    %c0_10 = arith.constant 0 : index
    %c0_11 = arith.constant 0 : index
    %13 = vector.load %arg6[%c0_10, %c0_11] : memref<1x256xf32, #tpu.memory_space<vmem>>, vector<1x256xf32>
    %14 = vector.broadcast %13 : vector<1x256xf32> to vector<256x256xf32>
    %15 = arith.addf %12, %14 : vector<256x256xf32>
    %16 = vector.extract_strided_slice %15 {offsets = [0, 0], sizes = [256, 128], strides = [1, 1]} : vector<256x256xf32> to vector<256x128xf32>
    %17 = arith.truncf %16 : vector<256x128xf32> to vector<256x128xbf16>
    %c0_12 = arith.constant 0 : index
    %c0_13 = arith.constant 0 : index
    %c0_14 = arith.constant 0 : index
    %18 = vector.load %arg7[%c0_12, %c0_13, %c0_14] : memref<1x256x128xbf16, #tpu.memory_space<vmem>>, vector<1x256x128xbf16>
    %19 = vector.shape_cast %18 : vector<1x256x128xbf16> to vector<256x128xbf16>
    %20 = vector.shape_cast %17 : vector<256x128xbf16> to vector<1x256x128xbf16>
    tpu.vector_store %arg7[%c0_12, %c0_13, %c0_14], %20 {strides = array<i32>} : memref<1x256x128xbf16, #tpu.memory_space<vmem>>, vector<1x256x128xbf16>,
    %21 = vector.extract_strided_slice %15 {offsets = [0, 128], sizes = [256, 128], strides = [1, 1]} : vector<256x256xf32> to vector<256x128xf32>
    %22 = arith.truncf %21 : vector<256x128xf32> to vector<256x128xbf16>
    %c0_15 = arith.constant 0 : index
    %c0_16 = arith.constant 0 : index
    %c0_17 = arith.constant 0 : index
    %23 = vector.load %arg8[%c0_15, %c0_16, %c0_17] : memref<1x256x128xbf16, #tpu.memory_space<vmem>>, vector<1x256x128xbf16>
    %24 = vector.shape_cast %23 : vector<1x256x128xbf16> to vector<256x128xbf16>
    %25 = vector.shape_cast %22 : vector<256x128xbf16> to vector<1x256x128xbf16>
    tpu.vector_store %arg8[%c0_15, %c0_16, %c0_17], %25 {strides = array<i32>} : memref<1x256x128xbf16, #tpu.memory_space<vmem>>, vector<1x256x128xbf16>,
    return
  }
  func.func @transform_0(%arg0: i32, %arg1: i32) -> (i32, i32, i32) {
    %c0_i32 = arith.constant 0 : i32
    %c0_i32_0 = arith.constant 0 : i32
    return %arg0, %arg1, %c0_i32 : i32, i32, i32
  }
  func.func @transform_1(%arg0: i32, %arg1: i32) -> (i32, i32, i32) {
    %c0_i32 = arith.constant 0 : i32
    %c0_i32_0 = arith.constant 0 : i32
    %c0_i32_1 = arith.constant 0 : i32
    return %arg0, %c0_i32, %c0_i32_0 : i32, i32, i32
  }
  func.func @transform_2(%arg0: i32, %arg1: i32) -> (i32, i32, i32) {
    %c0_i32 = arith.constant 0 : i32
    %c0_i32_0 = arith.constant 0 : i32
    %c0_i32_1 = arith.constant 0 : i32
    return %arg0, %c0_i32, %c0_i32_0 : i32, i32, i32
  }
  func.func @transform_3(%arg0: i32, %arg1: i32) -> (i32, i32) {
    %c0_i32 = arith.constant 0 : i32
    %c0_i32_0 = arith.constant 0 : i32
    %c0_i32_1 = arith.constant 0 : i32
    return %c0_i32, %c0_i32_0 : i32, i32
  }
  func.func @transform_4(%arg0: i32, %arg1: i32) -> (i32, i32) {
    %c0_i32 = arith.constant 0 : i32
    %c0_i32_0 = arith.constant 0 : i32
    %c0_i32_1 = arith.constant 0 : i32
    return %c0_i32, %c0_i32_0 : i32, i32
  }
  func.func @transform_5(%arg0: i32, %arg1: i32) -> (i32, i32, i32) {
    %c0_i32 = arith.constant 0 : i32
    %c0_i32_0 = arith.constant 0 : i32
    return %arg0, %arg1, %c0_i32 : i32, i32, i32
  }
  func.func @transform_6(%arg0: i32, %arg1: i32) -> (i32, i32, i32) {
    %c0_i32 = arith.constant 0 : i32
    %c0_i32_0 = arith.constant 0 : i32
    return %arg0, %arg1, %c0_i32 : i32, i32, i32
  }
}

module attributes {stable_mosaic.version = 11 : i64} {
  func.func @_flash_attn_proj_kernel(%arg0: i32, %arg1: i32, %arg2: i32, %arg3: memref<1x256x128xf32, #tpu.memory_space<vmem>>, %arg4: memref<1x1x128xf32, #tpu.memory_space<vmem>>, %arg5: memref<1x1x128xf32, #tpu.memory_space<vmem>>, %arg6: memref<128x128xbf16, #tpu.memory_space<vmem>>, %arg7: memref<1x128xf32, #tpu.memory_space<vmem>>, %arg8: memref<1x256x128xbf16, #tpu.memory_space<vmem>>, %arg9: memref<1x256x128xbf16, #tpu.memory_space<vmem>>, %arg10: memref<128x128xbf16, #tpu.memory_space<vmem>>, %arg11: memref<1x128xf32, #tpu.memory_space<vmem>>, %arg12: memref<1x256x128xf32, #tpu.memory_space<vmem>>, %arg13: memref<256x128xbf16, #tpu.memory_space<vmem>>, %arg14: memref<256x1xf32, #tpu.memory_space<vmem>>, %arg15: memref<256x1xf32, #tpu.memory_space<vmem>>, %arg16: memref<256x128xf32, #tpu.memory_space<vmem>>) attributes {dimension_semantics = [#tpu.dimension_semantics<parallel>, #tpu.dimension_semantics<parallel>, #tpu.dimension_semantics<arbitrary>], iteration_bounds = array<i64: 2, 1, 1>, scalar_prefetch = 0 : i64, scratch_operands = 4 : i64, tpu.core_type = #tpu.core_type<tc>, window_params = [{transform_indices = @transform_0, window_bounds = array<i64: 1, 256, 128>}, {transform_indices = @transform_1, window_bounds = array<i64: 1, 1, 128>}, {transform_indices = @transform_2, window_bounds = array<i64: 1, 1, 128>}, {pipeline_mode = #tpu.pipeline_mode<synchronous>, transform_indices = @transform_3, window_bounds = array<i64: 128, 128>}, {pipeline_mode = #tpu.pipeline_mode<synchronous>, transform_indices = @transform_4, window_bounds = array<i64: 1, 128>}, {transform_indices = @transform_5, window_bounds = array<i64: 1, 256, 128>}, {transform_indices = @transform_6, window_bounds = array<i64: 1, 256, 128>}, {pipeline_mode = #tpu.pipeline_mode<synchronous>, transform_indices = @transform_7, window_bounds = array<i64: 128, 128>}, {pipeline_mode = #tpu.pipeline_mode<synchronous>, transform_indices = @transform_8, window_bounds = array<i64: 1, 128>}, {transform_indices = @transform_9, window_bounds = array<i64: 1, 256, 128>}]} {
    %c0_i32 = arith.constant 0 : i32
    %0 = arith.cmpi eq, %arg2, %c0_i32 : i32
    %1 = arith.extui %0 : i1 to i32
    %c0_i32_0 = arith.constant 0 : i32
    %2 = arith.cmpi ne, %1, %c0_i32_0 : i32
    scf.if %2 {
      %c0_25 = arith.constant 0 : index
      %c0_26 = arith.constant 0 : index
      %c0_27 = arith.constant 0 : index
      %35 = vector.load %arg3[%c0_25, %c0_26, %c0_27] : memref<1x256x128xf32, #tpu.memory_space<vmem>>, vector<1x256x128xf32>
      %36 = vector.shape_cast %35 : vector<1x256x128xf32> to vector<256x128xf32>
      %c0_28 = arith.constant 0 : index
      %c0_29 = arith.constant 0 : index
      %c0_30 = arith.constant 0 : index
      %37 = vector.load %arg4[%c0_28, %c0_29, %c0_30] : memref<1x1x128xf32, #tpu.memory_space<vmem>>, vector<1x1x128xf32>
      %38 = vector.shape_cast %37 : vector<1x1x128xf32> to vector<1x128xf32>
      %39 = vector.broadcast %38 : vector<1x128xf32> to vector<256x128xf32>
      %40 = arith.mulf %36, %39 : vector<256x128xf32>
      %c0_31 = arith.constant 0 : index
      %c0_32 = arith.constant 0 : index
      %c0_33 = arith.constant 0 : index
      %41 = vector.load %arg5[%c0_31, %c0_32, %c0_33] : memref<1x1x128xf32, #tpu.memory_space<vmem>>, vector<1x1x128xf32>
      %42 = vector.shape_cast %41 : vector<1x1x128xf32> to vector<1x128xf32>
      %43 = vector.broadcast %42 : vector<1x128xf32> to vector<256x128xf32>
      %44 = arith.addf %40, %43 : vector<256x128xf32>
      %45 = arith.truncf %44 : vector<256x128xf32> to vector<256x128xbf16>
      %c0_34 = arith.constant 0 : index
      %c0_35 = arith.constant 0 : index
      %46 = vector.load %arg6[%c0_34, %c0_35] : memref<128x128xbf16, #tpu.memory_space<vmem>>, vector<128x128xbf16>
      %cst_36 = arith.constant dense<0.000000e+00> : vector<256x128xf32>
      %47 = tpu.matmul %45, %46, %cst_36 {dimension_numbers = #tpu.dot_dimension_numbers<[1], [0], [0], [1], [0, 0, 1, 1], [], []>} : vector<256x128xbf16>, vector<128x128xbf16>, vector<256x128xf32> -> vector<256x128xf32>
      %c0_37 = arith.constant 0 : index
      %c0_38 = arith.constant 0 : index
      %48 = vector.load %arg7[%c0_37, %c0_38] : memref<1x128xf32, #tpu.memory_space<vmem>>, vector<1x128xf32>
      %49 = vector.broadcast %48 : vector<1x128xf32> to vector<256x128xf32>
      %50 = arith.addf %47, %49 : vector<256x128xf32>
      %51 = arith.truncf %50 : vector<256x128xf32> to vector<256x128xbf16>
      %c0_39 = arith.constant 0 : index
      %c0_40 = arith.constant 0 : index
      %52 = vector.load %arg13[%c0_39, %c0_40] : memref<256x128xbf16, #tpu.memory_space<vmem>>, vector<256x128xbf16>
      tpu.vector_store %arg13[%c0_39, %c0_40], %51 {strides = array<i32>} : memref<256x128xbf16, #tpu.memory_space<vmem>>, vector<256x128xbf16>,
      %cst_41 = arith.constant 0xFF800000 : f32
      %53 = vector.broadcast %cst_41 : f32 to vector<256x1xf32>
      %c0_42 = arith.constant 0 : index
      %c0_43 = arith.constant 0 : index
      %54 = vector.load %arg14[%c0_42, %c0_43] : memref<256x1xf32, #tpu.memory_space<vmem>>, vector<256x1xf32>
      tpu.vector_store %arg14[%c0_42, %c0_43], %53 {strides = array<i32>} : memref<256x1xf32, #tpu.memory_space<vmem>>, vector<256x1xf32>,
      %cst_44 = arith.constant 0.000000e+00 : f32
      %55 = vector.broadcast %cst_44 : f32 to vector<256x1xf32>
      %c0_45 = arith.constant 0 : index
      %c0_46 = arith.constant 0 : index
      %56 = vector.load %arg15[%c0_45, %c0_46] : memref<256x1xf32, #tpu.memory_space<vmem>>, vector<256x1xf32>
      tpu.vector_store %arg15[%c0_45, %c0_46], %55 {strides = array<i32>} : memref<256x1xf32, #tpu.memory_space<vmem>>, vector<256x1xf32>,
      %cst_47 = arith.constant 0.000000e+00 : f32
      %57 = vector.broadcast %cst_47 : f32 to vector<256x128xf32>
      %c0_48 = arith.constant 0 : index
      %c0_49 = arith.constant 0 : index
      %58 = vector.load %arg16[%c0_48, %c0_49] : memref<256x128xf32, #tpu.memory_space<vmem>>, vector<256x128xf32>
      tpu.vector_store %arg16[%c0_48, %c0_49], %57 {strides = array<i32>} : memref<256x128xf32, #tpu.memory_space<vmem>>, vector<256x128xf32>,
    } else {
    }
    %c0 = arith.constant 0 : index
    %c0_1 = arith.constant 0 : index
    %3 = vector.load %arg13[%c0, %c0_1] : memref<256x128xbf16, #tpu.memory_space<vmem>>, vector<256x128xbf16>
    %c0_2 = arith.constant 0 : index
    %c0_3 = arith.constant 0 : index
    %c0_4 = arith.constant 0 : index
    %4 = vector.load %arg8[%c0_2, %c0_3, %c0_4] : memref<1x256x128xbf16, #tpu.memory_space<vmem>>, vector<1x256x128xbf16>
    %5 = vector.shape_cast %4 : vector<1x256x128xbf16> to vector<256x128xbf16>
    %cst = arith.constant dense<0.000000e+00> : vector<256x256xf32>
    %6 = tpu.matmul %3, %5, %cst {dimension_numbers = #tpu.dot_dimension_numbers<[1], [1], [0], [0], [0, 0, 1, 0], [], []>} : vector<256x128xbf16>, vector<256x128xbf16>, vector<256x256xf32> -> vector<256x256xf32>
    %c0_5 = arith.constant 0 : index
    %c0_6 = arith.constant 0 : index
    %7 = vector.load %arg14[%c0_5, %c0_6] : memref<256x1xf32, #tpu.memory_space<vmem>>, vector<256x1xf32>
    %cst_7 = arith.constant dense<0xFF800000> : vector<256xf32>
    %8 = vector.multi_reduction <maximumf>, %6, %cst_7 [1] : vector<256x256xf32> to vector<256xf32>
    %9 = vector.shape_cast %8 : vector<256xf32> to vector<256x1xf32>
    %10 = arith.maximumf %7, %9 : vector<256x1xf32>
    %11 = arith.subf %7, %10 : vector<256x1xf32>
    %12 = math.exp %11 : vector<256x1xf32>
    %13 = vector.broadcast %10 : vector<256x1xf32> to vector<256x256xf32>
    %14 = arith.subf %6, %13 : vector<256x256xf32>
    %15 = math.exp %14 : vector<256x256xf32>
    %c0_8 = arith.constant 0 : index
    %c0_9 = arith.constant 0 : index
    %16 = vector.load %arg15[%c0_8, %c0_9] : memref<256x1xf32, #tpu.memory_space<vmem>>, vector<256x1xf32>
    %17 = arith.mulf %12, %16 : vector<256x1xf32>
    %cst_10 = arith.constant dense<0.000000e+00> : vector<256xf32>
    %18 = vector.multi_reduction <add>, %15, %cst_10 [1] : vector<256x256xf32> to vector<256xf32>
    %19 = vector.shape_cast %18 : vector<256xf32> to vector<256x1xf32>
    %20 = arith.addf %17, %19 : vector<256x1xf32>
    %c0_11 = arith.constant 0 : index
    %c0_12 = arith.constant 0 : index
    %21 = vector.load %arg15[%c0_11, %c0_12] : memref<256x1xf32, #tpu.memory_space<vmem>>, vector<256x1xf32>
    tpu.vector_store %arg15[%c0_11, %c0_12], %20 {strides = array<i32>} : memref<256x1xf32, #tpu.memory_space<vmem>>, vector<256x1xf32>,
    %c0_13 = arith.constant 0 : index
    %c0_14 = arith.constant 0 : index
    %22 = vector.load %arg16[%c0_13, %c0_14] : memref<256x128xf32, #tpu.memory_space<vmem>>, vector<256x128xf32>
    %23 = vector.broadcast %12 : vector<256x1xf32> to vector<256x128xf32>
    %24 = arith.mulf %23, %22 : vector<256x128xf32>
    %25 = arith.truncf %15 : vector<256x256xf32> to vector<256x256xbf16>
    %c0_15 = arith.constant 0 : index
    %c0_16 = arith.constant 0 : index
    %c0_17 = arith.constant 0 : index
    %26 = vector.load %arg9[%c0_15, %c0_16, %c0_17] : memref<1x256x128xbf16, #tpu.memory_space<vmem>>, vector<1x256x128xbf16>
    %27 = vector.shape_cast %26 : vector<1x256x128xbf16> to vector<256x128xbf16>
    %cst_18 = arith.constant dense<0.000000e+00> : vector<256x128xf32>
    %28 = tpu.matmul %25, %27, %cst_18 {dimension_numbers = #tpu.dot_dimension_numbers<[1], [0], [0], [1], [0, 0, 1, 1], [], []>} : vector<256x256xbf16>, vector<256x128xbf16>, vector<256x128xf32> -> vector<256x128xf32>
    %29 = arith.addf %24, %28 : vector<256x128xf32>
    %c0_19 = arith.constant 0 : index
    %c0_20 = arith.constant 0 : index
    %30 = vector.load %arg16[%c0_19, %c0_20] : memref<256x128xf32, #tpu.memory_space<vmem>>, vector<256x128xf32>
    tpu.vector_store %arg16[%c0_19, %c0_20], %29 {strides = array<i32>} : memref<256x128xf32, #tpu.memory_space<vmem>>, vector<256x128xf32>,
    %c0_21 = arith.constant 0 : index
    %c0_22 = arith.constant 0 : index
    %31 = vector.load %arg14[%c0_21, %c0_22] : memref<256x1xf32, #tpu.memory_space<vmem>>, vector<256x1xf32>
    tpu.vector_store %arg14[%c0_21, %c0_22], %10 {strides = array<i32>} : memref<256x1xf32, #tpu.memory_space<vmem>>, vector<256x1xf32>,
    %c0_i32_23 = arith.constant 0 : i32
    %32 = arith.cmpi eq, %arg2, %c0_i32_23 : i32
    %33 = arith.extui %32 : i1 to i32
    %c0_i32_24 = arith.constant 0 : i32
    %34 = arith.cmpi ne, %33, %c0_i32_24 : i32
    scf.if %34 {
      %c0_25 = arith.constant 0 : index
      %c0_26 = arith.constant 0 : index
      %35 = vector.load %arg15[%c0_25, %c0_26] : memref<256x1xf32, #tpu.memory_space<vmem>>, vector<256x1xf32>
      %36 = tpu.reciprocal %35 {approx = true} : vector<256x1xf32> -> vector<256x1xf32>
      %c0_27 = arith.constant 0 : index
      %c0_28 = arith.constant 0 : index
      %37 = vector.load %arg16[%c0_27, %c0_28] : memref<256x128xf32, #tpu.memory_space<vmem>>, vector<256x128xf32>
      %38 = vector.broadcast %36 : vector<256x1xf32> to vector<256x128xf32>
      %39 = arith.mulf %37, %38 : vector<256x128xf32>
      %40 = arith.truncf %39 : vector<256x128xf32> to vector<256x128xbf16>
      %c0_29 = arith.constant 0 : index
      %c0_30 = arith.constant 0 : index
      %41 = vector.load %arg10[%c0_29, %c0_30] : memref<128x128xbf16, #tpu.memory_space<vmem>>, vector<128x128xbf16>
      %cst_31 = arith.constant dense<0.000000e+00> : vector<256x128xf32>
      %42 = tpu.matmul %40, %41, %cst_31 {dimension_numbers = #tpu.dot_dimension_numbers<[1], [0], [0], [1], [0, 0, 1, 1], [], []>} : vector<256x128xbf16>, vector<128x128xbf16>, vector<256x128xf32> -> vector<256x128xf32>
      %c0_32 = arith.constant 0 : index
      %c0_33 = arith.constant 0 : index
      %c0_34 = arith.constant 0 : index
      %43 = vector.load %arg3[%c0_32, %c0_33, %c0_34] : memref<1x256x128xf32, #tpu.memory_space<vmem>>, vector<1x256x128xf32>
      %44 = vector.shape_cast %43 : vector<1x256x128xf32> to vector<256x128xf32>
      %45 = arith.addf %44, %42 : vector<256x128xf32>
      %c0_35 = arith.constant 0 : index
      %c0_36 = arith.constant 0 : index
      %46 = vector.load %arg11[%c0_35, %c0_36] : memref<1x128xf32, #tpu.memory_space<vmem>>, vector<1x128xf32>
      %47 = vector.broadcast %46 : vector<1x128xf32> to vector<256x128xf32>
      %48 = arith.addf %45, %47 : vector<256x128xf32>
      %c0_37 = arith.constant 0 : index
      %c0_38 = arith.constant 0 : index
      %c0_39 = arith.constant 0 : index
      %49 = vector.load %arg12[%c0_37, %c0_38, %c0_39] : memref<1x256x128xf32, #tpu.memory_space<vmem>>, vector<1x256x128xf32>
      %50 = vector.shape_cast %49 : vector<1x256x128xf32> to vector<256x128xf32>
      %51 = vector.shape_cast %48 : vector<256x128xf32> to vector<1x256x128xf32>
      tpu.vector_store %arg12[%c0_37, %c0_38, %c0_39], %51 {strides = array<i32>} : memref<1x256x128xf32, #tpu.memory_space<vmem>>, vector<1x256x128xf32>,
    } else {
    }
    return
  }
  func.func @transform_0(%arg0: i32, %arg1: i32, %arg2: i32) -> (i32, i32, i32) {
    %c0_i32 = arith.constant 0 : i32
    %c0_i32_0 = arith.constant 0 : i32
    return %arg0, %arg1, %c0_i32 : i32, i32, i32
  }
  func.func @transform_1(%arg0: i32, %arg1: i32, %arg2: i32) -> (i32, i32, i32) {
    %c0_i32 = arith.constant 0 : i32
    %c0_i32_0 = arith.constant 0 : i32
    %c0_i32_1 = arith.constant 0 : i32
    return %arg0, %c0_i32, %c0_i32_0 : i32, i32, i32
  }
  func.func @transform_2(%arg0: i32, %arg1: i32, %arg2: i32) -> (i32, i32, i32) {
    %c0_i32 = arith.constant 0 : i32
    %c0_i32_0 = arith.constant 0 : i32
    %c0_i32_1 = arith.constant 0 : i32
    return %arg0, %c0_i32, %c0_i32_0 : i32, i32, i32
  }
  func.func @transform_3(%arg0: i32, %arg1: i32, %arg2: i32) -> (i32, i32) {
    %c0_i32 = arith.constant 0 : i32
    %c0_i32_0 = arith.constant 0 : i32
    %c0_i32_1 = arith.constant 0 : i32
    return %c0_i32, %c0_i32_0 : i32, i32
  }
  func.func @transform_4(%arg0: i32, %arg1: i32, %arg2: i32) -> (i32, i32) {
    %c0_i32 = arith.constant 0 : i32
    %c0_i32_0 = arith.constant 0 : i32
    %c0_i32_1 = arith.constant 0 : i32
    return %c0_i32, %c0_i32_0 : i32, i32
  }
  func.func @transform_5(%arg0: i32, %arg1: i32, %arg2: i32) -> (i32, i32, i32) {
    %c0_i32 = arith.constant 0 : i32
    %c0_i32_0 = arith.constant 0 : i32
    return %arg0, %arg2, %c0_i32 : i32, i32, i32
  }
  func.func @transform_6(%arg0: i32, %arg1: i32, %arg2: i32) -> (i32, i32, i32) {
    %c0_i32 = arith.constant 0 : i32
    %c0_i32_0 = arith.constant 0 : i32
    return %arg0, %arg2, %c0_i32 : i32, i32, i32
  }
  func.func @transform_7(%arg0: i32, %arg1: i32, %arg2: i32) -> (i32, i32) {
    %c0_i32 = arith.constant 0 : i32
    %c0_i32_0 = arith.constant 0 : i32
    %c0_i32_1 = arith.constant 0 : i32
    return %c0_i32, %c0_i32_0 : i32, i32
  }
  func.func @transform_8(%arg0: i32, %arg1: i32, %arg2: i32) -> (i32, i32) {
    %c0_i32 = arith.constant 0 : i32
    %c0_i32_0 = arith.constant 0 : i32
    %c0_i32_1 = arith.constant 0 : i32
    return %c0_i32, %c0_i32_0 : i32, i32
  }
  func.func @transform_9(%arg0: i32, %arg1: i32, %arg2: i32) -> (i32, i32, i32) {
    %c0_i32 = arith.constant 0 : i32
    %c0_i32_0 = arith.constant 0 : i32
    return %arg0, %arg1, %c0_i32 : i32, i32, i32
  }
}

</mosaic_0001>

<llo_original>
// kernel: mul.19
$region0: #{mul.19}
  #allocation0 [shape = 's32[1]{0}', space=sflag, size = 0x4, scoped, tag = 'scoped memory for mul.19']
  %s0 = inlined_call_operand.vmem [shape: f32[128], index: 0, kind: input, shape index: {}]
  %s1 = inlined_call_operand.vmem [shape: f32[2,1,128], index: 1, kind: output, shape index: {}]
  // Predicated region
  $region2: #{mul.19} parent=0 // pred_check
    _
  $region3: #{mul.19} parent=0 // pred_check_branch
    %3 = sbr.rel (0) target = $region5
  $region4: #{mul.19} parent=0 // pred_region
    _
  $region5: #{mul.19} parent=0 // pred_fallthru
    _
  %v4 = vld [vmem:[%s0] ss:$0 sm:$0xff]
  %5 = vst [vmem:[%s1] sm:$0x3] %v4

// kernel: spatial_self_attention.3
$region0: #{spatial_self_attention.3}
  #allocation0 [shape = 'u32[]', space=smem, size = 0x4, offset = 0x4, fixed_abs, tag = 'smem constant byte address 0x4 - core index']
  #allocation1 [shape = 'u32[72,128]{1,0:T(1,128)}', space=vmem, size = 0x9000, scoped, tag = 'internal scratch']
  %s0 = inlined_call_operand.vmem [shape: f32[2,256,128], index: 0, kind: input, shape index: {}]
  %s1 = inlined_call_operand.vmem [shape: f32[2,1,128], index: 1, kind: output, shape index: {0}]
  %s2 = inlined_call_operand.vmem [shape: f32[2,1,128], index: 2, kind: output, shape index: {1}]
  %3 = xla_tuple %s1, %s2
  %s4 = sld [smem:[#allocation0]]
  $region45: #{spatial_self_attention.3} parent=0
    _
  %s6 = ssub.s32 1, %s4
  %s7 = scalar_select 0, %s6, %s4
  loop: start=0, step=1, limit=4
  $region2: #{spatial_self_attention.3} parent=0 // loop_pre_header
    _
  $region3: #{spatial_self_attention.3} parent=0 // loop_header
    %s9 = sphi 0, %s13
    %p10 = scmp.ge.s32.totalorder %s9, 4
    %s16 = sphi 0, %s28
    %s17 = sphi 0, %s24
    %s18 = sphi 0, %s16
    %s19 = sphi 0, %s17
    %s20 = sphi 0, %s18
    %s21 = sphi 0, %s19
    %s33 = sphi 0, %s35
    %s36 = sphi 0, %s33
    %s37 = sphi 0, %s36
    %s53 = sphi 0, %s37
    %s59 = sphi 0, %s61
    %s62 = sphi 0, %s59
    %s63 = sphi 0, %s62
    %s79 = sphi 0, %s63
    %s85 = sphi 0, %s87
    %s88 = sphi 0, %s85
    %s89 = sphi 0, %s88
    %s105 = sphi 0, %s89
  $region4: #{spatial_self_attention.3} parent=0 // loop_header_branch
    %12 = sbr.rel (%p10) target = $region8
  $region5: #{spatial_self_attention.3} parent=0 // loop_body
    %s14 = ssub.s32 %s9, 1
    %s15 = ssub.s32 %s9, 2
    %s22 = sadd.s32 1, %s17
    %p23 = scmp.ge.s32.totalorder %s22, 1
    %s24 = scalar_select %p23, 0, %s22
    %s25 = sadd.s32 1, %s16
    %s26 = scalar_select %p23, %s25, %s16
    %p27 = scmp.ge.s32.totalorder %s26, 2
    %s28 = scalar_select %p27, 0, %s26
    %s29 = ssub.s32 %s16, %s28
    %s30 = ssub.s32 %s17, %s24
    %s31 = sor.u32 %s29, %s30
    %p32 = scmp.eq.s32.totalorder %s31, 0
    %s34 = sadd.s32 %s33, 1
    %s35 = scalar_select %p32, %s33, %s34
    %p38 = pneg %p32
    %p39 = scmp.eq.s32.totalorder %s9, 1
    %p40 = por %p38, %p39
    %p41 = scmp.ne.s32.totalorder %s33, %s36
    %p42 = scmp.eq.s32.totalorder %s9, 0
    %p43 = por %p41, %p42
    %p44 = scmp.ne.s32.totalorder %s33, %s36
    %p45 = scmp.eq.s32.totalorder %s14, 1
    %p46 = por %p44, %p45
    %p47 = scmp.ne.s32.totalorder %s36, %s37
    %p48 = scmp.eq.s32.totalorder %s14, 0
    %p49 = por %p47, %p48
    %p50 = scmp.ne.s32.totalorder %s36, %s37
    %p51 = scmp.eq.s32.totalorder %s15, 1
    %p52 = por %p50, %p51
    %p54 = scmp.ne.s32.totalorder %s37, %s53
    %p55 = scmp.eq.s32.totalorder %s15, 0
    %p56 = por %p54, %p55
    %s57 = ssub.s32 %s16, %s28
    %p58 = scmp.eq.s32.totalorder %s57, 0
    %s60 = sadd.s32 %s59, 1
    %s61 = scalar_select %p58, %s59, %s60
    %p64 = pneg %p58
    %p65 = scmp.eq.s32.totalorder %s9, 1
    %p66 = por %p64, %p65
    %p67 = scmp.ne.s32.totalorder %s59, %s62
    %p68 = scmp.eq.s32.totalorder %s9, 0
    %p69 = por %p67, %p68
    %p70 = scmp.ne.s32.totalorder %s59, %s62
    %p71 = scmp.eq.s32.totalorder %s14, 1
    %p72 = por %p70, %p71
    %p73 = scmp.ne.s32.totalorder %s62, %s63
    %p74 = scmp.eq.s32.totalorder %s14, 0
    %p75 = por %p73, %p74
    %p76 = scmp.ne.s32.totalorder %s62, %s63
    %p77 = scmp.eq.s32.totalorder %s15, 1
    %p78 = por %p76, %p77
    %p80 = scmp.ne.s32.totalorder %s63, %s79
    %p81 = scmp.eq.s32.totalorder %s15, 0
    %p82 = por %p80, %p81
    %s83 = ssub.s32 %s16, %s28
    %p84 = scmp.eq.s32.totalorder %s83, 0
    %s86 = sadd.s32 %s85, 1
    %s87 = scalar_select %p84, %s85, %s86
    %p90 = pneg %p84
    %p91 = scmp.eq.s32.totalorder %s9, 1
    %p92 = por %p90, %p91
    %p93 = scmp.ne.s32.totalorder %s85, %s88
    %p94 = scmp.eq.s32.totalorder %s9, 0
    %p95 = por %p93, %p94
    %p96 = scmp.ne.s32.totalorder %s85, %s88
    %p97 = scmp.eq.s32.totalorder %s14, 1
    %p98 = por %p96, %p97
    %p99 = scmp.ne.s32.totalorder %s88, %s89
    %p100 = scmp.eq.s32.totalorder %s14, 0
    %p101 = por %p99, %p100
    %p102 = scmp.ne.s32.totalorder %s88, %s89
    %p103 = scmp.eq.s32.totalorder %s15, 1
    %p104 = por %p102, %p103
    %p106 = scmp.ne.s32.totalorder %s89, %s105
    %p107 = scmp.eq.s32.totalorder %s15, 0
    %p108 = por %p106, %p107
    %p109 = scmp.le.s32.totalorder 1, %s9
    %p110 = scmp.lt.s32.totalorder %s9, 3
    %p111 = pnand %p109, %p110
    %p112 = pneg %p111
    // Predicated region
    $region9: #{spatial_self_attention.3} parent=5 // pred_check
      _
    $region10: #{spatial_self_attention.3} parent=5 // pred_check_branch
      %114 = sbr.rel (%p111) target = $region12
    $region11: #{spatial_self_attention.3} parent=5 // pred_region
      %s115 = ssub.s32 %s9, 1
    $region12: #{spatial_self_attention.3} parent=5 // pred_fallthru
      _
    %p116 = scmp.lt.s32.totalorder %s9, 2
    // Predicated region
    $region13: #{spatial_self_attention.3} parent=5 // pred_check
      %p117 = pneg %p116
    $region14: #{spatial_self_attention.3} parent=5 // pred_check_branch
      %119 = sbr.rel (%p117) target = $region16
    $region15: #{spatial_self_attention.3} parent=5 // pred_region
      // Predicated region
      $region17: #{spatial_self_attention.3} parent=15 // pred_check
        %p120 = pneg %p43
      $region18: #{spatial_self_attention.3} parent=15 // pred_check_branch
        %122 = sbr.rel (%p120) target = $region20
      $region19: #{spatial_self_attention.3} parent=15 // pred_region
        %s123 = smul.u32 32, %s17
        %p124 = scmp.lt.s32.totalorder %s16, 1
        %s125 = scalar_select %p124, %s16, 1
        %p126 = scmp.lt.s32.totalorder %s123, 31
        %s127 = scalar_select %p126, %s123, 31
        %s128 = smul.addr %s125, 32
        %s129 = sadd.s32 %s127, %s128
        %s130 = smul.addr %s129, 8
        %s131 = scalar_lea.vmem %s0, %s130
        %s132 = smul.u32 32, %s17
      $region20: #{spatial_self_attention.3} parent=15 // pred_fallthru
        _
    $region16: #{spatial_self_attention.3} parent=5 // pred_fallthru
      _
    %p133 = scmp.le.s32.totalorder 1, %s9
    %p134 = scmp.lt.s32.totalorder %s9, 3
    %p135 = pnand %p133, %p134
    %p136 = pneg %p135
    // Predicated region
    $region21: #{spatial_self_attention.3} parent=5 // pred_check
      _
    $region22: #{spatial_self_attention.3} parent=5 // pred_check_branch
      %138 = sbr.rel (%p135) target = $region24
    $region23: #{spatial_self_attention.3} parent=5 // pred_region
      %s139 = ssub.s32 %s9, 1
      %s140 = smul.u32 32, %s19
      %p141 = scmp.lt.s32.totalorder %s18, 1
      %s142 = scalar_select %p141, %s18, 1
      %p143 = scmp.lt.s32.totalorder %s140, 31
      %s144 = scalar_select %p143, %s140, 31
      %s145 = smul.addr %s142, 32
      %s146 = sadd.s32 %s144, %s145
      %s147 = smul.addr %s146, 8
      %s148 = scalar_lea.vmem %s0, %s147
      %p149 = pneg %p49
      %p150 = pneg %p46
      %p151 = pneg %p75
      %p152 = pneg %p72
      %p153 = scmp.lt.s32.totalorder %s18, 1
      %s154 = scalar_select %p153, %s18, 1
      %s155 = scalar_lea.vmem %s1, %s154
      %p156 = pneg %p101
      %p157 = pneg %p98
      %p158 = scmp.lt.s32.totalorder %s18, 1
      %s159 = scalar_select %p158, %s18, 1
      %s160 = scalar_lea.vmem %s2, %s159
      %s161 = smul.u32 32, %s19
      %p162 = scmp.lt.s32.totalorder %s18, 1
      %s163 = scalar_select %p162, %s18, 1
      %p164 = scmp.lt.s32.totalorder %s161, 31
      %s165 = scalar_select %p164, %s161, 31
      %s166 = smul.addr %s163, 32
      %s167 = sadd.s32 %s165, %s166
      %s168 = smul.addr %s167, 8
      %s169 = scalar_lea.vmem %s0, %s168
      %s170 = smul.u32 32, %s19
      %p171 = scmp.lt.s32.totalorder %s18, 1
      %s172 = scalar_select %p171, %s18, 1
      %s173 = scalar_lea.vmem %s1, %s172
      %p174 = scmp.lt.s32.totalorder %s18, 1
      %s175 = scalar_select %p174, %s18, 1
      %s176 = scalar_lea.vmem %s2, %s175
      %v177 = vld [vmem:[%s169] sm:$0xff]
      %v178 = vld [vmem:[%s169 + $0x8] sm:$0xff]
      %v179 = vld [vmem:[%s169 + $0x10] sm:$0xff]
      %v180 = vld [vmem:[%s169 + $0x18] sm:$0xff]
      %v181 = vld [vmem:[%s169 + $0x20] sm:$0xff]
      %v182 = vld [vmem:[%s169 + $0x28] sm:$0xff]
      %v183 = vld [vmem:[%s169 + $0x30] sm:$0xff]
      %v184 = vld [vmem:[%s169 + $0x38] sm:$0xff]
      %v185 = vld [vmem:[%s169 + $0x40] sm:$0xff]
      %v186 = vld [vmem:[%s169 + $0x48] sm:$0xff]
      %v187 = vld [vmem:[%s169 + $0x50] sm:$0xff]
      %v188 = vld [vmem:[%s169 + $0x58] sm:$0xff]
      %v189 = vld [vmem:[%s169 + $0x60] sm:$0xff]
      %v190 = vld [vmem:[%s169 + $0x68] sm:$0xff]
      %v191 = vld [vmem:[%s169 + $0x70] sm:$0xff]
      %v192 = vld [vmem:[%s169 + $0x78] sm:$0xff]
      %v193 = vld [vmem:[%s169 + $0x80] sm:$0xff]
      %v194 = vld [vmem:[%s169 + $0x88] sm:$0xff]
      %v195 = vld [vmem:[%s169 + $0x90] sm:$0xff]
      %v196 = vld [vmem:[%s169 + $0x98] sm:$0xff]
      %v197 = vld [vmem:[%s169 + $0xa0] sm:$0xff]
      %v198 = vld [vmem:[%s169 + $0xa8] sm:$0xff]
      %v199 = vld [vmem:[%s169 + $0xb0] sm:$0xff]
      %v200 = vld [vmem:[%s169 + $0xb8] sm:$0xff]
      %v201 = vld [vmem:[%s169 + $0xc0] sm:$0xff]
      %v202 = vld [vmem:[%s169 + $0xc8] sm:$0xff]
      %v203 = vld [vmem:[%s169 + $0xd0] sm:$0xff]
      %v204 = vld [vmem:[%s169 + $0xd8] sm:$0xff]
      %v205 = vld [vmem:[%s169 + $0xe0] sm:$0xff]
      %v206 = vld [vmem:[%s169 + $0xe8] sm:$0xff]
      %v207 = vld [vmem:[%s169 + $0xf0] sm:$0xff]
      %v208 = vld [vmem:[%s169 + $0xf8] sm:$0xff]
      %v209 = vadd.f32 %v177, %v178
      %v210 = vadd.f32 %v209, %v179
      %v211 = vadd.f32 %v210, %v180
      %v212 = vadd.f32 %v211, %v181
      %v213 = vadd.f32 %v212, %v182
      %v214 = vadd.f32 %v213, %v183
      %v215 = vadd.f32 %v214, %v184
      %v216 = vadd.f32 %v215, %v185
      %v217 = vadd.f32 %v216, %v186
      %v218 = vadd.f32 %v217, %v187
      %v219 = vadd.f32 %v218, %v188
      %v220 = vadd.f32 %v219, %v189
      %v221 = vadd.f32 %v220, %v190
      %v222 = vadd.f32 %v221, %v191
      %v223 = vadd.f32 %v222, %v192
      %v224 = vadd.f32 %v223, %v193
      %v225 = vadd.f32 %v224, %v194
      %v226 = vadd.f32 %v225, %v195
      %v227 = vadd.f32 %v226, %v196
      %v228 = vadd.f32 %v227, %v197
      %v229 = vadd.f32 %v228, %v198
      %v230 = vadd.f32 %v229, %v199
      %v231 = vadd.f32 %v230, %v200
      %v232 = vadd.f32 %v231, %v201
      %v233 = vadd.f32 %v232, %v202
      %v234 = vadd.f32 %v233, %v203
      %v235 = vadd.f32 %v234, %v204
      %v236 = vadd.f32 %v235, %v205
      %v237 = vadd.f32 %v236, %v206
      %v238 = vadd.f32 %v237, %v207
      %v239 = vadd.f32 %v238, %v208
      %v240 = vrot.slane %v239, 4
      %v241 = vadd.f32 %v239, %v240
      %v242 = vrot.slane %v241, 2
      %v243 = vadd.f32 %v241, %v242
      %v244 = vrot.slane %v243, 1
      %v245 = vadd.f32 %v243, %v244
      %v246 = vmul.f32 %v245, 0.00390625
      %v247 = vsub.f32 %v177, %v246
      %v248 = vsub.f32 %v178, %v246
      %v249 = vsub.f32 %v179, %v246
      %v250 = vsub.f32 %v180, %v246
      %v251 = vsub.f32 %v181, %v246
      %v252 = vsub.f32 %v182, %v246
      %v253 = vsub.f32 %v183, %v246
      %v254 = vsub.f32 %v184, %v246
      %v255 = vsub.f32 %v185, %v246
      %v256 = vsub.f32 %v186, %v246
      %v257 = vsub.f32 %v187, %v246
      %v258 = vsub.f32 %v188, %v246
      %v259 = vsub.f32 %v189, %v246
      %v260 = vsub.f32 %v190, %v246
      %v261 = vsub.f32 %v191, %v246
      %v262 = vsub.f32 %v192, %v246
      %v263 = vsub.f32 %v193, %v246
      %v264 = vsub.f32 %v194, %v246
      %v265 = vsub.f32 %v195, %v246
      %v266 = vsub.f32 %v196, %v246
      %v267 = vsub.f32 %v197, %v246
      %v268 = vsub.f32 %v198, %v246
      %v269 = vsub.f32 %v199, %v246
      %v270 = vsub.f32 %v200, %v246
      %v271 = vsub.f32 %v201, %v246
      %v272 = vsub.f32 %v202, %v246
      %v273 = vsub.f32 %v203, %v246
      %v274 = vsub.f32 %v204, %v246
      %v275 = vsub.f32 %v205, %v246
      %v276 = vsub.f32 %v206, %v246
      %v277 = vsub.f32 %v207, %v246
      %v278 = vsub.f32 %v208, %v246
      %s279 = scalar_lea.vmem %s173, %s19
      %280 = vst [vmem:[%s279] sm:$0x1] %v245
      %v281 = vmul.f32 %v247, %v247
      %v282 = vmul.f32 %v248, %v248
      %v283 = vmul.f32 %v249, %v249
      %v284 = vmul.f32 %v250, %v250
      %v285 = vmul.f32 %v251, %v251
      %v286 = vmul.f32 %v252, %v252
      %v287 = vmul.f32 %v253, %v253
      %v288 = vmul.f32 %v254, %v254
      %v289 = vmul.f32 %v255, %v255
      %v290 = vmul.f32 %v256, %v256
      %v291 = vmul.f32 %v257, %v257
      %v292 = vmul.f32 %v258, %v258
      %v293 = vmul.f32 %v259, %v259
      %v294 = vmul.f32 %v260, %v260
      %v295 = vmul.f32 %v261, %v261
      %v296 = vmul.f32 %v262, %v262
      %v297 = vmul.f32 %v263, %v263
      %v298 = vmul.f32 %v264, %v264
      %v299 = vmul.f32 %v265, %v265
      %v300 = vmul.f32 %v266, %v266
      %v301 = vmul.f32 %v267, %v267
      %v302 = vmul.f32 %v268, %v268
      %v303 = vmul.f32 %v269, %v269
      %v304 = vmul.f32 %v270, %v270
      %v305 = vmul.f32 %v271, %v271
      %v306 = vmul.f32 %v272, %v272
      %v307 = vmul.f32 %v273, %v273
      %v308 = vmul.f32 %v274, %v274
      %v309 = vmul.f32 %v275, %v275
      %v310 = vmul.f32 %v276, %v276
      %v311 = vmul.f32 %v277, %v277
      %v312 = vmul.f32 %v278, %v278
      %v313 = vadd.f32 %v281, %v282
      %v314 = vadd.f32 %v313, %v283
      %v315 = vadd.f32 %v314, %v284
      %v316 = vadd.f32 %v315, %v285
      %v317 = vadd.f32 %v316, %v286
      %v318 = vadd.f32 %v317, %v287
      %v319 = vadd.f32 %v318, %v288
      %v320 = vadd.f32 %v319, %v289
      %v321 = vadd.f32 %v320, %v290
      %v322 = vadd.f32 %v321, %v291
      %v323 = vadd.f32 %v322, %v292
      %v324 = vadd.f32 %v323, %v293
      %v325 = vadd.f32 %v324, %v294
      %v326 = vadd.f32 %v325, %v295
      %v327 = vadd.f32 %v326, %v296
      %v328 = vadd.f32 %v327, %v297
      %v329 = vadd.f32 %v328, %v298
      %v330 = vadd.f32 %v329, %v299
      %v331 = vadd.f32 %v330, %v300
      %v332 = vadd.f32 %v331, %v301
      %v333 = vadd.f32 %v332, %v302
      %v334 = vadd.f32 %v333, %v303
      %v335 = vadd.f32 %v334, %v304
      %v336 = vadd.f32 %v335, %v305
      %v337 = vadd.f32 %v336, %v306
      %v338 = vadd.f32 %v337, %v307
      %v339 = vadd.f32 %v338, %v308
      %v340 = vadd.f32 %v339, %v309
      %v341 = vadd.f32 %v340, %v310
      %v342 = vadd.f32 %v341, %v311
      %v343 = vadd.f32 %v342, %v312
      %v344 = vrot.slane %v343, 4
      %v345 = vadd.f32 %v343, %v344
      %v346 = vrot.slane %v345, 2
      %v347 = vadd.f32 %v345, %v346
      %v348 = vrot.slane %v347, 1
      %v349 = vadd.f32 %v347, %v348
      %s350 = scalar_lea.vmem %s176, %s19
      %351 = vst [vmem:[%s350] sm:$0x1] %v349
      %p352 = scmp.lt.s32.totalorder %s18, 1
      %s353 = scalar_select %p352, %s18, 1
      %s354 = scalar_lea.vmem %s1, %s353
      %p355 = scmp.lt.s32.totalorder %s18, 1
      %s356 = scalar_select %p355, %s18, 1
      %s357 = scalar_lea.vmem %s2, %s356
      // Predicated region
      $region25: #{spatial_self_attention.3} parent=23 // pred_check
        %p358 = pneg %p72
      $region26: #{spatial_self_attention.3} parent=23 // pred_check_branch
        %360 = sbr.rel (%p358) target = $region28
      $region27: #{spatial_self_attention.3} parent=23 // pred_region
        _
      $region28: #{spatial_self_attention.3} parent=23 // pred_fallthru
        _
      // Predicated region
      $region29: #{spatial_self_attention.3} parent=23 // pred_check
        %p361 = pneg %p98
      $region30: #{spatial_self_attention.3} parent=23 // pred_check_branch
        %363 = sbr.rel (%p361) target = $region32
      $region31: #{spatial_self_attention.3} parent=23 // pred_region
        _
      $region32: #{spatial_self_attention.3} parent=23 // pred_fallthru
        _
    $region24: #{spatial_self_attention.3} parent=5 // pred_fallthru
      _
    %p364 = scmp.le.s32.totalorder 2, %s9
    // Predicated region
    $region33: #{spatial_self_attention.3} parent=5 // pred_check
      %p365 = pneg %p364
    $region34: #{spatial_self_attention.3} parent=5 // pred_check_branch
      %367 = sbr.rel (%p365) target = $region36
    $region35: #{spatial_self_attention.3} parent=5 // pred_region
      %s368 = ssub.s32 %s9, 2
      // Predicated region
      $region37: #{spatial_self_attention.3} parent=35 // pred_check
        %p369 = pneg %p78
      $region38: #{spatial_self_attention.3} parent=35 // pred_check_branch
        %371 = sbr.rel (%p369) target = $region40
      $region39: #{spatial_self_attention.3} parent=35 // pred_region
        %p372 = scmp.lt.s32.totalorder %s20, 1
        %s373 = scalar_select %p372, %s20, 1
        %s374 = scalar_lea.vmem %s1, %s373
      $region40: #{spatial_self_attention.3} parent=35 // pred_fallthru
        _
      // Predicated region
      $region41: #{spatial_self_attention.3} parent=35 // pred_check
        %p375 = pneg %p104
      $region42: #{spatial_self_attention.3} parent=35 // pred_check_branch
        %377 = sbr.rel (%p375) target = $region44
      $region43: #{spatial_self_attention.3} parent=35 // pred_region
        %p378 = scmp.lt.s32.totalorder %s20, 1
        %s379 = scalar_select %p378, %s20, 1
        %s380 = scalar_lea.vmem %s2, %s379
      $region44: #{spatial_self_attention.3} parent=35 // pred_fallthru
        _
    $region36: #{spatial_self_attention.3} parent=5 // pred_fallthru
      _
  $region6: #{spatial_self_attention.3} parent=0 // loop_footer
    %s13 = sadd.s32 1, %s9
  $region7: #{spatial_self_attention.3} parent=0 // loop_footer_branch
    %8 = sbr.rel target = $region3
  $region8: #{spatial_self_attention.3} parent=0 // loop_exit
    _

// kernel: spatial_self_attention.4
$region0: #{spatial_self_attention.4}
  #allocation0 [shape = 'u32[]', space=smem, size = 0x4, offset = 0x4, fixed_abs, tag = 'smem constant byte address 0x4 - core index']
  #allocation1 [shape = 'u32[72,128]{1,0:T(1,128)}', space=vmem, size = 0x9000, scoped, tag = 'internal scratch']
  %s0 = inlined_call_operand.vmem [shape: f32[2,256,128], index: 0, kind: input, shape index: {}]
  %s1 = inlined_call_operand.vmem [shape: f32[2,1,128], index: 1, kind: input, shape index: {}]
  %s2 = inlined_call_operand.vmem [shape: f32[2,1,128], index: 2, kind: input, shape index: {}]
  %s3 = inlined_call_operand.vmem [shape: bf16[128,256], index: 3, kind: input, shape index: {}]
  %s4 = inlined_call_operand.vmem [shape: f32[1,256], index: 4, kind: input, shape index: {}]
  %s5 = inlined_call_operand.vmem [shape: bf16[2,256,128], index: 5, kind: output, shape index: {0}]
  %s6 = inlined_call_operand.vmem [shape: bf16[2,256,128], index: 6, kind: output, shape index: {1}]
  %7 = xla_tuple %s5, %s6
  %s8 = sld [smem:[#allocation0]]
  $region61: #{spatial_self_attention.4} parent=0
    _
  %s10 = ssub.s32 1, %s8
  %s11 = scalar_select 0, %s10, %s8
  loop: start=0, step=1, limit=4
  $region2: #{spatial_self_attention.4} parent=0 // loop_pre_header
    _
  $region3: #{spatial_self_attention.4} parent=0 // loop_header
    %s13 = sphi 0, %s17
    %p14 = scmp.ge.s32.totalorder %s13, 4
    %s20 = sphi 0, %s32
    %s21 = sphi 0, %s28
    %s22 = sphi 0, %s20
    %s23 = sphi 0, %s21
    %s24 = sphi 0, %s22
    %s25 = sphi 0, %s23
    %s37 = sphi 0, %s39
    %s40 = sphi 0, %s37
    %s41 = sphi 0, %s40
    %s57 = sphi 0, %s41
    %s63 = sphi 0, %s65
    %s66 = sphi 0, %s63
    %s67 = sphi 0, %s66
    %s83 = sphi 0, %s67
    %s89 = sphi 0, %s91
    %s92 = sphi 0, %s89
    %s93 = sphi 0, %s92
    %s109 = sphi 0, %s93
    %s113 = sphi 0, %s113
    %s115 = sphi 0, %s113
    %s116 = sphi 0, %s115
    %s130 = sphi 0, %s116
    %s134 = sphi 0, %s134
    %s136 = sphi 0, %s134
    %s137 = sphi 0, %s136
    %s151 = sphi 0, %s137
    %s159 = sphi 0, %s161
    %s162 = sphi 0, %s159
    %s163 = sphi 0, %s162
    %s179 = sphi 0, %s163
    %s187 = sphi 0, %s189
    %s190 = sphi 0, %s187
    %s191 = sphi 0, %s190
    %s207 = sphi 0, %s191
  $region4: #{spatial_self_attention.4} parent=0 // loop_header_branch
    %16 = sbr.rel (%p14) target = $region8
  $region5: #{spatial_self_attention.4} parent=0 // loop_body
    %s18 = ssub.s32 %s13, 1
    %s19 = ssub.s32 %s13, 2
    %s26 = sadd.s32 1, %s21
    %p27 = scmp.ge.s32.totalorder %s26, 1
    %s28 = scalar_select %p27, 0, %s26
    %s29 = sadd.s32 1, %s20
    %s30 = scalar_select %p27, %s29, %s20
    %p31 = scmp.ge.s32.totalorder %s30, 2
    %s32 = scalar_select %p31, 0, %s30
    %s33 = ssub.s32 %s20, %s32
    %s34 = ssub.s32 %s21, %s28
    %s35 = sor.u32 %s33, %s34
    %p36 = scmp.eq.s32.totalorder %s35, 0
    %s38 = sadd.s32 %s37, 1
    %s39 = scalar_select %p36, %s37, %s38
    %p42 = pneg %p36
    %p43 = scmp.eq.s32.totalorder %s13, 1
    %p44 = por %p42, %p43
    %p45 = scmp.ne.s32.totalorder %s37, %s40
    %p46 = scmp.eq.s32.totalorder %s13, 0
    %p47 = por %p45, %p46
    %p48 = scmp.ne.s32.totalorder %s37, %s40
    %p49 = scmp.eq.s32.totalorder %s18, 1
    %p50 = por %p48, %p49
    %p51 = scmp.ne.s32.totalorder %s40, %s41
    %p52 = scmp.eq.s32.totalorder %s18, 0
    %p53 = por %p51, %p52
    %p54 = scmp.ne.s32.totalorder %s40, %s41
    %p55 = scmp.eq.s32.totalorder %s19, 1
    %p56 = por %p54, %p55
    %p58 = scmp.ne.s32.totalorder %s41, %s57
    %p59 = scmp.eq.s32.totalorder %s19, 0
    %p60 = por %p58, %p59
    %s61 = ssub.s32 %s20, %s32
    %p62 = scmp.eq.s32.totalorder %s61, 0
    %s64 = sadd.s32 %s63, 1
    %s65 = scalar_select %p62, %s63, %s64
    %p68 = pneg %p62
    %p69 = scmp.eq.s32.totalorder %s13, 1
    %p70 = por %p68, %p69
    %p71 = scmp.ne.s32.totalorder %s63, %s66
    %p72 = scmp.eq.s32.totalorder %s13, 0
    %p73 = por %p71, %p72
    %p74 = scmp.ne.s32.totalorder %s63, %s66
    %p75 = scmp.eq.s32.totalorder %s18, 1
    %p76 = por %p74, %p75
    %p77 = scmp.ne.s32.totalorder %s66, %s67
    %p78 = scmp.eq.s32.totalorder %s18, 0
    %p79 = por %p77, %p78
    %p80 = scmp.ne.s32.totalorder %s66, %s67
    %p81 = scmp.eq.s32.totalorder %s19, 1
    %p82 = por %p80, %p81
    %p84 = scmp.ne.s32.totalorder %s67, %s83
    %p85 = scmp.eq.s32.totalorder %s19, 0
    %p86 = por %p84, %p85
    %s87 = ssub.s32 %s20, %s32
    %p88 = scmp.eq.s32.totalorder %s87, 0
    %s90 = sadd.s32 %s89, 1
    %s91 = scalar_select %p88, %s89, %s90
    %p94 = pneg %p88
    %p95 = scmp.eq.s32.totalorder %s13, 1
    %p96 = por %p94, %p95
    %p97 = scmp.ne.s32.totalorder %s89, %s92
    %p98 = scmp.eq.s32.totalorder %s13, 0
    %p99 = por %p97, %p98
    %p100 = scmp.ne.s32.totalorder %s89, %s92
    %p101 = scmp.eq.s32.totalorder %s18, 1
    %p102 = por %p100, %p101
    %p103 = scmp.ne.s32.totalorder %s92, %s93
    %p104 = scmp.eq.s32.totalorder %s18, 0
    %p105 = por %p103, %p104
    %p106 = scmp.ne.s32.totalorder %s92, %s93
    %p107 = scmp.eq.s32.totalorder %s19, 1
    %p108 = por %p106, %p107
    %p110 = scmp.ne.s32.totalorder %s93, %s109
    %p111 = scmp.eq.s32.totalorder %s19, 0
    %p112 = por %p110, %p111
    %s114 = sadd.s32 %s113, 1
    %p117 = scmp.eq.s32.totalorder %s13, 1
    %p118 = scmp.ne.s32.totalorder %s113, %s115
    %p119 = scmp.eq.s32.totalorder %s13, 0
    %p120 = por %p118, %p119
    %p121 = scmp.ne.s32.totalorder %s113, %s115
    %p122 = scmp.eq.s32.totalorder %s18, 1
    %p123 = por %p121, %p122
    %p124 = scmp.ne.s32.totalorder %s115, %s116
    %p125 = scmp.eq.s32.totalorder %s18, 0
    %p126 = por %p124, %p125
    %p127 = scmp.ne.s32.totalorder %s115, %s116
    %p128 = scmp.eq.s32.totalorder %s19, 1
    %p129 = por %p127, %p128
    %p131 = scmp.ne.s32.totalorder %s116, %s130
    %p132 = scmp.eq.s32.totalorder %s19, 0
    %p133 = por %p131, %p132
    %s135 = sadd.s32 %s134, 1
    %p138 = scmp.eq.s32.totalorder %s13, 1
    %p139 = scmp.ne.s32.totalorder %s134, %s136
    %p140 = scmp.eq.s32.totalorder %s13, 0
    %p141 = por %p139, %p140
    %p142 = scmp.ne.s32.totalorder %s134, %s136
    %p143 = scmp.eq.s32.totalorder %s18, 1
    %p144 = por %p142, %p143
    %p145 = scmp.ne.s32.totalorder %s136, %s137
    %p146 = scmp.eq.s32.totalorder %s18, 0
    %p147 = por %p145, %p146
    %p148 = scmp.ne.s32.totalorder %s136, %s137
    %p149 = scmp.eq.s32.totalorder %s19, 1
    %p150 = por %p148, %p149
    %p152 = scmp.ne.s32.totalorder %s137, %s151
    %p153 = scmp.eq.s32.totalorder %s19, 0
    %p154 = por %p152, %p153
    %s155 = ssub.s32 %s20, %s32
    %s156 = ssub.s32 %s21, %s28
    %s157 = sor.u32 %s155, %s156
    %p158 = scmp.eq.s32.totalorder %s157, 0
    %s160 = sadd.s32 %s159, 1
    %s161 = scalar_select %p158, %s159, %s160
    %p164 = pneg %p158
    %p165 = scmp.eq.s32.totalorder %s13, 1
    %p166 = por %p164, %p165
    %p167 = scmp.ne.s32.totalorder %s159, %s162
    %p168 = scmp.eq.s32.totalorder %s13, 0
    %p169 = por %p167, %p168
    %p170 = scmp.ne.s32.totalorder %s159, %s162
    %p171 = scmp.eq.s32.totalorder %s18, 1
    %p172 = por %p170, %p171
    %p173 = scmp.ne.s32.totalorder %s162, %s163
    %p174 = scmp.eq.s32.totalorder %s18, 0
    %p175 = por %p173, %p174
    %p176 = scmp.ne.s32.totalorder %s162, %s163
    %p177 = scmp.eq.s32.totalorder %s19, 1
    %p178 = por %p176, %p177
    %p180 = scmp.ne.s32.totalorder %s163, %s179
    %p181 = scmp.eq.s32.totalorder %s19, 0
    %p182 = por %p180, %p181
    %s183 = ssub.s32 %s20, %s32
    %s184 = ssub.s32 %s21, %s28
    %s185 = sor.u32 %s183, %s184
    %p186 = scmp.eq.s32.totalorder %s185, 0
    %s188 = sadd.s32 %s187, 1
    %s189 = scalar_select %p186, %s187, %s188
    %p192 = pneg %p186
    %p193 = scmp.eq.s32.totalorder %s13, 1
    %p194 = por %p192, %p193
    %p195 = scmp.ne.s32.totalorder %s187, %s190
    %p196 = scmp.eq.s32.totalorder %s13, 0
    %p197 = por %p195, %p196
    %p198 = scmp.ne.s32.totalorder %s187, %s190
    %p199 = scmp.eq.s32.totalorder %s18, 1
    %p200 = por %p198, %p199
    %p201 = scmp.ne.s32.totalorder %s190, %s191
    %p202 = scmp.eq.s32.totalorder %s18, 0
    %p203 = por %p201, %p202
    %p204 = scmp.ne.s32.totalorder %s190, %s191
    %p205 = scmp.eq.s32.totalorder %s19, 1
    %p206 = por %p204, %p205
    %p208 = scmp.ne.s32.totalorder %s191, %s207
    %p209 = scmp.eq.s32.totalorder %s19, 0
    %p210 = por %p208, %p209
    %p211 = scmp.le.s32.totalorder 1, %s13
    %p212 = scmp.lt.s32.totalorder %s13, 3
    %p213 = pnand %p211, %p212
    %p214 = pneg %p213
    // Predicated region
    $region9: #{spatial_self_attention.4} parent=5 // pred_check
      _
    $region10: #{spatial_self_attention.4} parent=5 // pred_check_branch
      %216 = sbr.rel (%p213) target = $region12
    $region11: #{spatial_self_attention.4} parent=5 // pred_region
      %s217 = ssub.s32 %s13, 1
      // Predicated region
      $region13: #{spatial_self_attention.4} parent=11 // pred_check
        %p218 = pneg %p126
      $region14: #{spatial_self_attention.4} parent=11 // pred_check_branch
        %220 = sbr.rel (%p218) target = $region16
      $region15: #{spatial_self_attention.4} parent=11 // pred_region
        _
      $region16: #{spatial_self_attention.4} parent=11 // pred_fallthru
        _
      // Predicated region
      $region17: #{spatial_self_attention.4} parent=11 // pred_check
        %p221 = pneg %p147
      $region18: #{spatial_self_attention.4} parent=11 // pred_check_branch
        %223 = sbr.rel (%p221) target = $region20
      $region19: #{spatial_self_attention.4} parent=11 // pred_region
        _
      $region20: #{spatial_self_attention.4} parent=11 // pred_fallthru
        _
    $region12: #{spatial_self_attention.4} parent=5 // pred_fallthru
      _
    %p224 = scmp.lt.s32.totalorder %s13, 2
    // Predicated region
    $region21: #{spatial_self_attention.4} parent=5 // pred_check
      %p225 = pneg %p224
    $region22: #{spatial_self_attention.4} parent=5 // pred_check_branch
      %227 = sbr.rel (%p225) target = $region24
    $region23: #{spatial_self_attention.4} parent=5 // pred_region
      // Predicated region
      $region25: #{spatial_self_attention.4} parent=23 // pred_check
        %p228 = pneg %p47
      $region26: #{spatial_self_attention.4} parent=23 // pred_check_branch
        %230 = sbr.rel (%p228) target = $region28
      $region27: #{spatial_self_attention.4} parent=23 // pred_region
        %s231 = smul.u32 32, %s21
        %p232 = scmp.lt.s32.totalorder %s20, 1
        %s233 = scalar_select %p232, %s20, 1
        %p234 = scmp.lt.s32.totalorder %s231, 31
        %s235 = scalar_select %p234, %s231, 31
        %s236 = smul.addr %s233, 32
        %s237 = sadd.s32 %s235, %s236
        %s238 = smul.addr %s237, 8
        %s239 = scalar_lea.vmem %s0, %s238
        %s240 = smul.u32 32, %s21
      $region28: #{spatial_self_attention.4} parent=23 // pred_fallthru
        _
      // Predicated region
      $region29: #{spatial_self_attention.4} parent=23 // pred_check
        %p241 = pneg %p73
      $region30: #{spatial_self_attention.4} parent=23 // pred_check_branch
        %243 = sbr.rel (%p241) target = $region32
      $region31: #{spatial_self_attention.4} parent=23 // pred_region
        %p244 = scmp.lt.s32.totalorder %s20, 1
        %s245 = scalar_select %p244, %s20, 1
        %s246 = scalar_lea.vmem %s1, %s245
      $region32: #{spatial_self_attention.4} parent=23 // pred_fallthru
        _
      // Predicated region
      $region33: #{spatial_self_attention.4} parent=23 // pred_check
        %p247 = pneg %p99
      $region34: #{spatial_self_attention.4} parent=23 // pred_check_branch
        %249 = sbr.rel (%p247) target = $region36
      $region35: #{spatial_self_attention.4} parent=23 // pred_region
        %p250 = scmp.lt.s32.totalorder %s20, 1
        %s251 = scalar_select %p250, %s20, 1
        %s252 = scalar_lea.vmem %s2, %s251
      $region36: #{spatial_self_attention.4} parent=23 // pred_fallthru
        _
    $region24: #{spatial_self_attention.4} parent=5 // pred_fallthru
      _
    %p253 = scmp.le.s32.totalorder 1, %s13
    %p254 = scmp.lt.s32.totalorder %s13, 3
    %p255 = pnand %p253, %p254
    %p256 = pneg %p255
    // Predicated region
    $region37: #{spatial_self_attention.4} parent=5 // pred_check
      _
    $region38: #{spatial_self_attention.4} parent=5 // pred_check_branch
      %258 = sbr.rel (%p255) target = $region40
    $region39: #{spatial_self_attention.4} parent=5 // pred_region
      %s259 = ssub.s32 %s13, 1
      %s260 = smul.u32 32, %s23
      %p261 = scmp.lt.s32.totalorder %s22, 1
      %s262 = scalar_select %p261, %s22, 1
      %p263 = scmp.lt.s32.totalorder %s260, 31
      %s264 = scalar_select %p263, %s260, 31
      %s265 = smul.addr %s262, 32
      %s266 = sadd.s32 %s264, %s265
      %s267 = smul.addr %s266, 8
      %s268 = scalar_lea.vmem %s0, %s267
      %p269 = pneg %p53
      %p270 = pneg %p50
      %p271 = scmp.lt.s32.totalorder %s22, 1
      %s272 = scalar_select %p271, %s22, 1
      %s273 = scalar_lea.vmem %s1, %s272
      %p274 = pneg %p79
      %p275 = pneg %p76
      %p276 = scmp.lt.s32.totalorder %s22, 1
      %s277 = scalar_select %p276, %s22, 1
      %s278 = scalar_lea.vmem %s2, %s277
      %p279 = pneg %p105
      %p280 = pneg %p102
      %p281 = pneg %p126
      %p282 = pneg %p123
      %p283 = pneg %p147
      %p284 = pneg %p144
      %p285 = pneg %p175
      %p286 = pneg %p172
      %s287 = smul.u32 32, %s23
      %p288 = scmp.lt.s32.totalorder %s22, 1
      %s289 = scalar_select %p288, %s22, 1
      %p290 = scmp.lt.s32.totalorder %s287, 31
      %s291 = scalar_select %p290, %s287, 31
      %s292 = smul.addr %s289, 32
      %s293 = sadd.s32 %s291, %s292
      %s294 = smul.addr %s293, 4
      %s295 = scalar_lea.vmem %s5, %s294
      %p296 = pneg %p203
      %p297 = pneg %p200
      %s298 = smul.u32 32, %s23
      %p299 = scmp.lt.s32.totalorder %s22, 1
      %s300 = scalar_select %p299, %s22, 1
      %p301 = scmp.lt.s32.totalorder %s298, 31
      %s302 = scalar_select %p301, %s298, 31
      %s303 = smul.addr %s300, 32
      %s304 = sadd.s32 %s302, %s303
      %s305 = smul.addr %s304, 4
      %s306 = scalar_lea.vmem %s6, %s305
      %s307 = smul.u32 32, %s23
      %p308 = scmp.lt.s32.totalorder %s22, 1
      %s309 = scalar_select %p308, %s22, 1
      %p310 = scmp.lt.s32.totalorder %s307, 31
      %s311 = scalar_select %p310, %s307, 31
      %s312 = smul.addr %s309, 32
      %s313 = sadd.s32 %s311, %s312
      %s314 = smul.addr %s313, 8
      %s315 = scalar_lea.vmem %s0, %s314
      %s316 = smul.u32 32, %s23
      %p317 = scmp.lt.s32.totalorder %s22, 1
      %s318 = scalar_select %p317, %s22, 1
      %s319 = scalar_lea.vmem %s1, %s318
      %p320 = scmp.lt.s32.totalorder %s22, 1
      %s321 = scalar_select %p320, %s22, 1
      %s322 = scalar_lea.vmem %s2, %s321
      %s323 = smul.u32 32, %s23
      %p324 = scmp.lt.s32.totalorder %s22, 1
      %s325 = scalar_select %p324, %s22, 1
      %p326 = scmp.lt.s32.totalorder %s323, 31
      %s327 = scalar_select %p326, %s323, 31
      %s328 = smul.addr %s325, 32
      %s329 = sadd.s32 %s327, %s328
      %s330 = smul.addr %s329, 4
      %s331 = scalar_lea.vmem %s5, %s330
      %s332 = smul.u32 32, %s23
      %s333 = smul.u32 32, %s23
      %p334 = scmp.lt.s32.totalorder %s22, 1
      %s335 = scalar_select %p334, %s22, 1
      %p336 = scmp.lt.s32.totalorder %s333, 31
      %s337 = scalar_select %p336, %s333, 31
      %s338 = smul.addr %s335, 32
      %s339 = sadd.s32 %s337, %s338
      %s340 = smul.addr %s339, 4
      %s341 = scalar_lea.vmem %s6, %s340
      %s342 = smul.u32 32, %s23
      %v343 = vld [vmem:[%s315] sm:$0xff]
      %v344 = vld [vmem:[%s315 + $0x8] sm:$0xff]
      %v345 = vld [vmem:[%s315 + $0x10] sm:$0xff]
      %v346 = vld [vmem:[%s315 + $0x18] sm:$0xff]
      %v347 = vld [vmem:[%s315 + $0x20] sm:$0xff]
      %v348 = vld [vmem:[%s315 + $0x28] sm:$0xff]
      %v349 = vld [vmem:[%s315 + $0x30] sm:$0xff]
      %v350 = vld [vmem:[%s315 + $0x38] sm:$0xff]
      %v351 = vld [vmem:[%s315 + $0x40] sm:$0xff]
      %v352 = vld [vmem:[%s315 + $0x48] sm:$0xff]
      %v353 = vld [vmem:[%s315 + $0x50] sm:$0xff]
      %v354 = vld [vmem:[%s315 + $0x58] sm:$0xff]
      %v355 = vld [vmem:[%s315 + $0x60] sm:$0xff]
      %v356 = vld [vmem:[%s315 + $0x68] sm:$0xff]
      %v357 = vld [vmem:[%s315 + $0x70] sm:$0xff]
      %v358 = vld [vmem:[%s315 + $0x78] sm:$0xff]
      %v359 = vld [vmem:[%s315 + $0x80] sm:$0xff]
      %v360 = vld [vmem:[%s315 + $0x88] sm:$0xff]
      %v361 = vld [vmem:[%s315 + $0x90] sm:$0xff]
      %v362 = vld [vmem:[%s315 + $0x98] sm:$0xff]
      %v363 = vld [vmem:[%s315 + $0xa0] sm:$0xff]
      %v364 = vld [vmem:[%s315 + $0xa8] sm:$0xff]
      %v365 = vld [vmem:[%s315 + $0xb0] sm:$0xff]
      %v366 = vld [vmem:[%s315 + $0xb8] sm:$0xff]
      %v367 = vld [vmem:[%s315 + $0xc0] sm:$0xff]
      %v368 = vld [vmem:[%s315 + $0xc8] sm:$0xff]
      %v369 = vld [vmem:[%s315 + $0xd0] sm:$0xff]
      %v370 = vld [vmem:[%s315 + $0xd8] sm:$0xff]
      %v371 = vld [vmem:[%s315 + $0xe0] sm:$0xff]
      %v372 = vld [vmem:[%s315 + $0xe8] sm:$0xff]
      %v373 = vld [vmem:[%s315 + $0xf0] sm:$0xff]
      %v374 = vld [vmem:[%s315 + $0xf8] sm:$0xff]
      %v375 = vld [vmem:[%s319] sm:$0x1]
      %v377 = vperm.slane %v375, 0
      %v379 = vmul.f32 %v343, %v377
      %v380 = vmul.f32 %v344, %v377
      %v381 = vmul.f32 %v345, %v377
      %v382 = vmul.f32 %v346, %v377
      %v383 = vmul.f32 %v347, %v377
      %v384 = vmul.f32 %v348, %v377
      %v385 = vmul.f32 %v349, %v377
      %v386 = vmul.f32 %v350, %v377
      %v387 = vmul.f32 %v351, %v377
      %v388 = vmul.f32 %v352, %v377
      %v389 = vmul.f32 %v353, %v377
      %v390 = vmul.f32 %v354, %v377
      %v391 = vmul.f32 %v355, %v377
      %v392 = vmul.f32 %v356, %v377
      %v393 = vmul.f32 %v357, %v377
      %v394 = vmul.f32 %v358, %v377
      %v395 = vmul.f32 %v359, %v377
      %v396 = vmul.f32 %v360, %v377
      %v397 = vmul.f32 %v361, %v377
      %v398 = vmul.f32 %v362, %v377
      %v399 = vmul.f32 %v363, %v377
      %v400 = vmul.f32 %v364, %v377
      %v401 = vmul.f32 %v365, %v377
      %v402 = vmul.f32 %v366, %v377
      %v403 = vmul.f32 %v367, %v377
      %v404 = vmul.f32 %v368, %v377
      %v405 = vmul.f32 %v369, %v377
      %v406 = vmul.f32 %v370, %v377
      %v407 = vmul.f32 %v371, %v377
      %v408 = vmul.f32 %v372, %v377
      %v409 = vmul.f32 %v373, %v377
      %v410 = vmul.f32 %v374, %v377
      %v411 = vld [vmem:[%s322] sm:$0x1]
      %v413 = vperm.slane %v411, 0
      %v415 = vadd.f32 %v379, %v413
      %v416 = vadd.f32 %v380, %v413
      %v417 = vadd.f32 %v381, %v413
      %v418 = vadd.f32 %v382, %v413
      %v419 = vadd.f32 %v383, %v413
      %v420 = vadd.f32 %v384, %v413
      %v421 = vadd.f32 %v385, %v413
      %v422 = vadd.f32 %v386, %v413
      %v423 = vadd.f32 %v387, %v413
      %v424 = vadd.f32 %v388, %v413
      %v425 = vadd.f32 %v389, %v413
      %v426 = vadd.f32 %v390, %v413
      %v427 = vadd.f32 %v391, %v413
      %v428 = vadd.f32 %v392, %v413
      %v429 = vadd.f32 %v393, %v413
      %v430 = vadd.f32 %v394, %v413
      %v431 = vadd.f32 %v395, %v413
      %v432 = vadd.f32 %v396, %v413
      %v433 = vadd.f32 %v397, %v413
      %v434 = vadd.f32 %v398, %v413
      %v435 = vadd.f32 %v399, %v413
      %v436 = vadd.f32 %v400, %v413
      %v437 = vadd.f32 %v401, %v413
      %v438 = vadd.f32 %v402, %v413
      %v439 = vadd.f32 %v403, %v413
      %v440 = vadd.f32 %v404, %v413
      %v441 = vadd.f32 %v405, %v413
      %v442 = vadd.f32 %v406, %v413
      %v443 = vadd.f32 %v407, %v413
      %v444 = vadd.f32 %v408, %v413
      %v445 = vadd.f32 %v409, %v413
      %v446 = vadd.f32 %v410, %v413
      %v447 = vpack.c.bf16 %v416, %v415
      %v448 = vpack.c.bf16 %v418, %v417
      %v449 = vpack.c.bf16 %v420, %v419
      %v450 = vpack.c.bf16 %v422, %v421
      %v451 = vpack.c.bf16 %v424, %v423
      %v452 = vpack.c.bf16 %v426, %v425
      %v453 = vpack.c.bf16 %v428, %v427
      %v454 = vpack.c.bf16 %v430, %v429
      %v455 = vpack.c.bf16 %v432, %v431
      %v456 = vpack.c.bf16 %v434, %v433
      %v457 = vpack.c.bf16 %v436, %v435
      %v458 = vpack.c.bf16 %v438, %v437
      %v459 = vpack.c.bf16 %v440, %v439
      %v460 = vpack.c.bf16 %v442, %v441
      %v461 = vpack.c.bf16 %v444, %v443
      %v462 = vpack.c.bf16 %v446, %v445
      %v463 = vld [vmem:[%s3] sm:$0xff]
      %v464 = vld [vmem:[%s3 + $0x8] sm:$0xff]
      %v465 = vld [vmem:[%s3 + $0x10] sm:$0xff]
      %v466 = vld [vmem:[%s3 + $0x18] sm:$0xff]
      %v467 = vld [vmem:[%s3 + $0x20] sm:$0xff]
      %v468 = vld [vmem:[%s3 + $0x28] sm:$0xff]
      %v469 = vld [vmem:[%s3 + $0x30] sm:$0xff]
      %v470 = vld [vmem:[%s3 + $0x38] sm:$0xff]
      %v471 = vld [vmem:[%s3 + $0x40] sm:$0xff]
      %v472 = vld [vmem:[%s3 + $0x48] sm:$0xff]
      %v473 = vld [vmem:[%s3 + $0x50] sm:$0xff]
      %v474 = vld [vmem:[%s3 + $0x58] sm:$0xff]
      %v475 = vld [vmem:[%s3 + $0x60] sm:$0xff]
      %v476 = vld [vmem:[%s3 + $0x68] sm:$0xff]
      %v477 = vld [vmem:[%s3 + $0x70] sm:$0xff]
      %v478 = vld [vmem:[%s3 + $0x78] sm:$0xff]
      %v479 = vld [vmem:[%s4] sm:$0x3]
      %v481 = vperm.slane %v479, 0
      %v482 = vperm.slane %v479, 1
      %v501 = vunpack.c.l.b16 %v463
      %v502 = vunpack.c.h.b16 %v463
      %v503 = vunpack.c.l.b16 %v464
      %v504 = vunpack.c.h.b16 %v464
      %v505 = vunpack.c.l.b16 %v465
      %v506 = vunpack.c.h.b16 %v465
      %v507 = vunpack.c.l.b16 %v466
      %v508 = vunpack.c.h.b16 %v466
      %v509 = vunpack.c.l.b16 %v467
      %v510 = vunpack.c.h.b16 %v467
      %v511 = vunpack.c.l.b16 %v468
      %v512 = vunpack.c.h.b16 %v468
      %v513 = vunpack.c.l.b16 %v469
      %v514 = vunpack.c.h.b16 %v469
      %v515 = vunpack.c.l.b16 %v470
      %v516 = vunpack.c.h.b16 %v470
      %v517 = vunpack.c.l.b16 %v471
      %v518 = vunpack.c.h.b16 %v471
      %v519 = vunpack.c.l.b16 %v472
      %v520 = vunpack.c.h.b16 %v472
      %v521 = vunpack.c.l.b16 %v473
      %v522 = vunpack.c.h.b16 %v473
      %v523 = vunpack.c.l.b16 %v474
      %v524 = vunpack.c.h.b16 %v474
      %v525 = vunpack.c.l.b16 %v475
      %v526 = vunpack.c.h.b16 %v475
      %v527 = vunpack.c.l.b16 %v476
      %v528 = vunpack.c.h.b16 %v476
      %v529 = vunpack.c.l.b16 %v477
      %v530 = vunpack.c.h.b16 %v477
      %v531 = vunpack.c.l.b16 %v478
      %v532 = vunpack.c.h.b16 %v478
      %v533 = vpack.c.b16 %v503, %v501
      %v534 = vpack.c.b16 %v504, %v502
      %v535 = vpack.c.b16 %v507, %v505
      %v536 = vpack.c.b16 %v508, %v506
      %v537 = vpack.c.b16 %v511, %v509
      %v538 = vpack.c.b16 %v512, %v510
      %v539 = vpack.c.b16 %v515, %v513
      %v540 = vpack.c.b16 %v516, %v514
      %v541 = vpack.c.b16 %v519, %v517
      %v542 = vpack.c.b16 %v520, %v518
      %v543 = vpack.c.b16 %v523, %v521
      %v544 = vpack.c.b16 %v524, %v522
      %v545 = vpack.c.b16 %v527, %v525
      %v546 = vpack.c.b16 %v528, %v526
      %v547 = vpack.c.b16 %v531, %v529
      %v548 = vpack.c.b16 %v532, %v530
      %565 = vmatpush.bf16.msra.mxu0 %v547
      %566 = vmatpush.bf16.msra.mxu0 %v545
      %567 = vmatpush.bf16.msra.mxu0 %v543
      %568 = vmatpush.bf16.msra.mxu0 %v541
      %569 = vmatpush.bf16.msra.mxu0 %v539
      %570 = vmatpush.bf16.msra.mxu0 %v537
      %571 = vmatpush.bf16.msra.mxu0 %v535
      %572 = vmatpush.bf16.msra.mxu0 %v533
      %573 = vmatmul.bf16.gmra.mxu0 %v447
      %v574 = vpop.f32.mrf.mxu0
      %v575 = vadd.f32 %v481, %v574
      %v576 = vpop.f32.mrf.mxu0
      %v577 = vadd.f32 %v481, %v576
      %578 = vmatmul.bf16.gmra.mxu0 %v448
      %v579 = vpop.f32.mrf.mxu0
      %v580 = vadd.f32 %v481, %v579
      %v581 = vpop.f32.mrf.mxu0
      %v582 = vadd.f32 %v481, %v581
      %583 = vmatmul.bf16.gmra.mxu0 %v449
      %v584 = vpop.f32.mrf.mxu0
      %v585 = vadd.f32 %v481, %v584
      %v586 = vpop.f32.mrf.mxu0
      %v587 = vadd.f32 %v481, %v586
      %588 = vmatmul.bf16.gmra.mxu0 %v450
      %v589 = vpop.f32.mrf.mxu0
      %v590 = vadd.f32 %v481, %v589
      %v591 = vpop.f32.mrf.mxu0
      %v592 = vadd.f32 %v481, %v591
      %593 = vmatmul.bf16.gmra.mxu0 %v451
      %v594 = vpop.f32.mrf.mxu0
      %v595 = vadd.f32 %v481, %v594
      %v596 = vpop.f32.mrf.mxu0
      %v597 = vadd.f32 %v481, %v596
      %598 = vmatmul.bf16.gmra.mxu0 %v452
      %v599 = vpop.f32.mrf.mxu0
      %v600 = vadd.f32 %v481, %v599
      %v601 = vpop.f32.mrf.mxu0
      %v602 = vadd.f32 %v481, %v601
      %603 = vmatmul.bf16.gmra.mxu0 %v453
      %v604 = vpop.f32.mrf.mxu0
      %v605 = vadd.f32 %v481, %v604
      %v606 = vpop.f32.mrf.mxu0
      %v607 = vadd.f32 %v481, %v606
      %608 = vmatmul.bf16.gmra.mxu0 %v454
      %v609 = vpop.f32.mrf.mxu0
      %v610 = vadd.f32 %v481, %v609
      %v611 = vpop.f32.mrf.mxu0
      %v612 = vadd.f32 %v481, %v611
      %613 = vmatmul.bf16.gmra.mxu0 %v455
      %v614 = vpop.f32.mrf.mxu0
      %v615 = vadd.f32 %v481, %v614
      %v616 = vpop.f32.mrf.mxu0
      %v617 = vadd.f32 %v481, %v616
      %618 = vmatmul.bf16.gmra.mxu0 %v456
      %v619 = vpop.f32.mrf.mxu0
      %v620 = vadd.f32 %v481, %v619
      %v621 = vpop.f32.mrf.mxu0
      %v622 = vadd.f32 %v481, %v621
      %623 = vmatmul.bf16.gmra.mxu0 %v457
      %v624 = vpop.f32.mrf.mxu0
      %v625 = vadd.f32 %v481, %v624
      %v626 = vpop.f32.mrf.mxu0
      %v627 = vadd.f32 %v481, %v626
      %628 = vmatmul.bf16.gmra.mxu0 %v458
      %v629 = vpop.f32.mrf.mxu0
      %v630 = vadd.f32 %v481, %v629
      %v631 = vpop.f32.mrf.mxu0
      %v632 = vadd.f32 %v481, %v631
      %633 = vmatmul.bf16.gmra.mxu0 %v459
      %v634 = vpop.f32.mrf.mxu0
      %v635 = vadd.f32 %v481, %v634
      %v636 = vpop.f32.mrf.mxu0
      %v637 = vadd.f32 %v481, %v636
      %638 = vmatmul.bf16.gmra.mxu0 %v460
      %v639 = vpop.f32.mrf.mxu0
      %v640 = vadd.f32 %v481, %v639
      %v641 = vpop.f32.mrf.mxu0
      %v642 = vadd.f32 %v481, %v641
      %643 = vmatmul.bf16.gmra.mxu0 %v461
      %v644 = vpop.f32.mrf.mxu0
      %v645 = vadd.f32 %v481, %v644
      %v646 = vpop.f32.mrf.mxu0
      %v647 = vadd.f32 %v481, %v646
      %648 = vmatmul.bf16.gmra.mxu0 %v462
      %v649 = vpop.f32.mrf.mxu0
      %v650 = vadd.f32 %v481, %v649
      %v651 = vpop.f32.mrf.mxu0
      %v652 = vadd.f32 %v481, %v651
      %653 = vdwg.mxu0
      %654 = vmatpush.bf16.msra.mxu0 %v548
      %655 = vmatpush.bf16.msra.mxu0 %v546
      %656 = vmatpush.bf16.msra.mxu0 %v544
      %657 = vmatpush.bf16.msra.mxu0 %v542
      %658 = vmatpush.bf16.msra.mxu0 %v540
      %659 = vmatpush.bf16.msra.mxu0 %v538
      %660 = vmatpush.bf16.msra.mxu0 %v536
      %661 = vmatpush.bf16.msra.mxu0 %v534
      %662 = vmatmul.bf16.gmra.mxu0 %v447
      %v663 = vpop.f32.mrf.mxu0
      %v664 = vadd.f32 %v482, %v663
      %v665 = vpop.f32.mrf.mxu0
      %v666 = vadd.f32 %v482, %v665
      %667 = vmatmul.bf16.gmra.mxu0 %v448
      %v668 = vpop.f32.mrf.mxu0
      %v669 = vadd.f32 %v482, %v668
      %v670 = vpop.f32.mrf.mxu0
      %v671 = vadd.f32 %v482, %v670
      %672 = vmatmul.bf16.gmra.mxu0 %v449
      %v673 = vpop.f32.mrf.mxu0
      %v674 = vadd.f32 %v482, %v673
      %v675 = vpop.f32.mrf.mxu0
      %v676 = vadd.f32 %v482, %v675
      %677 = vmatmul.bf16.gmra.mxu0 %v450
      %v678 = vpop.f32.mrf.mxu0
      %v679 = vadd.f32 %v482, %v678
      %v680 = vpop.f32.mrf.mxu0
      %v681 = vadd.f32 %v482, %v680
      %682 = vmatmul.bf16.gmra.mxu0 %v451
      %v683 = vpop.f32.mrf.mxu0
      %v684 = vadd.f32 %v482, %v683
      %v685 = vpop.f32.mrf.mxu0
      %v686 = vadd.f32 %v482, %v685
      %687 = vmatmul.bf16.gmra.mxu0 %v452
      %v688 = vpop.f32.mrf.mxu0
      %v689 = vadd.f32 %v482, %v688
      %v690 = vpop.f32.mrf.mxu0
      %v691 = vadd.f32 %v482, %v690
      %692 = vmatmul.bf16.gmra.mxu0 %v453
      %v693 = vpop.f32.mrf.mxu0
      %v694 = vadd.f32 %v482, %v693
      %v695 = vpop.f32.mrf.mxu0
      %v696 = vadd.f32 %v482, %v695
      %697 = vmatmul.bf16.gmra.mxu0 %v454
      %v698 = vpop.f32.mrf.mxu0
      %v699 = vadd.f32 %v482, %v698
      %v700 = vpop.f32.mrf.mxu0
      %v701 = vadd.f32 %v482, %v700
      %702 = vmatmul.bf16.gmra.mxu0 %v455
      %v703 = vpop.f32.mrf.mxu0
      %v704 = vadd.f32 %v482, %v703
      %v705 = vpop.f32.mrf.mxu0
      %v706 = vadd.f32 %v482, %v705
      %707 = vmatmul.bf16.gmra.mxu0 %v456
      %v708 = vpop.f32.mrf.mxu0
      %v709 = vadd.f32 %v482, %v708
      %v710 = vpop.f32.mrf.mxu0
      %v711 = vadd.f32 %v482, %v710
      %712 = vmatmul.bf16.gmra.mxu0 %v457
      %v713 = vpop.f32.mrf.mxu0
      %v714 = vadd.f32 %v482, %v713
      %v715 = vpop.f32.mrf.mxu0
      %v716 = vadd.f32 %v482, %v715
      %717 = vmatmul.bf16.gmra.mxu0 %v458
      %v718 = vpop.f32.mrf.mxu0
      %v719 = vadd.f32 %v482, %v718
      %v720 = vpop.f32.mrf.mxu0
      %v721 = vadd.f32 %v482, %v720
      %722 = vmatmul.bf16.gmra.mxu0 %v459
      %v723 = vpop.f32.mrf.mxu0
      %v724 = vadd.f32 %v482, %v723
      %v725 = vpop.f32.mrf.mxu0
      %v726 = vadd.f32 %v482, %v725
      %727 = vmatmul.bf16.gmra.mxu0 %v460
      %v728 = vpop.f32.mrf.mxu0
      %v729 = vadd.f32 %v482, %v728
      %v730 = vpop.f32.mrf.mxu0
      %v731 = vadd.f32 %v482, %v730
      %732 = vmatmul.bf16.gmra.mxu0 %v461
      %v733 = vpop.f32.mrf.mxu0
      %v734 = vadd.f32 %v482, %v733
      %v735 = vpop.f32.mrf.mxu0
      %v736 = vadd.f32 %v482, %v735
      %737 = vmatmul.bf16.gmra.mxu0 %v462
      %v738 = vpop.f32.mrf.mxu0
      %v739 = vadd.f32 %v482, %v738
      %v740 = vpop.f32.mrf.mxu0
      %v741 = vadd.f32 %v482, %v740
      %742 = vdwg.mxu0
      %v743 = vpack.c.bf16 %v575, %v575
      %v744 = vpack.c.bf16 %v577, %v577
      %v745 = vpack.c.bf16 %v580, %v580
      %v746 = vpack.c.bf16 %v582, %v582
      %v747 = vpack.c.bf16 %v585, %v585
      %v748 = vpack.c.bf16 %v587, %v587
      %v749 = vpack.c.bf16 %v590, %v590
      %v750 = vpack.c.bf16 %v592, %v592
      %v751 = vpack.c.bf16 %v595, %v595
      %v752 = vpack.c.bf16 %v597, %v597
      %v753 = vpack.c.bf16 %v600, %v600
      %v754 = vpack.c.bf16 %v602, %v602
      %v755 = vpack.c.bf16 %v605, %v605
      %v756 = vpack.c.bf16 %v607, %v607
      %v757 = vpack.c.bf16 %v610, %v610
      %v758 = vpack.c.bf16 %v612, %v612
      %v759 = vpack.c.bf16 %v615, %v615
      %v760 = vpack.c.bf16 %v617, %v617
      %v761 = vpack.c.bf16 %v620, %v620
      %v762 = vpack.c.bf16 %v622, %v622
      %v763 = vpack.c.bf16 %v625, %v625
      %v764 = vpack.c.bf16 %v627, %v627
      %v765 = vpack.c.bf16 %v630, %v630
      %v766 = vpack.c.bf16 %v632, %v632
      %v767 = vpack.c.bf16 %v635, %v635
      %v768 = vpack.c.bf16 %v637, %v637
      %v769 = vpack.c.bf16 %v640, %v640
      %v770 = vpack.c.bf16 %v642, %v642
      %v771 = vpack.c.bf16 %v645, %v645
      %v772 = vpack.c.bf16 %v647, %v647
      %v773 = vpack.c.bf16 %v650, %v650
      %v774 = vpack.c.bf16 %v652, %v652
      %775 = vst [vmem:[%s331] sm:$0xf] %v743
      %776 = vst [vmem:[%s331 + $0x4] sm:$0xf] %v744
      %777 = vst [vmem:[%s331 + $0x8] sm:$0xf] %v745
      %778 = vst [vmem:[%s331 + $0xc] sm:$0xf] %v746
      %779 = vst [vmem:[%s331 + $0x10] sm:$0xf] %v747
      %780 = vst [vmem:[%s331 + $0x14] sm:$0xf] %v748
      %781 = vst [vmem:[%s331 + $0x18] sm:$0xf] %v749
      %782 = vst [vmem:[%s331 + $0x1c] sm:$0xf] %v750
      %783 = vst [vmem:[%s331 + $0x20] sm:$0xf] %v751
      %784 = vst [vmem:[%s331 + $0x24] sm:$0xf] %v752
      %785 = vst [vmem:[%s331 + $0x28] sm:$0xf] %v753
      %786 = vst [vmem:[%s331 + $0x2c] sm:$0xf] %v754
      %787 = vst [vmem:[%s331 + $0x30] sm:$0xf] %v755
      %788 = vst [vmem:[%s331 + $0x34] sm:$0xf] %v756
      %789 = vst [vmem:[%s331 + $0x38] sm:$0xf] %v757
      %790 = vst [vmem:[%s331 + $0x3c] sm:$0xf] %v758
      %791 = vst [vmem:[%s331 + $0x40] sm:$0xf] %v759
      %792 = vst [vmem:[%s331 + $0x44] sm:$0xf] %v760
      %793 = vst [vmem:[%s331 + $0x48] sm:$0xf] %v761
      %794 = vst [vmem:[%s331 + $0x4c] sm:$0xf] %v762
      %795 = vst [vmem:[%s331 + $0x50] sm:$0xf] %v763
      %796 = vst [vmem:[%s331 + $0x54] sm:$0xf] %v764
      %797 = vst [vmem:[%s331 + $0x58] sm:$0xf] %v765
      %798 = vst [vmem:[%s331 + $0x5c] sm:$0xf] %v766
      %799 = vst [vmem:[%s331 + $0x60] sm:$0xf] %v767
      %800 = vst [vmem:[%s331 + $0x64] sm:$0xf] %v768
      %801 = vst [vmem:[%s331 + $0x68] sm:$0xf] %v769
      %802 = vst [vmem:[%s331 + $0x6c] sm:$0xf] %v770
      %803 = vst [vmem:[%s331 + $0x70] sm:$0xf] %v771
      %804 = vst [vmem:[%s331 + $0x74] sm:$0xf] %v772
      %805 = vst [vmem:[%s331 + $0x78] sm:$0xf] %v773
      %806 = vst [vmem:[%s331 + $0x7c] sm:$0xf] %v774
      %v807 = vpack.c.bf16 %v664, %v664
      %v808 = vpack.c.bf16 %v666, %v666
      %v809 = vpack.c.bf16 %v669, %v669
      %v810 = vpack.c.bf16 %v671, %v671
      %v811 = vpack.c.bf16 %v674, %v674
      %v812 = vpack.c.bf16 %v676, %v676
      %v813 = vpack.c.bf16 %v679, %v679
      %v814 = vpack.c.bf16 %v681, %v681
      %v815 = vpack.c.bf16 %v684, %v684
      %v816 = vpack.c.bf16 %v686, %v686
      %v817 = vpack.c.bf16 %v689, %v689
      %v818 = vpack.c.bf16 %v691, %v691
      %v819 = vpack.c.bf16 %v694, %v694
      %v820 = vpack.c.bf16 %v696, %v696
      %v821 = vpack.c.bf16 %v699, %v699
      %v822 = vpack.c.bf16 %v701, %v701
      %v823 = vpack.c.bf16 %v704, %v704
      %v824 = vpack.c.bf16 %v706, %v706
      %v825 = vpack.c.bf16 %v709, %v709
      %v826 = vpack.c.bf16 %v711, %v711
      %v827 = vpack.c.bf16 %v714, %v714
      %v828 = vpack.c.bf16 %v716, %v716
      %v829 = vpack.c.bf16 %v719, %v719
      %v830 = vpack.c.bf16 %v721, %v721
      %v831 = vpack.c.bf16 %v724, %v724
      %v832 = vpack.c.bf16 %v726, %v726
      %v833 = vpack.c.bf16 %v729, %v729
      %v834 = vpack.c.bf16 %v731, %v731
      %v835 = vpack.c.bf16 %v734, %v734
      %v836 = vpack.c.bf16 %v736, %v736
      %v837 = vpack.c.bf16 %v739, %v739
      %v838 = vpack.c.bf16 %v741, %v741
      %839 = vst [vmem:[%s341] sm:$0xf] %v807
      %840 = vst [vmem:[%s341 + $0x4] sm:$0xf] %v808
      %841 = vst [vmem:[%s341 + $0x8] sm:$0xf] %v809
      %842 = vst [vmem:[%s341 + $0xc] sm:$0xf] %v810
      %843 = vst [vmem:[%s341 + $0x10] sm:$0xf] %v811
      %844 = vst [vmem:[%s341 + $0x14] sm:$0xf] %v812
      %845 = vst [vmem:[%s341 + $0x18] sm:$0xf] %v813
      %846 = vst [vmem:[%s341 + $0x1c] sm:$0xf] %v814
      %847 = vst [vmem:[%s341 + $0x20] sm:$0xf] %v815
      %848 = vst [vmem:[%s341 + $0x24] sm:$0xf] %v816
      %849 = vst [vmem:[%s341 + $0x28] sm:$0xf] %v817
      %850 = vst [vmem:[%s341 + $0x2c] sm:$0xf] %v818
      %851 = vst [vmem:[%s341 + $0x30] sm:$0xf] %v819
      %852 = vst [vmem:[%s341 + $0x34] sm:$0xf] %v820
      %853 = vst [vmem:[%s341 + $0x38] sm:$0xf] %v821
      %854 = vst [vmem:[%s341 + $0x3c] sm:$0xf] %v822
      %855 = vst [vmem:[%s341 + $0x40] sm:$0xf] %v823
      %856 = vst [vmem:[%s341 + $0x44] sm:$0xf] %v824
      %857 = vst [vmem:[%s341 + $0x48] sm:$0xf] %v825
      %858 = vst [vmem:[%s341 + $0x4c] sm:$0xf] %v826
      %859 = vst [vmem:[%s341 + $0x50] sm:$0xf] %v827
      %860 = vst [vmem:[%s341 + $0x54] sm:$0xf] %v828
      %861 = vst [vmem:[%s341 + $0x58] sm:$0xf] %v829
      %862 = vst [vmem:[%s341 + $0x5c] sm:$0xf] %v830
      %863 = vst [vmem:[%s341 + $0x60] sm:$0xf] %v831
      %864 = vst [vmem:[%s341 + $0x64] sm:$0xf] %v832
      %865 = vst [vmem:[%s341 + $0x68] sm:$0xf] %v833
      %866 = vst [vmem:[%s341 + $0x6c] sm:$0xf] %v834
      %867 = vst [vmem:[%s341 + $0x70] sm:$0xf] %v835
      %868 = vst [vmem:[%s341 + $0x74] sm:$0xf] %v836
      %869 = vst [vmem:[%s341 + $0x78] sm:$0xf] %v837
      %870 = vst [vmem:[%s341 + $0x7c] sm:$0xf] %v838
      %s871 = smul.u32 32, %s23
      %p872 = scmp.lt.s32.totalorder %s22, 1
      %s873 = scalar_select %p872, %s22, 1
      %p874 = scmp.lt.s32.totalorder %s871, 31
      %s875 = scalar_select %p874, %s871, 31
      %s876 = smul.addr %s873, 32
      %s877 = sadd.s32 %s875, %s876
      %s878 = smul.addr %s877, 4
      %s879 = scalar_lea.vmem %s5, %s878
      %s880 = smul.u32 32, %s23
      %p881 = scmp.lt.s32.totalorder %s22, 1
      %s882 = scalar_select %p881, %s22, 1
      %p883 = scmp.lt.s32.totalorder %s880, 31
      %s884 = scalar_select %p883, %s880, 31
      %s885 = smul.addr %s882, 32
      %s886 = sadd.s32 %s884, %s885
      %s887 = smul.addr %s886, 4
      %s888 = scalar_lea.vmem %s6, %s887
      // Predicated region
      $region41: #{spatial_self_attention.4} parent=39 // pred_check
        %p889 = pneg %p172
      $region42: #{spatial_self_attention.4} parent=39 // pred_check_branch
        %891 = sbr.rel (%p889) target = $region44
      $region43: #{spatial_self_attention.4} parent=39 // pred_region
        %s892 = smul.u32 32, %s23
      $region44: #{spatial_self_attention.4} parent=39 // pred_fallthru
        _
      // Predicated region
      $region45: #{spatial_self_attention.4} parent=39 // pred_check
        %p893 = pneg %p200
      $region46: #{spatial_self_attention.4} parent=39 // pred_check_branch
        %895 = sbr.rel (%p893) target = $region48
      $region47: #{spatial_self_attention.4} parent=39 // pred_region
        %s896 = smul.u32 32, %s23
      $region48: #{spatial_self_attention.4} parent=39 // pred_fallthru
        _
    $region40: #{spatial_self_attention.4} parent=5 // pred_fallthru
      _
    %p897 = scmp.le.s32.totalorder 2, %s13
    // Predicated region
    $region49: #{spatial_self_attention.4} parent=5 // pred_check
      %p898 = pneg %p897
    $region50: #{spatial_self_attention.4} parent=5 // pred_check_branch
      %900 = sbr.rel (%p898) target = $region52
    $region51: #{spatial_self_attention.4} parent=5 // pred_region
      %s901 = ssub.s32 %s13, 2
      // Predicated region
      $region53: #{spatial_self_attention.4} parent=51 // pred_check
        %p902 = pneg %p178
      $region54: #{spatial_self_attention.4} parent=51 // pred_check_branch
        %904 = sbr.rel (%p902) target = $region56
      $region55: #{spatial_self_attention.4} parent=51 // pred_region
        %s905 = smul.u32 32, %s25
        %p906 = scmp.lt.s32.totalorder %s24, 1
        %s907 = scalar_select %p906, %s24, 1
        %p908 = scmp.lt.s32.totalorder %s905, 31
        %s909 = scalar_select %p908, %s905, 31
        %s910 = smul.addr %s907, 32
        %s911 = sadd.s32 %s909, %s910
        %s912 = smul.addr %s911, 4
        %s913 = scalar_lea.vmem %s5, %s912
      $region56: #{spatial_self_attention.4} parent=51 // pred_fallthru
        _
      // Predicated region
      $region57: #{spatial_self_attention.4} parent=51 // pred_check
        %p914 = pneg %p206
      $region58: #{spatial_self_attention.4} parent=51 // pred_check_branch
        %916 = sbr.rel (%p914) target = $region60
      $region59: #{spatial_self_attention.4} parent=51 // pred_region
        %s917 = smul.u32 32, %s25
        %p918 = scmp.lt.s32.totalorder %s24, 1
        %s919 = scalar_select %p918, %s24, 1
        %p920 = scmp.lt.s32.totalorder %s917, 31
        %s921 = scalar_select %p920, %s917, 31
        %s922 = smul.addr %s919, 32
        %s923 = sadd.s32 %s921, %s922
        %s924 = smul.addr %s923, 4
        %s925 = scalar_lea.vmem %s6, %s924
      $region60: #{spatial_self_attention.4} parent=51 // pred_fallthru
        _
    $region52: #{spatial_self_attention.4} parent=5 // pred_fallthru
      _
  $region6: #{spatial_self_attention.4} parent=0 // loop_footer
    %s17 = sadd.s32 1, %s13
  $region7: #{spatial_self_attention.4} parent=0 // loop_footer_branch
    %12 = sbr.rel target = $region3
  $region8: #{spatial_self_attention.4} parent=0 // loop_exit
    _

// kernel: spatial_self_attention.5
$region0: #{spatial_self_attention.5}
  #allocation0 [shape = 'u32[]', space=smem, size = 0x4, offset = 0x4, fixed_abs, tag = 'smem constant byte address 0x4 - core index']
  #allocation1 [shape = 'u32[72,128]{1,0:T(1,128)}', space=vmem, size = 0x9000, scoped, tag = 'internal scratch']
  #allocation2 [shape = 'bf16[256,128]{1,0:T(8,128)(2,1)}', space=vmem, size = 0x10000, scoped, tag = 'scratch operand']
  #allocation3 [shape = 'f32[256,1]{1,0:T(8,128)}', space=vmem, size = 0x20000, scoped, tag = 'scratch operand']
  #allocation4 [shape = 'f32[256,1]{1,0:T(8,128)}', space=vmem, size = 0x20000, scoped, tag = 'scratch operand']
  #allocation5 [shape = 'f32[256,128]{1,0:T(8,128)}', space=vmem, size = 0x20000, scoped, tag = 'scratch operand']
  %s0 = inlined_call_operand.vmem [shape: f32[2,256,128], index: 0, kind: input, shape index: {}, may-alias: {0,9}]
  %s1 = inlined_call_operand.vmem [shape: f32[2,1,128], index: 1, kind: input, shape index: {}]
  %s2 = inlined_call_operand.vmem [shape: f32[2,1,128], index: 2, kind: input, shape index: {}]
  %s3 = inlined_call_operand.vmem [shape: bf16[128,128], index: 3, kind: input, shape index: {}]
  %s4 = inlined_call_operand.vmem [shape: f32[1,128], index: 4, kind: input, shape index: {}]
  %s5 = inlined_call_operand.vmem [shape: bf16[2,256,128], index: 5, kind: input, shape index: {}]
  %s6 = inlined_call_operand.vmem [shape: bf16[2,256,128], index: 6, kind: input, shape index: {}]
  %s7 = inlined_call_operand.vmem [shape: bf16[128,128], index: 7, kind: input, shape index: {}]
  %s8 = inlined_call_operand.vmem [shape: f32[1,128], index: 8, kind: input, shape index: {}]
  %s9 = inlined_call_operand.vmem [shape: f32[2,256,128], index: 9, kind: output, shape index: {}, may-alias: {0,9}]
  %s10 = sld [smem:[#allocation0]]
  $region77: #{spatial_self_attention.5} parent=0
    _
  %s12 = ssub.s32 1, %s10
  %s13 = scalar_select 0, %s12, %s10
  loop: start=0, step=1, limit=4
  $region2: #{spatial_self_attention.5} parent=0 // loop_pre_header
    _
  $region3: #{spatial_self_attention.5} parent=0 // loop_header
    %s15 = sphi 0, %s19
    %p16 = scmp.ge.s32.totalorder %s15, 4
    %s22 = sphi 0, %s41
    %s23 = sphi 0, %s37
    %s24 = sphi 0, %s33
    %s25 = sphi 0, %s22
    %s26 = sphi 0, %s23
    %s27 = sphi 0, %s24
    %s28 = sphi 0, %s25
    %s29 = sphi 0, %s26
    %s30 = sphi 0, %s27
    %s46 = sphi 0, %s48
    %s49 = sphi 0, %s46
    %s50 = sphi 0, %s49
    %s66 = sphi 0, %s50
    %s72 = sphi 0, %s74
    %s75 = sphi 0, %s72
    %s76 = sphi 0, %s75
    %s92 = sphi 0, %s76
    %s98 = sphi 0, %s100
    %s101 = sphi 0, %s98
    %s102 = sphi 0, %s101
    %s118 = sphi 0, %s102
    %s122 = sphi 0, %s122
    %s124 = sphi 0, %s122
    %s125 = sphi 0, %s124
    %s139 = sphi 0, %s125
    %s143 = sphi 0, %s143
    %s145 = sphi 0, %s143
    %s146 = sphi 0, %s145
    %s160 = sphi 0, %s146
    %s168 = sphi 0, %s170
    %s171 = sphi 0, %s168
    %s172 = sphi 0, %s171
    %s188 = sphi 0, %s172
    %s196 = sphi 0, %s198
    %s199 = sphi 0, %s196
    %s200 = sphi 0, %s199
    %s216 = sphi 0, %s200
    %s220 = sphi 0, %s220
    %s222 = sphi 0, %s220
    %s223 = sphi 0, %s222
    %s237 = sphi 0, %s223
    %s241 = sphi 0, %s241
    %s243 = sphi 0, %s241
    %s244 = sphi 0, %s243
    %s258 = sphi 0, %s244
    %s266 = sphi 0, %s268
    %s269 = sphi 0, %s266
    %s270 = sphi 0, %s269
    %s286 = sphi 0, %s270
  $region4: #{spatial_self_attention.5} parent=0 // loop_header_branch
    %18 = sbr.rel (%p16) target = $region8
  $region5: #{spatial_self_attention.5} parent=0 // loop_body
    %s20 = ssub.s32 %s15, 1
    %s21 = ssub.s32 %s15, 2
    %s31 = sadd.s32 1, %s24
    %p32 = scmp.ge.s32.totalorder %s31, 1
    %s33 = scalar_select %p32, 0, %s31
    %s34 = sadd.s32 1, %s23
    %s35 = scalar_select %p32, %s34, %s23
    %p36 = scmp.ge.s32.totalorder %s35, 1
    %s37 = scalar_select %p36, 0, %s35
    %s38 = sadd.s32 1, %s22
    %s39 = scalar_select %p36, %s38, %s22
    %p40 = scmp.ge.s32.totalorder %s39, 2
    %s41 = scalar_select %p40, 0, %s39
    %s42 = ssub.s32 %s22, %s41
    %s43 = ssub.s32 %s23, %s37
    %s44 = sor.u32 %s42, %s43
    %p45 = scmp.eq.s32.totalorder %s44, 0
    %s47 = sadd.s32 %s46, 1
    %s48 = scalar_select %p45, %s46, %s47
    %p51 = pneg %p45
    %p52 = scmp.eq.s32.totalorder %s15, 1
    %p53 = por %p51, %p52
    %p54 = scmp.ne.s32.totalorder %s46, %s49
    %p55 = scmp.eq.s32.totalorder %s15, 0
    %p56 = por %p54, %p55
    %p57 = scmp.ne.s32.totalorder %s46, %s49
    %p58 = scmp.eq.s32.totalorder %s20, 1
    %p59 = por %p57, %p58
    %p60 = scmp.ne.s32.totalorder %s49, %s50
    %p61 = scmp.eq.s32.totalorder %s20, 0
    %p62 = por %p60, %p61
    %p63 = scmp.ne.s32.totalorder %s49, %s50
    %p64 = scmp.eq.s32.totalorder %s21, 1
    %p65 = por %p63, %p64
    %p67 = scmp.ne.s32.totalorder %s50, %s66
    %p68 = scmp.eq.s32.totalorder %s21, 0
    %p69 = por %p67, %p68
    %s70 = ssub.s32 %s22, %s41
    %p71 = scmp.eq.s32.totalorder %s70, 0
    %s73 = sadd.s32 %s72, 1
    %s74 = scalar_select %p71, %s72, %s73
    %p77 = pneg %p71
    %p78 = scmp.eq.s32.totalorder %s15, 1
    %p79 = por %p77, %p78
    %p80 = scmp.ne.s32.totalorder %s72, %s75
    %p81 = scmp.eq.s32.totalorder %s15, 0
    %p82 = por %p80, %p81
    %p83 = scmp.ne.s32.totalorder %s72, %s75
    %p84 = scmp.eq.s32.totalorder %s20, 1
    %p85 = por %p83, %p84
    %p86 = scmp.ne.s32.totalorder %s75, %s76
    %p87 = scmp.eq.s32.totalorder %s20, 0
    %p88 = por %p86, %p87
    %p89 = scmp.ne.s32.totalorder %s75, %s76
    %p90 = scmp.eq.s32.totalorder %s21, 1
    %p91 = por %p89, %p90
    %p93 = scmp.ne.s32.totalorder %s76, %s92
    %p94 = scmp.eq.s32.totalorder %s21, 0
    %p95 = por %p93, %p94
    %s96 = ssub.s32 %s22, %s41
    %p97 = scmp.eq.s32.totalorder %s96, 0
    %s99 = sadd.s32 %s98, 1
    %s100 = scalar_select %p97, %s98, %s99
    %p103 = pneg %p97
    %p104 = scmp.eq.s32.totalorder %s15, 1
    %p105 = por %p103, %p104
    %p106 = scmp.ne.s32.totalorder %s98, %s101
    %p107 = scmp.eq.s32.totalorder %s15, 0
    %p108 = por %p106, %p107
    %p109 = scmp.ne.s32.totalorder %s98, %s101
    %p110 = scmp.eq.s32.totalorder %s20, 1
    %p111 = por %p109, %p110
    %p112 = scmp.ne.s32.totalorder %s101, %s102
    %p113 = scmp.eq.s32.totalorder %s20, 0
    %p114 = por %p112, %p113
    %p115 = scmp.ne.s32.totalorder %s101, %s102
    %p116 = scmp.eq.s32.totalorder %s21, 1
    %p117 = por %p115, %p116
    %p119 = scmp.ne.s32.totalorder %s102, %s118
    %p120 = scmp.eq.s32.totalorder %s21, 0
    %p121 = por %p119, %p120
    %s123 = sadd.s32 %s122, 1
    %p126 = scmp.eq.s32.totalorder %s15, 1
    %p127 = scmp.ne.s32.totalorder %s122, %s124
    %p128 = scmp.eq.s32.totalorder %s15, 0
    %p129 = por %p127, %p128
    %p130 = scmp.ne.s32.totalorder %s122, %s124
    %p131 = scmp.eq.s32.totalorder %s20, 1
    %p132 = por %p130, %p131
    %p133 = scmp.ne.s32.totalorder %s124, %s125
    %p134 = scmp.eq.s32.totalorder %s20, 0
    %p135 = por %p133, %p134
    %p136 = scmp.ne.s32.totalorder %s124, %s125
    %p137 = scmp.eq.s32.totalorder %s21, 1
    %p138 = por %p136, %p137
    %p140 = scmp.ne.s32.totalorder %s125, %s139
    %p141 = scmp.eq.s32.totalorder %s21, 0
    %p142 = por %p140, %p141
    %s144 = sadd.s32 %s143, 1
    %p147 = scmp.eq.s32.totalorder %s15, 1
    %p148 = scmp.ne.s32.totalorder %s143, %s145
    %p149 = scmp.eq.s32.totalorder %s15, 0
    %p150 = por %p148, %p149
    %p151 = scmp.ne.s32.totalorder %s143, %s145
    %p152 = scmp.eq.s32.totalorder %s20, 1
    %p153 = por %p151, %p152
    %p154 = scmp.ne.s32.totalorder %s145, %s146
    %p155 = scmp.eq.s32.totalorder %s20, 0
    %p156 = por %p154, %p155
    %p157 = scmp.ne.s32.totalorder %s145, %s146
    %p158 = scmp.eq.s32.totalorder %s21, 1
    %p159 = por %p157, %p158
    %p161 = scmp.ne.s32.totalorder %s146, %s160
    %p162 = scmp.eq.s32.totalorder %s21, 0
    %p163 = por %p161, %p162
    %s164 = ssub.s32 %s22, %s41
    %s165 = ssub.s32 %s24, %s33
    %s166 = sor.u32 %s164, %s165
    %p167 = scmp.eq.s32.totalorder %s166, 0
    %s169 = sadd.s32 %s168, 1
    %s170 = scalar_select %p167, %s168, %s169
    %p173 = pneg %p167
    %p174 = scmp.eq.s32.totalorder %s15, 1
    %p175 = por %p173, %p174
    %p176 = scmp.ne.s32.totalorder %s168, %s171
    %p177 = scmp.eq.s32.totalorder %s15, 0
    %p178 = por %p176, %p177
    %p179 = scmp.ne.s32.totalorder %s168, %s171
    %p180 = scmp.eq.s32.totalorder %s20, 1
    %p181 = por %p179, %p180
    %p182 = scmp.ne.s32.totalorder %s171, %s172
    %p183 = scmp.eq.s32.totalorder %s20, 0
    %p184 = por %p182, %p183
    %p185 = scmp.ne.s32.totalorder %s171, %s172
    %p186 = scmp.eq.s32.totalorder %s21, 1
    %p187 = por %p185, %p186
    %p189 = scmp.ne.s32.totalorder %s172, %s188
    %p190 = scmp.eq.s32.totalorder %s21, 0
    %p191 = por %p189, %p190
    %s192 = ssub.s32 %s22, %s41
    %s193 = ssub.s32 %s24, %s33
    %s194 = sor.u32 %s192, %s193
    %p195 = scmp.eq.s32.totalorder %s194, 0
    %s197 = sadd.s32 %s196, 1
    %s198 = scalar_select %p195, %s196, %s197
    %p201 = pneg %p195
    %p202 = scmp.eq.s32.totalorder %s15, 1
    %p203 = por %p201, %p202
    %p204 = scmp.ne.s32.totalorder %s196, %s199
    %p205 = scmp.eq.s32.totalorder %s15, 0
    %p206 = por %p204, %p205
    %p207 = scmp.ne.s32.totalorder %s196, %s199
    %p208 = scmp.eq.s32.totalorder %s20, 1
    %p209 = por %p207, %p208
    %p210 = scmp.ne.s32.totalorder %s199, %s200
    %p211 = scmp.eq.s32.totalorder %s20, 0
    %p212 = por %p210, %p211
    %p213 = scmp.ne.s32.totalorder %s199, %s200
    %p214 = scmp.eq.s32.totalorder %s21, 1
    %p215 = por %p213, %p214
    %p217 = scmp.ne.s32.totalorder %s200, %s216
    %p218 = scmp.eq.s32.totalorder %s21, 0
    %p219 = por %p217, %p218
    %s221 = sadd.s32 %s220, 1
    %p224 = scmp.eq.s32.totalorder %s15, 1
    %p225 = scmp.ne.s32.totalorder %s220, %s222
    %p226 = scmp.eq.s32.totalorder %s15, 0
    %p227 = por %p225, %p226
    %p228 = scmp.ne.s32.totalorder %s220, %s222
    %p229 = scmp.eq.s32.totalorder %s20, 1
    %p230 = por %p228, %p229
    %p231 = scmp.ne.s32.totalorder %s222, %s223
    %p232 = scmp.eq.s32.totalorder %s20, 0
    %p233 = por %p231, %p232
    %p234 = scmp.ne.s32.totalorder %s222, %s223
    %p235 = scmp.eq.s32.totalorder %s21, 1
    %p236 = por %p234, %p235
    %p238 = scmp.ne.s32.totalorder %s223, %s237
    %p239 = scmp.eq.s32.totalorder %s21, 0
    %p240 = por %p238, %p239
    %s242 = sadd.s32 %s241, 1
    %p245 = scmp.eq.s32.totalorder %s15, 1
    %p246 = scmp.ne.s32.totalorder %s241, %s243
    %p247 = scmp.eq.s32.totalorder %s15, 0
    %p248 = por %p246, %p247
    %p249 = scmp.ne.s32.totalorder %s241, %s243
    %p250 = scmp.eq.s32.totalorder %s20, 1
    %p251 = por %p249, %p250
    %p252 = scmp.ne.s32.totalorder %s243, %s244
    %p253 = scmp.eq.s32.totalorder %s20, 0
    %p254 = por %p252, %p253
    %p255 = scmp.ne.s32.totalorder %s243, %s244
    %p256 = scmp.eq.s32.totalorder %s21, 1
    %p257 = por %p255, %p256
    %p259 = scmp.ne.s32.totalorder %s244, %s258
    %p260 = scmp.eq.s32.totalorder %s21, 0
    %p261 = por %p259, %p260
    %s262 = ssub.s32 %s22, %s41
    %s263 = ssub.s32 %s23, %s37
    %s264 = sor.u32 %s262, %s263
    %p265 = scmp.eq.s32.totalorder %s264, 0
    %s267 = sadd.s32 %s266, 1
    %s268 = scalar_select %p265, %s266, %s267
    %p271 = pneg %p265
    %p272 = scmp.eq.s32.totalorder %s15, 1
    %p273 = por %p271, %p272
    %p274 = scmp.ne.s32.totalorder %s266, %s269
    %p275 = scmp.eq.s32.totalorder %s15, 0
    %p276 = por %p274, %p275
    %p277 = scmp.ne.s32.totalorder %s266, %s269
    %p278 = scmp.eq.s32.totalorder %s20, 1
    %p279 = por %p277, %p278
    %p280 = scmp.ne.s32.totalorder %s269, %s270
    %p281 = scmp.eq.s32.totalorder %s20, 0
    %p282 = por %p280, %p281
    %p283 = scmp.ne.s32.totalorder %s269, %s270
    %p284 = scmp.eq.s32.totalorder %s21, 1
    %p285 = por %p283, %p284
    %p287 = scmp.ne.s32.totalorder %s270, %s286
    %p288 = scmp.eq.s32.totalorder %s21, 0
    %p289 = por %p287, %p288
    %p290 = scmp.le.s32.totalorder 1, %s15
    %p291 = scmp.lt.s32.totalorder %s15, 3
    %p292 = pnand %p290, %p291
    %p293 = pneg %p292
    // Predicated region
    $region9: #{spatial_self_attention.5} parent=5 // pred_check
      _
    $region10: #{spatial_self_attention.5} parent=5 // pred_check_branch
      %295 = sbr.rel (%p292) target = $region12
    $region11: #{spatial_self_attention.5} parent=5 // pred_region
      %s296 = ssub.s32 %s15, 1
      // Predicated region
      $region13: #{spatial_self_attention.5} parent=11 // pred_check
        %p297 = pneg %p135
      $region14: #{spatial_self_attention.5} parent=11 // pred_check_branch
        %299 = sbr.rel (%p297) target = $region16
      $region15: #{spatial_self_attention.5} parent=11 // pred_region
        _
      $region16: #{spatial_self_attention.5} parent=11 // pred_fallthru
        _
      // Predicated region
      $region17: #{spatial_self_attention.5} parent=11 // pred_check
        %p300 = pneg %p156
      $region18: #{spatial_self_attention.5} parent=11 // pred_check_branch
        %302 = sbr.rel (%p300) target = $region20
      $region19: #{spatial_self_attention.5} parent=11 // pred_region
        _
      $region20: #{spatial_self_attention.5} parent=11 // pred_fallthru
        _
      // Predicated region
      $region21: #{spatial_self_attention.5} parent=11 // pred_check
        %p303 = pneg %p233
      $region22: #{spatial_self_attention.5} parent=11 // pred_check_branch
        %305 = sbr.rel (%p303) target = $region24
      $region23: #{spatial_self_attention.5} parent=11 // pred_region
        _
      $region24: #{spatial_self_attention.5} parent=11 // pred_fallthru
        _
      // Predicated region
      $region25: #{spatial_self_attention.5} parent=11 // pred_check
        %p306 = pneg %p254
      $region26: #{spatial_self_attention.5} parent=11 // pred_check_branch
        %308 = sbr.rel (%p306) target = $region28
      $region27: #{spatial_self_attention.5} parent=11 // pred_region
        _
      $region28: #{spatial_self_attention.5} parent=11 // pred_fallthru
        _
    $region12: #{spatial_self_attention.5} parent=5 // pred_fallthru
      _
    %p309 = scmp.lt.s32.totalorder %s15, 2
    // Predicated region
    $region29: #{spatial_self_attention.5} parent=5 // pred_check
      %p310 = pneg %p309
    $region30: #{spatial_self_attention.5} parent=5 // pred_check_branch
      %312 = sbr.rel (%p310) target = $region32
    $region31: #{spatial_self_attention.5} parent=5 // pred_region
      // Predicated region
      $region33: #{spatial_self_attention.5} parent=31 // pred_check
        %p313 = pneg %p56
      $region34: #{spatial_self_attention.5} parent=31 // pred_check_branch
        %315 = sbr.rel (%p313) target = $region36
      $region35: #{spatial_self_attention.5} parent=31 // pred_region
        %s316 = smul.u32 32, %s23
        %p317 = scmp.lt.s32.totalorder %s22, 1
        %s318 = scalar_select %p317, %s22, 1
        %p319 = scmp.lt.s32.totalorder %s316, 31
        %s320 = scalar_select %p319, %s316, 31
        %s321 = smul.addr %s318, 32
        %s322 = sadd.s32 %s320, %s321
        %s323 = smul.addr %s322, 8
        %s324 = scalar_lea.vmem %s0, %s323
        %s325 = smul.u32 32, %s23
      $region36: #{spatial_self_attention.5} parent=31 // pred_fallthru
        _
      // Predicated region
      $region37: #{spatial_self_attention.5} parent=31 // pred_check
        %p326 = pneg %p82
      $region38: #{spatial_self_attention.5} parent=31 // pred_check_branch
        %328 = sbr.rel (%p326) target = $region40
      $region39: #{spatial_self_attention.5} parent=31 // pred_region
        %p329 = scmp.lt.s32.totalorder %s22, 1
        %s330 = scalar_select %p329, %s22, 1
        %s331 = scalar_lea.vmem %s1, %s330
      $region40: #{spatial_self_attention.5} parent=31 // pred_fallthru
        _
      // Predicated region
      $region41: #{spatial_self_attention.5} parent=31 // pred_check
        %p332 = pneg %p108
      $region42: #{spatial_self_attention.5} parent=31 // pred_check_branch
        %334 = sbr.rel (%p332) target = $region44
      $region43: #{spatial_self_attention.5} parent=31 // pred_region
        %p335 = scmp.lt.s32.totalorder %s22, 1
        %s336 = scalar_select %p335, %s22, 1
        %s337 = scalar_lea.vmem %s2, %s336
      $region44: #{spatial_self_attention.5} parent=31 // pred_fallthru
        _
      // Predicated region
      $region45: #{spatial_self_attention.5} parent=31 // pred_check
        %p338 = pneg %p178
      $region46: #{spatial_self_attention.5} parent=31 // pred_check_branch
        %340 = sbr.rel (%p338) target = $region48
      $region47: #{spatial_self_attention.5} parent=31 // pred_region
        %s341 = smul.u32 32, %s24
        %p342 = scmp.lt.s32.totalorder %s22, 1
        %s343 = scalar_select %p342, %s22, 1
        %p344 = scmp.lt.s32.totalorder %s341, 31
        %s345 = scalar_select %p344, %s341, 31
        %s346 = smul.addr %s343, 32
        %s347 = sadd.s32 %s345, %s346
        %s348 = smul.addr %s347, 4
        %s349 = scalar_lea.vmem %s5, %s348
        %s350 = smul.u32 32, %s24
      $region48: #{spatial_self_attention.5} parent=31 // pred_fallthru
        _
      // Predicated region
      $region49: #{spatial_self_attention.5} parent=31 // pred_check
        %p351 = pneg %p206
      $region50: #{spatial_self_attention.5} parent=31 // pred_check_branch
        %353 = sbr.rel (%p351) target = $region52
      $region51: #{spatial_self_attention.5} parent=31 // pred_region
        %s354 = smul.u32 32, %s24
        %p355 = scmp.lt.s32.totalorder %s22, 1
        %s356 = scalar_select %p355, %s22, 1
        %p357 = scmp.lt.s32.totalorder %s354, 31
        %s358 = scalar_select %p357, %s354, 31
        %s359 = smul.addr %s356, 32
        %s360 = sadd.s32 %s358, %s359
        %s361 = smul.addr %s360, 4
        %s362 = scalar_lea.vmem %s6, %s361
        %s363 = smul.u32 32, %s24
      $region52: #{spatial_self_attention.5} parent=31 // pred_fallthru
        _
    $region32: #{spatial_self_attention.5} parent=5 // pred_fallthru
      _
    %p364 = scmp.le.s32.totalorder 1, %s15
    %p365 = scmp.lt.s32.totalorder %s15, 3
    %p366 = pnand %p364, %p365
    %p367 = pneg %p366
    // Predicated region
    $region53: #{spatial_self_attention.5} parent=5 // pred_check
      _
    $region54: #{spatial_self_attention.5} parent=5 // pred_check_branch
      %369 = sbr.rel (%p366) target = $region56
    $region55: #{spatial_self_attention.5} parent=5 // pred_region
      %s370 = ssub.s32 %s15, 1
      %s371 = smul.u32 32, %s26
      %p372 = scmp.lt.s32.totalorder %s25, 1
      %s373 = scalar_select %p372, %s25, 1
      %p374 = scmp.lt.s32.totalorder %s371, 31
      %s375 = scalar_select %p374, %s371, 31
      %s376 = smul.addr %s373, 32
      %s377 = sadd.s32 %s375, %s376
      %s378 = smul.addr %s377, 8
      %s379 = scalar_lea.vmem %s0, %s378
      %p380 = pneg %p62
      %p381 = pneg %p59
      %p382 = scmp.lt.s32.totalorder %s25, 1
      %s383 = scalar_select %p382, %s25, 1
      %s384 = scalar_lea.vmem %s1, %s383
      %p385 = pneg %p88
      %p386 = pneg %p85
      %p387 = scmp.lt.s32.totalorder %s25, 1
      %s388 = scalar_select %p387, %s25, 1
      %s389 = scalar_lea.vmem %s2, %s388
      %p390 = pneg %p114
      %p391 = pneg %p111
      %p392 = pneg %p135
      %p393 = pneg %p132
      %p394 = pneg %p156
      %p395 = pneg %p153
      %s396 = smul.u32 32, %s27
      %p397 = scmp.lt.s32.totalorder %s25, 1
      %s398 = scalar_select %p397, %s25, 1
      %p399 = scmp.lt.s32.totalorder %s396, 31
      %s400 = scalar_select %p399, %s396, 31
      %s401 = smul.addr %s398, 32
      %s402 = sadd.s32 %s400, %s401
      %s403 = smul.addr %s402, 4
      %s404 = scalar_lea.vmem %s5, %s403
      %p405 = pneg %p184
      %p406 = pneg %p181
      %s407 = smul.u32 32, %s27
      %p408 = scmp.lt.s32.totalorder %s25, 1
      %s409 = scalar_select %p408, %s25, 1
      %p410 = scmp.lt.s32.totalorder %s407, 31
      %s411 = scalar_select %p410, %s407, 31
      %s412 = smul.addr %s409, 32
      %s413 = sadd.s32 %s411, %s412
      %s414 = smul.addr %s413, 4
      %s415 = scalar_lea.vmem %s6, %s414
      %p416 = pneg %p212
      %p417 = pneg %p209
      %p418 = pneg %p233
      %p419 = pneg %p230
      %p420 = pneg %p254
      %p421 = pneg %p251
      %p422 = pneg %p282
      %p423 = pneg %p279
      %s424 = smul.u32 32, %s26
      %p425 = scmp.lt.s32.totalorder %s25, 1
      %s426 = scalar_select %p425, %s25, 1
      %p427 = scmp.lt.s32.totalorder %s424, 31
      %s428 = scalar_select %p427, %s424, 31
      %s429 = smul.addr %s426, 32
      %s430 = sadd.s32 %s428, %s429
      %s431 = smul.addr %s430, 8
      %s432 = scalar_lea.vmem %s9, %s431
      %s433 = smul.u32 32, %s26
      %p434 = scmp.lt.s32.totalorder %s25, 1
      %s435 = scalar_select %p434, %s25, 1
      %p436 = scmp.lt.s32.totalorder %s433, 31
      %s437 = scalar_select %p436, %s433, 31
      %s438 = smul.addr %s435, 32
      %s439 = sadd.s32 %s437, %s438
      %s440 = smul.addr %s439, 8
      %s441 = scalar_lea.vmem %s0, %s440
      %s442 = smul.u32 32, %s26
      %p443 = scmp.lt.s32.totalorder %s25, 1
      %s444 = scalar_select %p443, %s25, 1
      %s445 = scalar_lea.vmem %s1, %s444
      %p446 = scmp.lt.s32.totalorder %s25, 1
      %s447 = scalar_select %p446, %s25, 1
      %s448 = scalar_lea.vmem %s2, %s447
      %s449 = smul.u32 32, %s27
      %p450 = scmp.lt.s32.totalorder %s25, 1
      %s451 = scalar_select %p450, %s25, 1
      %p452 = scmp.lt.s32.totalorder %s449, 31
      %s453 = scalar_select %p452, %s449, 31
      %s454 = smul.addr %s451, 32
      %s455 = sadd.s32 %s453, %s454
      %s456 = smul.addr %s455, 4
      %s457 = scalar_lea.vmem %s5, %s456
      %s458 = smul.u32 32, %s27
      %s459 = smul.u32 32, %s27
      %p460 = scmp.lt.s32.totalorder %s25, 1
      %s461 = scalar_select %p460, %s25, 1
      %p462 = scmp.lt.s32.totalorder %s459, 31
      %s463 = scalar_select %p462, %s459, 31
      %s464 = smul.addr %s461, 32
      %s465 = sadd.s32 %s463, %s464
      %s466 = smul.addr %s465, 4
      %s467 = scalar_lea.vmem %s6, %s466
      %s468 = smul.u32 32, %s27
      %s469 = smul.u32 32, %s26
      %p470 = scmp.lt.s32.totalorder %s25, 1
      %s471 = scalar_select %p470, %s25, 1
      %p472 = scmp.lt.s32.totalorder %s469, 31
      %s473 = scalar_select %p472, %s469, 31
      %s474 = smul.addr %s471, 32
      %s475 = sadd.s32 %s473, %s474
      %s476 = smul.addr %s475, 8
      %s477 = scalar_lea.vmem %s9, %s476
      %s478 = smul.u32 32, %s26
      %p479 = scmp.eq.s32.totalorder %s27, 0
      // Predicated region
      $region57: #{spatial_self_attention.5} parent=55 // pred_check
        %p480 = pneg %p479
      $region58: #{spatial_self_attention.5} parent=55 // pred_check_branch
        %482 = sbr.rel (%p480) target = $region60
      $region59: #{spatial_self_attention.5} parent=55 // pred_region
        %v483 = vld [vmem:[%s441] sm:$0xff]
        %v484 = vld [vmem:[%s441 + $0x8] sm:$0xff]
        %v485 = vld [vmem:[%s441 + $0x10] sm:$0xff]
        %v486 = vld [vmem:[%s441 + $0x18] sm:$0xff]
        %v487 = vld [vmem:[%s441 + $0x20] sm:$0xff]
        %v488 = vld [vmem:[%s441 + $0x28] sm:$0xff]
        %v489 = vld [vmem:[%s441 + $0x30] sm:$0xff]
        %v490 = vld [vmem:[%s441 + $0x38] sm:$0xff]
        %v491 = vld [vmem:[%s441 + $0x40] sm:$0xff]
        %v492 = vld [vmem:[%s441 + $0x48] sm:$0xff]
        %v493 = vld [vmem:[%s441 + $0x50] sm:$0xff]
        %v494 = vld [vmem:[%s441 + $0x58] sm:$0xff]
        %v495 = vld [vmem:[%s441 + $0x60] sm:$0xff]
        %v496 = vld [vmem:[%s441 + $0x68] sm:$0xff]
        %v497 = vld [vmem:[%s441 + $0x70] sm:$0xff]
        %v498 = vld [vmem:[%s441 + $0x78] sm:$0xff]
        %v499 = vld [vmem:[%s441 + $0x80] sm:$0xff]
        %v500 = vld [vmem:[%s441 + $0x88] sm:$0xff]
        %v501 = vld [vmem:[%s441 + $0x90] sm:$0xff]
        %v502 = vld [vmem:[%s441 + $0x98] sm:$0xff]
        %v503 = vld [vmem:[%s441 + $0xa0] sm:$0xff]
        %v504 = vld [vmem:[%s441 + $0xa8] sm:$0xff]
        %v505 = vld [vmem:[%s441 + $0xb0] sm:$0xff]
        %v506 = vld [vmem:[%s441 + $0xb8] sm:$0xff]
        %v507 = vld [vmem:[%s441 + $0xc0] sm:$0xff]
        %v508 = vld [vmem:[%s441 + $0xc8] sm:$0xff]
        %v509 = vld [vmem:[%s441 + $0xd0] sm:$0xff]
        %v510 = vld [vmem:[%s441 + $0xd8] sm:$0xff]
        %v511 = vld [vmem:[%s441 + $0xe0] sm:$0xff]
        %v512 = vld [vmem:[%s441 + $0xe8] sm:$0xff]
        %v513 = vld [vmem:[%s441 + $0xf0] sm:$0xff]
        %v514 = vld [vmem:[%s441 + $0xf8] sm:$0xff]
        %v515 = vld [vmem:[%s445] sm:$0x1]
        %v517 = vperm.slane %v515, 0
        %v519 = vmul.f32 %v483, %v517
        %v520 = vmul.f32 %v484, %v517
        %v521 = vmul.f32 %v485, %v517
        %v522 = vmul.f32 %v486, %v517
        %v523 = vmul.f32 %v487, %v517
        %v524 = vmul.f32 %v488, %v517
        %v525 = vmul.f32 %v489, %v517
        %v526 = vmul.f32 %v490, %v517
        %v527 = vmul.f32 %v491, %v517
        %v528 = vmul.f32 %v492, %v517
        %v529 = vmul.f32 %v493, %v517
        %v530 = vmul.f32 %v494, %v517
        %v531 = vmul.f32 %v495, %v517
        %v532 = vmul.f32 %v496, %v517
        %v533 = vmul.f32 %v497, %v517
        %v534 = vmul.f32 %v498, %v517
        %v535 = vmul.f32 %v499, %v517
        %v536 = vmul.f32 %v500, %v517
        %v537 = vmul.f32 %v501, %v517
        %v538 = vmul.f32 %v502, %v517
        %v539 = vmul.f32 %v503, %v517
        %v540 = vmul.f32 %v504, %v517
        %v541 = vmul.f32 %v505, %v517
        %v542 = vmul.f32 %v506, %v517
        %v543 = vmul.f32 %v507, %v517
        %v544 = vmul.f32 %v508, %v517
        %v545 = vmul.f32 %v509, %v517
        %v546 = vmul.f32 %v510, %v517
        %v547 = vmul.f32 %v511, %v517
        %v548 = vmul.f32 %v512, %v517
        %v549 = vmul.f32 %v513, %v517
        %v550 = vmul.f32 %v514, %v517
        %v551 = vld [vmem:[%s448] sm:$0x1]
        %v553 = vperm.slane %v551, 0
        %v555 = vadd.f32 %v519, %v553
        %v556 = vadd.f32 %v520, %v553
        %v557 = vadd.f32 %v521, %v553
        %v558 = vadd.f32 %v522, %v553
        %v559 = vadd.f32 %v523, %v553
        %v560 = vadd.f32 %v524, %v553
        %v561 = vadd.f32 %v525, %v553
        %v562 = vadd.f32 %v526, %v553
        %v563 = vadd.f32 %v527, %v553
        %v564 = vadd.f32 %v528, %v553
        %v565 = vadd.f32 %v529, %v553
        %v566 = vadd.f32 %v530, %v553
        %v567 = vadd.f32 %v531, %v553
        %v568 = vadd.f32 %v532, %v553
        %v569 = vadd.f32 %v533, %v553
        %v570 = vadd.f32 %v534, %v553
        %v571 = vadd.f32 %v535, %v553
        %v572 = vadd.f32 %v536, %v553
        %v573 = vadd.f32 %v537, %v553
        %v574 = vadd.f32 %v538, %v553
        %v575 = vadd.f32 %v539, %v553
        %v576 = vadd.f32 %v540, %v553
        %v577 = vadd.f32 %v541, %v553
        %v578 = vadd.f32 %v542, %v553
        %v579 = vadd.f32 %v543, %v553
        %v580 = vadd.f32 %v544, %v553
        %v581 = vadd.f32 %v545, %v553
        %v582 = vadd.f32 %v546, %v553
        %v583 = vadd.f32 %v547, %v553
        %v584 = vadd.f32 %v548, %v553
        %v585 = vadd.f32 %v549, %v553
        %v586 = vadd.f32 %v550, %v553
        %v587 = vpack.c.bf16 %v556, %v555
        %v588 = vpack.c.bf16 %v558, %v557
        %v589 = vpack.c.bf16 %v560, %v559
        %v590 = vpack.c.bf16 %v562, %v561
        %v591 = vpack.c.bf16 %v564, %v563
        %v592 = vpack.c.bf16 %v566, %v565
        %v593 = vpack.c.bf16 %v568, %v567
        %v594 = vpack.c.bf16 %v570, %v569
        %v595 = vpack.c.bf16 %v572, %v571
        %v596 = vpack.c.bf16 %v574, %v573
        %v597 = vpack.c.bf16 %v576, %v575
        %v598 = vpack.c.bf16 %v578, %v577
        %v599 = vpack.c.bf16 %v580, %v579
        %v600 = vpack.c.bf16 %v582, %v581
        %v601 = vpack.c.bf16 %v584, %v583
        %v602 = vpack.c.bf16 %v586, %v585
        %v603 = vld [vmem:[%s3] sm:$0xf]
        %v604 = vld [vmem:[%s3 + $0x4] sm:$0xf]
        %v605 = vld [vmem:[%s3 + $0x8] sm:$0xf]
        %v606 = vld [vmem:[%s3 + $0xc] sm:$0xf]
        %v607 = vld [vmem:[%s3 + $0x10] sm:$0xf]
        %v608 = vld [vmem:[%s3 + $0x14] sm:$0xf]
        %v609 = vld [vmem:[%s3 + $0x18] sm:$0xf]
        %v610 = vld [vmem:[%s3 + $0x1c] sm:$0xf]
        %v611 = vld [vmem:[%s3 + $0x20] sm:$0xf]
        %v612 = vld [vmem:[%s3 + $0x24] sm:$0xf]
        %v613 = vld [vmem:[%s3 + $0x28] sm:$0xf]
        %v614 = vld [vmem:[%s3 + $0x2c] sm:$0xf]
        %v615 = vld [vmem:[%s3 + $0x30] sm:$0xf]
        %v616 = vld [vmem:[%s3 + $0x34] sm:$0xf]
        %v617 = vld [vmem:[%s3 + $0x38] sm:$0xf]
        %v618 = vld [vmem:[%s3 + $0x3c] sm:$0xf]
        %v619 = vld [vmem:[%s4] sm:$0x1]
        %v621 = vperm.slane %v619, 0
        %v639 = vunpack.c.l.b16 %v603
        %v640 = vunpack.c.l.b16 %v604
        %v641 = vunpack.c.l.b16 %v605
        %v642 = vunpack.c.l.b16 %v606
        %v643 = vunpack.c.l.b16 %v607
        %v644 = vunpack.c.l.b16 %v608
        %v645 = vunpack.c.l.b16 %v609
        %v646 = vunpack.c.l.b16 %v610
        %v647 = vunpack.c.l.b16 %v611
        %v648 = vunpack.c.l.b16 %v612
        %v649 = vunpack.c.l.b16 %v613
        %v650 = vunpack.c.l.b16 %v614
        %v651 = vunpack.c.l.b16 %v615
        %v652 = vunpack.c.l.b16 %v616
        %v653 = vunpack.c.l.b16 %v617
        %v654 = vunpack.c.l.b16 %v618
        %v655 = vpack.c.b16 %v640, %v639
        %v656 = vpack.c.b16 %v642, %v641
        %v657 = vpack.c.b16 %v644, %v643
        %v658 = vpack.c.b16 %v646, %v645
        %v659 = vpack.c.b16 %v648, %v647
        %v660 = vpack.c.b16 %v650, %v649
        %v661 = vpack.c.b16 %v652, %v651
        %v662 = vpack.c.b16 %v654, %v653
        %671 = vmatpush.bf16.msra.mxu0 %v662
        %672 = vmatpush.bf16.msra.mxu0 %v661
        %673 = vmatpush.bf16.msra.mxu0 %v660
        %674 = vmatpush.bf16.msra.mxu0 %v659
        %675 = vmatpush.bf16.msra.mxu0 %v658
        %676 = vmatpush.bf16.msra.mxu0 %v657
        %677 = vmatpush.bf16.msra.mxu0 %v656
        %678 = vmatpush.bf16.msra.mxu0 %v655
        %679 = vmatmul.bf16.gmra.mxu0 %v587
        %v680 = vpop.f32.mrf.mxu0
        %v681 = vadd.f32 %v621, %v680
        %v682 = vpop.f32.mrf.mxu0
        %v683 = vadd.f32 %v621, %v682
        %684 = vmatmul.bf16.gmra.mxu0 %v588
        %v685 = vpop.f32.mrf.mxu0
        %v686 = vadd.f32 %v621, %v685
        %v687 = vpop.f32.mrf.mxu0
        %v688 = vadd.f32 %v621, %v687
        %689 = vmatmul.bf16.gmra.mxu0 %v589
        %v690 = vpop.f32.mrf.mxu0
        %v691 = vadd.f32 %v621, %v690
        %v692 = vpop.f32.mrf.mxu0
        %v693 = vadd.f32 %v621, %v692
        %694 = vmatmul.bf16.gmra.mxu0 %v590
        %v695 = vpop.f32.mrf.mxu0
        %v696 = vadd.f32 %v621, %v695
        %v697 = vpop.f32.mrf.mxu0
        %v698 = vadd.f32 %v621, %v697
        %699 = vmatmul.bf16.gmra.mxu0 %v591
        %v700 = vpop.f32.mrf.mxu0
        %v701 = vadd.f32 %v621, %v700
        %v702 = vpop.f32.mrf.mxu0
        %v703 = vadd.f32 %v621, %v702
        %704 = vmatmul.bf16.gmra.mxu0 %v592
        %v705 = vpop.f32.mrf.mxu0
        %v706 = vadd.f32 %v621, %v705
        %v707 = vpop.f32.mrf.mxu0
        %v708 = vadd.f32 %v621, %v707
        %709 = vmatmul.bf16.gmra.mxu0 %v593
        %v710 = vpop.f32.mrf.mxu0
        %v711 = vadd.f32 %v621, %v710
        %v712 = vpop.f32.mrf.mxu0
        %v713 = vadd.f32 %v621, %v712
        %714 = vmatmul.bf16.gmra.mxu0 %v594
        %v715 = vpop.f32.mrf.mxu0
        %v716 = vadd.f32 %v621, %v715
        %v717 = vpop.f32.mrf.mxu0
        %v718 = vadd.f32 %v621, %v717
        %719 = vmatmul.bf16.gmra.mxu0 %v595
        %v720 = vpop.f32.mrf.mxu0
        %v721 = vadd.f32 %v621, %v720
        %v722 = vpop.f32.mrf.mxu0
        %v723 = vadd.f32 %v621, %v722
        %724 = vmatmul.bf16.gmra.mxu0 %v596
        %v725 = vpop.f32.mrf.mxu0
        %v726 = vadd.f32 %v621, %v725
        %v727 = vpop.f32.mrf.mxu0
        %v728 = vadd.f32 %v621, %v727
        %729 = vmatmul.bf16.gmra.mxu0 %v597
        %v730 = vpop.f32.mrf.mxu0
        %v731 = vadd.f32 %v621, %v730
        %v732 = vpop.f32.mrf.mxu0
        %v733 = vadd.f32 %v621, %v732
        %734 = vmatmul.bf16.gmra.mxu0 %v598
        %v735 = vpop.f32.mrf.mxu0
        %v736 = vadd.f32 %v621, %v735
        %v737 = vpop.f32.mrf.mxu0
        %v738 = vadd.f32 %v621, %v737
        %739 = vmatmul.bf16.gmra.mxu0 %v599
        %v740 = vpop.f32.mrf.mxu0
        %v741 = vadd.f32 %v621, %v740
        %v742 = vpop.f32.mrf.mxu0
        %v743 = vadd.f32 %v621, %v742
        %744 = vmatmul.bf16.gmra.mxu0 %v600
        %v745 = vpop.f32.mrf.mxu0
        %v746 = vadd.f32 %v621, %v745
        %v747 = vpop.f32.mrf.mxu0
        %v748 = vadd.f32 %v621, %v747
        %749 = vmatmul.bf16.gmra.mxu0 %v601
        %v750 = vpop.f32.mrf.mxu0
        %v751 = vadd.f32 %v621, %v750
        %v752 = vpop.f32.mrf.mxu0
        %v753 = vadd.f32 %v621, %v752
        %754 = vmatmul.bf16.gmra.mxu0 %v602
        %v755 = vpop.f32.mrf.mxu0
        %v756 = vadd.f32 %v621, %v755
        %v757 = vpop.f32.mrf.mxu0
        %v758 = vadd.f32 %v621, %v757
        %759 = vdwg.mxu0
        %v760 = vpack.c.bf16 %v681, %v681
        %v761 = vpack.c.bf16 %v683, %v683
        %v762 = vpack.c.bf16 %v686, %v686
        %v763 = vpack.c.bf16 %v688, %v688
        %v764 = vpack.c.bf16 %v691, %v691
        %v765 = vpack.c.bf16 %v693, %v693
        %v766 = vpack.c.bf16 %v696, %v696
        %v767 = vpack.c.bf16 %v698, %v698
        %v768 = vpack.c.bf16 %v701, %v701
        %v769 = vpack.c.bf16 %v703, %v703
        %v770 = vpack.c.bf16 %v706, %v706
        %v771 = vpack.c.bf16 %v708, %v708
        %v772 = vpack.c.bf16 %v711, %v711
        %v773 = vpack.c.bf16 %v713, %v713
        %v774 = vpack.c.bf16 %v716, %v716
        %v775 = vpack.c.bf16 %v718, %v718
        %v776 = vpack.c.bf16 %v721, %v721
        %v777 = vpack.c.bf16 %v723, %v723
        %v778 = vpack.c.bf16 %v726, %v726
        %v779 = vpack.c.bf16 %v728, %v728
        %v780 = vpack.c.bf16 %v731, %v731
        %v781 = vpack.c.bf16 %v733, %v733
        %v782 = vpack.c.bf16 %v736, %v736
        %v783 = vpack.c.bf16 %v738, %v738
        %v784 = vpack.c.bf16 %v741, %v741
        %v785 = vpack.c.bf16 %v743, %v743
        %v786 = vpack.c.bf16 %v746, %v746
        %v787 = vpack.c.bf16 %v748, %v748
        %v788 = vpack.c.bf16 %v751, %v751
        %v789 = vpack.c.bf16 %v753, %v753
        %v790 = vpack.c.bf16 %v756, %v756
        %v791 = vpack.c.bf16 %v758, %v758
        %792 = vst [vmem:[#allocation2] sm:$0xf] %v760
        %793 = vst [vmem:[#allocation2 + $0x4] sm:$0xf] %v761
        %794 = vst [vmem:[#allocation2 + $0x8] sm:$0xf] %v762
        %795 = vst [vmem:[#allocation2 + $0xc] sm:$0xf] %v763
        %796 = vst [vmem:[#allocation2 + $0x10] sm:$0xf] %v764
        %797 = vst [vmem:[#allocation2 + $0x14] sm:$0xf] %v765
        %798 = vst [vmem:[#allocation2 + $0x18] sm:$0xf] %v766
        %799 = vst [vmem:[#allocation2 + $0x1c] sm:$0xf] %v767
        %800 = vst [vmem:[#allocation2 + $0x20] sm:$0xf] %v768
        %801 = vst [vmem:[#allocation2 + $0x24] sm:$0xf] %v769
        %802 = vst [vmem:[#allocation2 + $0x28] sm:$0xf] %v770
        %803 = vst [vmem:[#allocation2 + $0x2c] sm:$0xf] %v771
        %804 = vst [vmem:[#allocation2 + $0x30] sm:$0xf] %v772
        %805 = vst [vmem:[#allocation2 + $0x34] sm:$0xf] %v773
        %806 = vst [vmem:[#allocation2 + $0x38] sm:$0xf] %v774
        %807 = vst [vmem:[#allocation2 + $0x3c] sm:$0xf] %v775
        %808 = vst [vmem:[#allocation2 + $0x40] sm:$0xf] %v776
        %809 = vst [vmem:[#allocation2 + $0x44] sm:$0xf] %v777
        %810 = vst [vmem:[#allocation2 + $0x48] sm:$0xf] %v778
        %811 = vst [vmem:[#allocation2 + $0x4c] sm:$0xf] %v779
        %812 = vst [vmem:[#allocation2 + $0x50] sm:$0xf] %v780
        %813 = vst [vmem:[#allocation2 + $0x54] sm:$0xf] %v781
        %814 = vst [vmem:[#allocation2 + $0x58] sm:$0xf] %v782
        %815 = vst [vmem:[#allocation2 + $0x5c] sm:$0xf] %v783
        %816 = vst [vmem:[#allocation2 + $0x60] sm:$0xf] %v784
        %817 = vst [vmem:[#allocation2 + $0x64] sm:$0xf] %v785
        %818 = vst [vmem:[#allocation2 + $0x68] sm:$0xf] %v786
        %819 = vst [vmem:[#allocation2 + $0x6c] sm:$0xf] %v787
        %820 = vst [vmem:[#allocation2 + $0x70] sm:$0xf] %v788
        %821 = vst [vmem:[#allocation2 + $0x74] sm:$0xf] %v789
        %822 = vst [vmem:[#allocation2 + $0x78] sm:$0xf] %v790
        %823 = vst [vmem:[#allocation2 + $0x7c] sm:$0xf] %v791
        %vm824 = vcmask 7168
        %825 = vst.msk [vmem:[#allocation3] sm:$0xff] %vm824, -inf
        %826 = vst.msk [vmem:[#allocation3 + $0x8] sm:$0xff] %vm824, -inf
        %827 = vst.msk [vmem:[#allocation3 + $0x10] sm:$0xff] %vm824, -inf
        %828 = vst.msk [vmem:[#allocation3 + $0x18] sm:$0xff] %vm824, -inf
        %829 = vst.msk [vmem:[#allocation3 + $0x20] sm:$0xff] %vm824, -inf
        %830 = vst.msk [vmem:[#allocation3 + $0x28] sm:$0xff] %vm824, -inf
        %831 = vst.msk [vmem:[#allocation3 + $0x30] sm:$0xff] %vm824, -inf
        %832 = vst.msk [vmem:[#allocation3 + $0x38] sm:$0xff] %vm824, -inf
        %833 = vst.msk [vmem:[#allocation3 + $0x40] sm:$0xff] %vm824, -inf
        %834 = vst.msk [vmem:[#allocation3 + $0x48] sm:$0xff] %vm824, -inf
        %835 = vst.msk [vmem:[#allocation3 + $0x50] sm:$0xff] %vm824, -inf
        %836 = vst.msk [vmem:[#allocation3 + $0x58] sm:$0xff] %vm824, -inf
        %837 = vst.msk [vmem:[#allocation3 + $0x60] sm:$0xff] %vm824, -inf
        %838 = vst.msk [vmem:[#allocation3 + $0x68] sm:$0xff] %vm824, -inf
        %839 = vst.msk [vmem:[#allocation3 + $0x70] sm:$0xff] %vm824, -inf
        %840 = vst.msk [vmem:[#allocation3 + $0x78] sm:$0xff] %vm824, -inf
        %841 = vst.msk [vmem:[#allocation3 + $0x80] sm:$0xff] %vm824, -inf
        %842 = vst.msk [vmem:[#allocation3 + $0x88] sm:$0xff] %vm824, -inf
        %843 = vst.msk [vmem:[#allocation3 + $0x90] sm:$0xff] %vm824, -inf
        %844 = vst.msk [vmem:[#allocation3 + $0x98] sm:$0xff] %vm824, -inf
        %845 = vst.msk [vmem:[#allocation3 + $0xa0] sm:$0xff] %vm824, -inf
        %846 = vst.msk [vmem:[#allocation3 + $0xa8] sm:$0xff] %vm824, -inf
        %847 = vst.msk [vmem:[#allocation3 + $0xb0] sm:$0xff] %vm824, -inf
        %848 = vst.msk [vmem:[#allocation3 + $0xb8] sm:$0xff] %vm824, -inf
        %849 = vst.msk [vmem:[#allocation3 + $0xc0] sm:$0xff] %vm824, -inf
        %850 = vst.msk [vmem:[#allocation3 + $0xc8] sm:$0xff] %vm824, -inf
        %851 = vst.msk [vmem:[#allocation3 + $0xd0] sm:$0xff] %vm824, -inf
        %852 = vst.msk [vmem:[#allocation3 + $0xd8] sm:$0xff] %vm824, -inf
        %853 = vst.msk [vmem:[#allocation3 + $0xe0] sm:$0xff] %vm824, -inf
        %854 = vst.msk [vmem:[#allocation3 + $0xe8] sm:$0xff] %vm824, -inf
        %855 = vst.msk [vmem:[#allocation3 + $0xf0] sm:$0xff] %vm824, -inf
        %856 = vst.msk [vmem:[#allocation3 + $0xf8] sm:$0xff] %vm824, -inf
        %857 = vst.msk [vmem:[#allocation4] sm:$0xff] %vm824, 0.0
        %858 = vst.msk [vmem:[#allocation4 + $0x8] sm:$0xff] %vm824, 0.0
        %859 = vst.msk [vmem:[#allocation4 + $0x10] sm:$0xff] %vm824, 0.0
        %860 = vst.msk [vmem:[#allocation4 + $0x18] sm:$0xff] %vm824, 0.0
        %861 = vst.msk [vmem:[#allocation4 + $0x20] sm:$0xff] %vm824, 0.0
        %862 = vst.msk [vmem:[#allocation4 + $0x28] sm:$0xff] %vm824, 0.0
        %863 = vst.msk [vmem:[#allocation4 + $0x30] sm:$0xff] %vm824, 0.0
        %864 = vst.msk [vmem:[#allocation4 + $0x38] sm:$0xff] %vm824, 0.0
        %865 = vst.msk [vmem:[#allocation4 + $0x40] sm:$0xff] %vm824, 0.0
        %866 = vst.msk [vmem:[#allocation4 + $0x48] sm:$0xff] %vm824, 0.0
        %867 = vst.msk [vmem:[#allocation4 + $0x50] sm:$0xff] %vm824, 0.0
        %868 = vst.msk [vmem:[#allocation4 + $0x58] sm:$0xff] %vm824, 0.0
        %869 = vst.msk [vmem:[#allocation4 + $0x60] sm:$0xff] %vm824, 0.0
        %870 = vst.msk [vmem:[#allocation4 + $0x68] sm:$0xff] %vm824, 0.0
        %871 = vst.msk [vmem:[#allocation4 + $0x70] sm:$0xff] %vm824, 0.0
        %872 = vst.msk [vmem:[#allocation4 + $0x78] sm:$0xff] %vm824, 0.0
        %873 = vst.msk [vmem:[#allocation4 + $0x80] sm:$0xff] %vm824, 0.0
        %874 = vst.msk [vmem:[#allocation4 + $0x88] sm:$0xff] %vm824, 0.0
        %875 = vst.msk [vmem:[#allocation4 + $0x90] sm:$0xff] %vm824, 0.0
        %876 = vst.msk [vmem:[#allocation4 + $0x98] sm:$0xff] %vm824, 0.0
        %877 = vst.msk [vmem:[#allocation4 + $0xa0] sm:$0xff] %vm824, 0.0
        %878 = vst.msk [vmem:[#allocation4 + $0xa8] sm:$0xff] %vm824, 0.0
        %879 = vst.msk [vmem:[#allocation4 + $0xb0] sm:$0xff] %vm824, 0.0
        %880 = vst.msk [vmem:[#allocation4 + $0xb8] sm:$0xff] %vm824, 0.0
        %881 = vst.msk [vmem:[#allocation4 + $0xc0] sm:$0xff] %vm824, 0.0
        %882 = vst.msk [vmem:[#allocation4 + $0xc8] sm:$0xff] %vm824, 0.0
        %883 = vst.msk [vmem:[#allocation4 + $0xd0] sm:$0xff] %vm824, 0.0
        %884 = vst.msk [vmem:[#allocation4 + $0xd8] sm:$0xff] %vm824, 0.0
        %885 = vst.msk [vmem:[#allocation4 + $0xe0] sm:$0xff] %vm824, 0.0
        %886 = vst.msk [vmem:[#allocation4 + $0xe8] sm:$0xff] %vm824, 0.0
        %887 = vst.msk [vmem:[#allocation4 + $0xf0] sm:$0xff] %vm824, 0.0
        %888 = vst.msk [vmem:[#allocation4 + $0xf8] sm:$0xff] %vm824, 0.0
        %889 = vst [vmem:[#allocation5] sm:$0xff] 0.0
        %890 = vst [vmem:[#allocation5 + $0x8] sm:$0xff] 0.0
        %891 = vst [vmem:[#allocation5 + $0x10] sm:$0xff] 0.0
        %892 = vst [vmem:[#allocation5 + $0x18] sm:$0xff] 0.0
        %893 = vst [vmem:[#allocation5 + $0x20] sm:$0xff] 0.0
        %894 = vst [vmem:[#allocation5 + $0x28] sm:$0xff] 0.0
        %895 = vst [vmem:[#allocation5 + $0x30] sm:$0xff] 0.0
        %896 = vst [vmem:[#allocation5 + $0x38] sm:$0xff] 0.0
        %897 = vst [vmem:[#allocation5 + $0x40] sm:$0xff] 0.0
        %898 = vst [vmem:[#allocation5 + $0x48] sm:$0xff] 0.0
        %899 = vst [vmem:[#allocation5 + $0x50] sm:$0xff] 0.0
        %900 = vst [vmem:[#allocation5 + $0x58] sm:$0xff] 0.0
        %901 = vst [vmem:[#allocation5 + $0x60] sm:$0xff] 0.0
        %902 = vst [vmem:[#allocation5 + $0x68] sm:$0xff] 0.0
        %903 = vst [vmem:[#allocation5 + $0x70] sm:$0xff] 0.0
        %904 = vst [vmem:[#allocation5 + $0x78] sm:$0xff] 0.0
        %905 = vst [vmem:[#allocation5 + $0x80] sm:$0xff] 0.0
        %906 = vst [vmem:[#allocation5 + $0x88] sm:$0xff] 0.0
        %907 = vst [vmem:[#allocation5 + $0x90] sm:$0xff] 0.0
        %908 = vst [vmem:[#allocation5 + $0x98] sm:$0xff] 0.0
        %909 = vst [vmem:[#allocation5 + $0xa0] sm:$0xff] 0.0
        %910 = vst [vmem:[#allocation5 + $0xa8] sm:$0xff] 0.0
        %911 = vst [vmem:[#allocation5 + $0xb0] sm:$0xff] 0.0
        %912 = vst [vmem:[#allocation5 + $0xb8] sm:$0xff] 0.0
        %913 = vst [vmem:[#allocation5 + $0xc0] sm:$0xff] 0.0
        %914 = vst [vmem:[#allocation5 + $0xc8] sm:$0xff] 0.0
        %915 = vst [vmem:[#allocation5 + $0xd0] sm:$0xff] 0.0
        %916 = vst [vmem:[#allocation5 + $0xd8] sm:$0xff] 0.0
        %917 = vst [vmem:[#allocation5 + $0xe0] sm:$0xff] 0.0
        %918 = vst [vmem:[#allocation5 + $0xe8] sm:$0xff] 0.0
        %919 = vst [vmem:[#allocation5 + $0xf0] sm:$0xff] 0.0
        %920 = vst [vmem:[#allocation5 + $0xf8] sm:$0xff] 0.0
      $region60: #{spatial_self_attention.5} parent=55 // pred_fallthru
        _
      %v921 = vld [vmem:[#allocation2] sm:$0xf]
      %v922 = vld [vmem:[#allocation2 + $0x4] sm:$0xf]
      %v923 = vld [vmem:[#allocation2 + $0x8] sm:$0xf]
      %v924 = vld [vmem:[#allocation2 + $0xc] sm:$0xf]
      %v925 = vld [vmem:[#allocation2 + $0x10] sm:$0xf]
      %v926 = vld [vmem:[#allocation2 + $0x14] sm:$0xf]
      %v927 = vld [vmem:[#allocation2 + $0x18] sm:$0xf]
      %v928 = vld [vmem:[#allocation2 + $0x1c] sm:$0xf]
      %v929 = vld [vmem:[#allocation2 + $0x20] sm:$0xf]
      %v930 = vld [vmem:[#allocation2 + $0x24] sm:$0xf]
      %v931 = vld [vmem:[#allocation2 + $0x28] sm:$0xf]
      %v932 = vld [vmem:[#allocation2 + $0x2c] sm:$0xf]
      %v933 = vld [vmem:[#allocation2 + $0x30] sm:$0xf]
      %v934 = vld [vmem:[#allocation2 + $0x34] sm:$0xf]
      %v935 = vld [vmem:[#allocation2 + $0x38] sm:$0xf]
      %v936 = vld [vmem:[#allocation2 + $0x3c] sm:$0xf]
      %v937 = vld [vmem:[#allocation2 + $0x40] sm:$0xf]
      %v938 = vld [vmem:[#allocation2 + $0x44] sm:$0xf]
      %v939 = vld [vmem:[#allocation2 + $0x48] sm:$0xf]
      %v940 = vld [vmem:[#allocation2 + $0x4c] sm:$0xf]
      %v941 = vld [vmem:[#allocation2 + $0x50] sm:$0xf]
      %v942 = vld [vmem:[#allocation2 + $0x54] sm:$0xf]
      %v943 = vld [vmem:[#allocation2 + $0x58] sm:$0xf]
      %v944 = vld [vmem:[#allocation2 + $0x5c] sm:$0xf]
      %v945 = vld [vmem:[#allocation2 + $0x60] sm:$0xf]
      %v946 = vld [vmem:[#allocation2 + $0x64] sm:$0xf]
      %v947 = vld [vmem:[#allocation2 + $0x68] sm:$0xf]
      %v948 = vld [vmem:[#allocation2 + $0x6c] sm:$0xf]
      %v949 = vld [vmem:[#allocation2 + $0x70] sm:$0xf]
      %v950 = vld [vmem:[#allocation2 + $0x74] sm:$0xf]
      %v951 = vld [vmem:[#allocation2 + $0x78] sm:$0xf]
      %v952 = vld [vmem:[#allocation2 + $0x7c] sm:$0xf]
      %v953 = vld [vmem:[%s457] sm:$0xf]
      %v954 = vld [vmem:[%s457 + $0x4] sm:$0xf]
      %v955 = vld [vmem:[%s457 + $0x8] sm:$0xf]
      %v956 = vld [vmem:[%s457 + $0xc] sm:$0xf]
      %v957 = vld [vmem:[%s457 + $0x10] sm:$0xf]
      %v958 = vld [vmem:[%s457 + $0x14] sm:$0xf]
      %v959 = vld [vmem:[%s457 + $0x18] sm:$0xf]
      %v960 = vld [vmem:[%s457 + $0x1c] sm:$0xf]
      %v961 = vld [vmem:[%s457 + $0x20] sm:$0xf]
      %v962 = vld [vmem:[%s457 + $0x24] sm:$0xf]
      %v963 = vld [vmem:[%s457 + $0x28] sm:$0xf]
      %v964 = vld [vmem:[%s457 + $0x2c] sm:$0xf]
      %v965 = vld [vmem:[%s457 + $0x30] sm:$0xf]
      %v966 = vld [vmem:[%s457 + $0x34] sm:$0xf]
      %v967 = vld [vmem:[%s457 + $0x38] sm:$0xf]
      %v968 = vld [vmem:[%s457 + $0x3c] sm:$0xf]
      %v969 = vld [vmem:[%s457 + $0x40] sm:$0xf]
      %v970 = vld [vmem:[%s457 + $0x44] sm:$0xf]
      %v971 = vld [vmem:[%s457 + $0x48] sm:$0xf]
      %v972 = vld [vmem:[%s457 + $0x4c] sm:$0xf]
      %v973 = vld [vmem:[%s457 + $0x50] sm:$0xf]
      %v974 = vld [vmem:[%s457 + $0x54] sm:$0xf]
      %v975 = vld [vmem:[%s457 + $0x58] sm:$0xf]
      %v976 = vld [vmem:[%s457 + $0x5c] sm:$0xf]
      %v977 = vld [vmem:[%s457 + $0x60] sm:$0xf]
      %v978 = vld [vmem:[%s457 + $0x64] sm:$0xf]
      %v979 = vld [vmem:[%s457 + $0x68] sm:$0xf]
      %v980 = vld [vmem:[%s457 + $0x6c] sm:$0xf]
      %v981 = vld [vmem:[%s457 + $0x70] sm:$0xf]
      %v982 = vld [vmem:[%s457 + $0x74] sm:$0xf]
      %v983 = vld [vmem:[%s457 + $0x78] sm:$0xf]
      %v984 = vld [vmem:[%s457 + $0x7c] sm:$0xf]
      %v1017 = vunpack.c.l.b16 %v921
      %v1018 = vunpack.c.l.b16 %v922
      %v1019 = vunpack.c.l.b16 %v923
      %v1020 = vunpack.c.l.b16 %v924
      %v1021 = vunpack.c.l.b16 %v925
      %v1022 = vunpack.c.l.b16 %v926
      %v1023 = vunpack.c.l.b16 %v927
      %v1024 = vunpack.c.l.b16 %v928
      %v1025 = vunpack.c.l.b16 %v929
      %v1026 = vunpack.c.l.b16 %v930
      %v1027 = vunpack.c.l.b16 %v931
      %v1028 = vunpack.c.l.b16 %v932
      %v1029 = vunpack.c.l.b16 %v933
      %v1030 = vunpack.c.l.b16 %v934
      %v1031 = vunpack.c.l.b16 %v935
      %v1032 = vunpack.c.l.b16 %v936
      %v1033 = vunpack.c.l.b16 %v937
      %v1034 = vunpack.c.l.b16 %v938
      %v1035 = vunpack.c.l.b16 %v939
      %v1036 = vunpack.c.l.b16 %v940
      %v1037 = vunpack.c.l.b16 %v941
      %v1038 = vunpack.c.l.b16 %v942
      %v1039 = vunpack.c.l.b16 %v943
      %v1040 = vunpack.c.l.b16 %v944
      %v1041 = vunpack.c.l.b16 %v945
      %v1042 = vunpack.c.l.b16 %v946
      %v1043 = vunpack.c.l.b16 %v947
      %v1044 = vunpack.c.l.b16 %v948
      %v1045 = vunpack.c.l.b16 %v949
      %v1046 = vunpack.c.l.b16 %v950
      %v1047 = vunpack.c.l.b16 %v951
      %v1048 = vunpack.c.l.b16 %v952
      %v1049 = vpack.c.b16 %v1018, %v1017
      %v1050 = vpack.c.b16 %v1020, %v1019
      %v1051 = vpack.c.b16 %v1022, %v1021
      %v1052 = vpack.c.b16 %v1024, %v1023
      %v1053 = vpack.c.b16 %v1026, %v1025
      %v1054 = vpack.c.b16 %v1028, %v1027
      %v1055 = vpack.c.b16 %v1030, %v1029
      %v1056 = vpack.c.b16 %v1032, %v1031
      %v1057 = vpack.c.b16 %v1034, %v1033
      %v1058 = vpack.c.b16 %v1036, %v1035
      %v1059 = vpack.c.b16 %v1038, %v1037
      %v1060 = vpack.c.b16 %v1040, %v1039
      %v1061 = vpack.c.b16 %v1042, %v1041
      %v1062 = vpack.c.b16 %v1044, %v1043
      %v1063 = vpack.c.b16 %v1046, %v1045
      %v1064 = vpack.c.b16 %v1048, %v1047
      %v1113 = vunpack.c.l.b16 %v953
      %v1114 = vunpack.c.l.b16 %v954
      %v1115 = vunpack.c.l.b16 %v955
      %v1116 = vunpack.c.l.b16 %v956
      %v1117 = vunpack.c.l.b16 %v957
      %v1118 = vunpack.c.l.b16 %v958
      %v1119 = vunpack.c.l.b16 %v959
      %v1120 = vunpack.c.l.b16 %v960
      %v1121 = vunpack.c.l.b16 %v961
      %v1122 = vunpack.c.l.b16 %v962
      %v1123 = vunpack.c.l.b16 %v963
      %v1124 = vunpack.c.l.b16 %v964
      %v1125 = vunpack.c.l.b16 %v965
      %v1126 = vunpack.c.l.b16 %v966
      %v1127 = vunpack.c.l.b16 %v967
      %v1128 = vunpack.c.l.b16 %v968
      %v1129 = vunpack.c.l.b16 %v969
      %v1130 = vunpack.c.l.b16 %v970
      %v1131 = vunpack.c.l.b16 %v971
      %v1132 = vunpack.c.l.b16 %v972
      %v1133 = vunpack.c.l.b16 %v973
      %v1134 = vunpack.c.l.b16 %v974
      %v1135 = vunpack.c.l.b16 %v975
      %v1136 = vunpack.c.l.b16 %v976
      %v1137 = vunpack.c.l.b16 %v977
      %v1138 = vunpack.c.l.b16 %v978
      %v1139 = vunpack.c.l.b16 %v979
      %v1140 = vunpack.c.l.b16 %v980
      %v1141 = vunpack.c.l.b16 %v981
      %v1142 = vunpack.c.l.b16 %v982
      %v1143 = vunpack.c.l.b16 %v983
      %v1144 = vunpack.c.l.b16 %v984
      %v1145 = vpack.c.b16 %v1114, %v1113
      %v1146 = vpack.c.b16 %v1116, %v1115
      %v1147 = vpack.c.b16 %v1118, %v1117
      %v1148 = vpack.c.b16 %v1120, %v1119
      %v1149 = vpack.c.b16 %v1122, %v1121
      %v1150 = vpack.c.b16 %v1124, %v1123
      %v1151 = vpack.c.b16 %v1126, %v1125
      %v1152 = vpack.c.b16 %v1128, %v1127
      %v1153 = vpack.c.b16 %v1130, %v1129
      %v1154 = vpack.c.b16 %v1132, %v1131
      %v1155 = vpack.c.b16 %v1134, %v1133
      %v1156 = vpack.c.b16 %v1136, %v1135
      %v1157 = vpack.c.b16 %v1138, %v1137
      %v1158 = vpack.c.b16 %v1140, %v1139
      %v1159 = vpack.c.b16 %v1142, %v1141
      %v1160 = vpack.c.b16 %v1144, %v1143
      %1177 = vmatpush.bf16.xpose.msra.mxu0 %v1152
      %1178 = vmatpush.bf16.xpose.msra.mxu0 %v1151
      %1179 = vmatpush.bf16.xpose.msra.mxu0 %v1150
      %1180 = vmatpush.bf16.xpose.msra.mxu0 %v1149
      %1181 = vmatpush.bf16.xpose.msra.mxu0 %v1148
      %1182 = vmatpush.bf16.xpose.msra.mxu0 %v1147
      %1183 = vmatpush.bf16.xpose.msra.mxu0 %v1146
      %1184 = vmatpush.bf16.xpose.msra.mxu0 %v1145
      %1185 = vmatmul.bf16.gmra.mxu0 %v1049
      %v1186 = vpop.f32.mrf.mxu0
      %v1187 = vadd.f32 0.0, %v1186
      %v1188 = vpop.f32.mrf.mxu0
      %v1189 = vadd.f32 0.0, %v1188
      %1190 = vmatmul.bf16.gmra.mxu0 %v1050
      %v1191 = vpop.f32.mrf.mxu0
      %v1192 = vadd.f32 0.0, %v1191
      %v1193 = vpop.f32.mrf.mxu0
      %v1194 = vadd.f32 0.0, %v1193
      %1195 = vmatmul.bf16.gmra.mxu0 %v1051
      %v1196 = vpop.f32.mrf.mxu0
      %v1197 = vadd.f32 0.0, %v1196
      %v1198 = vpop.f32.mrf.mxu0
      %v1199 = vadd.f32 0.0, %v1198
      %1200 = vmatmul.bf16.gmra.mxu0 %v1052
      %v1201 = vpop.f32.mrf.mxu0
      %v1202 = vadd.f32 0.0, %v1201
      %v1203 = vpop.f32.mrf.mxu0
      %v1204 = vadd.f32 0.0, %v1203
      %1205 = vmatmul.bf16.gmra.mxu0 %v1053
      %v1206 = vpop.f32.mrf.mxu0
      %v1207 = vadd.f32 0.0, %v1206
      %v1208 = vpop.f32.mrf.mxu0
      %v1209 = vadd.f32 0.0, %v1208
      %1210 = vmatmul.bf16.gmra.mxu0 %v1054
      %v1211 = vpop.f32.mrf.mxu0
      %v1212 = vadd.f32 0.0, %v1211
      %v1213 = vpop.f32.mrf.mxu0
      %v1214 = vadd.f32 0.0, %v1213
      %1215 = vmatmul.bf16.gmra.mxu0 %v1055
      %v1216 = vpop.f32.mrf.mxu0
      %v1217 = vadd.f32 0.0, %v1216
      %v1218 = vpop.f32.mrf.mxu0
      %v1219 = vadd.f32 0.0, %v1218
      %1220 = vmatmul.bf16.gmra.mxu0 %v1056
      %v1221 = vpop.f32.mrf.mxu0
      %v1222 = vadd.f32 0.0, %v1221
      %v1223 = vpop.f32.mrf.mxu0
      %v1224 = vadd.f32 0.0, %v1223
      %1225 = vmatmul.bf16.gmra.mxu0 %v1057
      %v1226 = vpop.f32.mrf.mxu0
      %v1227 = vadd.f32 0.0, %v1226
      %v1228 = vpop.f32.mrf.mxu0
      %v1229 = vadd.f32 0.0, %v1228
      %1230 = vmatmul.bf16.gmra.mxu0 %v1058
      %v1231 = vpop.f32.mrf.mxu0
      %v1232 = vadd.f32 0.0, %v1231
      %v1233 = vpop.f32.mrf.mxu0
      %v1234 = vadd.f32 0.0, %v1233
      %1235 = vmatmul.bf16.gmra.mxu0 %v1059
      %v1236 = vpop.f32.mrf.mxu0
      %v1237 = vadd.f32 0.0, %v1236
      %v1238 = vpop.f32.mrf.mxu0
      %v1239 = vadd.f32 0.0, %v1238
      %1240 = vmatmul.bf16.gmra.mxu0 %v1060
      %v1241 = vpop.f32.mrf.mxu0
      %v1242 = vadd.f32 0.0, %v1241
      %v1243 = vpop.f32.mrf.mxu0
      %v1244 = vadd.f32 0.0, %v1243
      %1245 = vmatmul.bf16.gmra.mxu0 %v1061
      %v1246 = vpop.f32.mrf.mxu0
      %v1247 = vadd.f32 0.0, %v1246
      %v1248 = vpop.f32.mrf.mxu0
      %v1249 = vadd.f32 0.0, %v1248
      %1250 = vmatmul.bf16.gmra.mxu0 %v1062
      %v1251 = vpop.f32.mrf.mxu0
      %v1252 = vadd.f32 0.0, %v1251
      %v1253 = vpop.f32.mrf.mxu0
      %v1254 = vadd.f32 0.0, %v1253
      %1255 = vmatmul.bf16.gmra.mxu0 %v1063
      %v1256 = vpop.f32.mrf.mxu0
      %v1257 = vadd.f32 0.0, %v1256
      %v1258 = vpop.f32.mrf.mxu0
      %v1259 = vadd.f32 0.0, %v1258
      %1260 = vmatmul.bf16.gmra.mxu0 %v1064
      %v1261 = vpop.f32.mrf.mxu0
      %v1262 = vadd.f32 0.0, %v1261
      %v1263 = vpop.f32.mrf.mxu0
      %v1264 = vadd.f32 0.0, %v1263
      %1265 = vdwg.mxu0
      %1266 = vmatpush.bf16.xpose.msra.mxu0 %v1160
      %1267 = vmatpush.bf16.xpose.msra.mxu0 %v1159
      %1268 = vmatpush.bf16.xpose.msra.mxu0 %v1158
      %1269 = vmatpush.bf16.xpose.msra.mxu0 %v1157
      %1270 = vmatpush.bf16.xpose.msra.mxu0 %v1156
      %1271 = vmatpush.bf16.xpose.msra.mxu0 %v1155
      %1272 = vmatpush.bf16.xpose.msra.mxu0 %v1154
      %1273 = vmatpush.bf16.xpose.msra.mxu0 %v1153
      %1274 = vmatmul.bf16.gmra.mxu0 %v1049
      %v1275 = vpop.f32.mrf.mxu0
      %v1276 = vadd.f32 0.0, %v1275
      %v1277 = vpop.f32.mrf.mxu0
      %v1278 = vadd.f32 0.0, %v1277
      %1279 = vmatmul.bf16.gmra.mxu0 %v1050
      %v1280 = vpop.f32.mrf.mxu0
      %v1281 = vadd.f32 0.0, %v1280
      %v1282 = vpop.f32.mrf.mxu0
      %v1283 = vadd.f32 0.0, %v1282
      %1284 = vmatmul.bf16.gmra.mxu0 %v1051
      %v1285 = vpop.f32.mrf.mxu0
      %v1286 = vadd.f32 0.0, %v1285
      %v1287 = vpop.f32.mrf.mxu0
      %v1288 = vadd.f32 0.0, %v1287
      %1289 = vmatmul.bf16.gmra.mxu0 %v1052
      %v1290 = vpop.f32.mrf.mxu0
      %v1291 = vadd.f32 0.0, %v1290
      %v1292 = vpop.f32.mrf.mxu0
      %v1293 = vadd.f32 0.0, %v1292
      %1294 = vmatmul.bf16.gmra.mxu0 %v1053
      %v1295 = vpop.f32.mrf.mxu0
      %v1296 = vadd.f32 0.0, %v1295
      %v1297 = vpop.f32.mrf.mxu0
      %v1298 = vadd.f32 0.0, %v1297
      %1299 = vmatmul.bf16.gmra.mxu0 %v1054
      %v1300 = vpop.f32.mrf.mxu0
      %v1301 = vadd.f32 0.0, %v1300
      %v1302 = vpop.f32.mrf.mxu0
      %v1303 = vadd.f32 0.0, %v1302
      %1304 = vmatmul.bf16.gmra.mxu0 %v1055
      %v1305 = vpop.f32.mrf.mxu0
      %v1306 = vadd.f32 0.0, %v1305
      %v1307 = vpop.f32.mrf.mxu0
      %v1308 = vadd.f32 0.0, %v1307
      %1309 = vmatmul.bf16.gmra.mxu0 %v1056
      %v1310 = vpop.f32.mrf.mxu0
      %v1311 = vadd.f32 0.0, %v1310
      %v1312 = vpop.f32.mrf.mxu0
      %v1313 = vadd.f32 0.0, %v1312
      %1314 = vmatmul.bf16.gmra.mxu0 %v1057
      %v1315 = vpop.f32.mrf.mxu0
      %v1316 = vadd.f32 0.0, %v1315
      %v1317 = vpop.f32.mrf.mxu0
      %v1318 = vadd.f32 0.0, %v1317
      %1319 = vmatmul.bf16.gmra.mxu0 %v1058
      %v1320 = vpop.f32.mrf.mxu0
      %v1321 = vadd.f32 0.0, %v1320
      %v1322 = vpop.f32.mrf.mxu0
      %v1323 = vadd.f32 0.0, %v1322
      %1324 = vmatmul.bf16.gmra.mxu0 %v1059
      %v1325 = vpop.f32.mrf.mxu0
      %v1326 = vadd.f32 0.0, %v1325
      %v1327 = vpop.f32.mrf.mxu0
      %v1328 = vadd.f32 0.0, %v1327
      %1329 = vmatmul.bf16.gmra.mxu0 %v1060
      %v1330 = vpop.f32.mrf.mxu0
      %v1331 = vadd.f32 0.0, %v1330
      %v1332 = vpop.f32.mrf.mxu0
      %v1333 = vadd.f32 0.0, %v1332
      %1334 = vmatmul.bf16.gmra.mxu0 %v1061
      %v1335 = vpop.f32.mrf.mxu0
      %v1336 = vadd.f32 0.0, %v1335
      %v1337 = vpop.f32.mrf.mxu0
      %v1338 = vadd.f32 0.0, %v1337
      %1339 = vmatmul.bf16.gmra.mxu0 %v1062
      %v1340 = vpop.f32.mrf.mxu0
      %v1341 = vadd.f32 0.0, %v1340
      %v1342 = vpop.f32.mrf.mxu0
      %v1343 = vadd.f32 0.0, %v1342
      %1344 = vmatmul.bf16.gmra.mxu0 %v1063
      %v1345 = vpop.f32.mrf.mxu0
      %v1346 = vadd.f32 0.0, %v1345
      %v1347 = vpop.f32.mrf.mxu0
      %v1348 = vadd.f32 0.0, %v1347
      %1349 = vmatmul.bf16.gmra.mxu0 %v1064
      %v1350 = vpop.f32.mrf.mxu0
      %v1351 = vadd.f32 0.0, %v1350
      %v1352 = vpop.f32.mrf.mxu0
      %v1353 = vadd.f32 0.0, %v1352
      %1354 = vdwg.mxu0
      %v1355 = vld [vmem:[#allocation3] sm:$0xff]
      %v1356 = vld [vmem:[#allocation3 + $0x8] sm:$0xff]
      %v1357 = vld [vmem:[#allocation3 + $0x10] sm:$0xff]
      %v1358 = vld [vmem:[#allocation3 + $0x18] sm:$0xff]
      %v1359 = vld [vmem:[#allocation3 + $0x20] sm:$0xff]
      %v1360 = vld [vmem:[#allocation3 + $0x28] sm:$0xff]
      %v1361 = vld [vmem:[#allocation3 + $0x30] sm:$0xff]
      %v1362 = vld [vmem:[#allocation3 + $0x38] sm:$0xff]
      %v1363 = vld [vmem:[#allocation3 + $0x40] sm:$0xff]
      %v1364 = vld [vmem:[#allocation3 + $0x48] sm:$0xff]
      %v1365 = vld [vmem:[#allocation3 + $0x50] sm:$0xff]
      %v1366 = vld [vmem:[#allocation3 + $0x58] sm:$0xff]
      %v1367 = vld [vmem:[#allocation3 + $0x60] sm:$0xff]
      %v1368 = vld [vmem:[#allocation3 + $0x68] sm:$0xff]
      %v1369 = vld [vmem:[#allocation3 + $0x70] sm:$0xff]
      %v1370 = vld [vmem:[#allocation3 + $0x78] sm:$0xff]
      %v1371 = vld [vmem:[#allocation3 + $0x80] sm:$0xff]
      %v1372 = vld [vmem:[#allocation3 + $0x88] sm:$0xff]
      %v1373 = vld [vmem:[#allocation3 + $0x90] sm:$0xff]
      %v1374 = vld [vmem:[#allocation3 + $0x98] sm:$0xff]
      %v1375 = vld [vmem:[#allocation3 + $0xa0] sm:$0xff]
      %v1376 = vld [vmem:[#allocation3 + $0xa8] sm:$0xff]
      %v1377 = vld [vmem:[#allocation3 + $0xb0] sm:$0xff]
      %v1378 = vld [vmem:[#allocation3 + $0xb8] sm:$0xff]
      %v1379 = vld [vmem:[#allocation3 + $0xc0] sm:$0xff]
      %v1380 = vld [vmem:[#allocation3 + $0xc8] sm:$0xff]
      %v1381 = vld [vmem:[#allocation3 + $0xd0] sm:$0xff]
      %v1382 = vld [vmem:[#allocation3 + $0xd8] sm:$0xff]
      %v1383 = vld [vmem:[#allocation3 + $0xe0] sm:$0xff]
      %v1384 = vld [vmem:[#allocation3 + $0xe8] sm:$0xff]
      %v1385 = vld [vmem:[#allocation3 + $0xf0] sm:$0xff]
      %v1386 = vld [vmem:[#allocation3 + $0xf8] sm:$0xff]
      %v1387 = vmax.f32 %v1187, %v1276
      %1388 = vmax.xlane.f32.xlu0 %v1387
      %v1389 = vpop.xlane.xlu0 %1388
      %v1390 = vmax.f32 %v1189, %v1278
      %1391 = vmax.xlane.f32.xlu0 %v1390
      %v1392 = vpop.xlane.xlu0 %1391
      %v1393 = vmax.f32 %v1192, %v1281
      %1394 = vmax.xlane.f32.xlu0 %v1393
      %v1395 = vpop.xlane.xlu0 %1394
      %v1396 = vmax.f32 %v1194, %v1283
      %1397 = vmax.xlane.f32.xlu0 %v1396
      %v1398 = vpop.xlane.xlu0 %1397
      %v1399 = vmax.f32 %v1197, %v1286
      %1400 = vmax.xlane.f32.xlu0 %v1399
      %v1401 = vpop.xlane.xlu0 %1400
      %v1402 = vmax.f32 %v1199, %v1288
      %1403 = vmax.xlane.f32.xlu0 %v1402
      %v1404 = vpop.xlane.xlu0 %1403
      %v1405 = vmax.f32 %v1202, %v1291
      %1406 = vmax.xlane.f32.xlu0 %v1405
      %v1407 = vpop.xlane.xlu0 %1406
      %v1408 = vmax.f32 %v1204, %v1293
      %1409 = vmax.xlane.f32.xlu0 %v1408
      %v1410 = vpop.xlane.xlu0 %1409
      %v1411 = vmax.f32 %v1207, %v1296
      %1412 = vmax.xlane.f32.xlu0 %v1411
      %v1413 = vpop.xlane.xlu0 %1412
      %v1414 = vmax.f32 %v1209, %v1298
      %1415 = vmax.xlane.f32.xlu0 %v1414
      %v1416 = vpop.xlane.xlu0 %1415
      %v1417 = vmax.f32 %v1212, %v1301
      %1418 = vmax.xlane.f32.xlu0 %v1417
      %v1419 = vpop.xlane.xlu0 %1418
      %v1420 = vmax.f32 %v1214, %v1303
      %1421 = vmax.xlane.f32.xlu0 %v1420
      %v1422 = vpop.xlane.xlu0 %1421
      %v1423 = vmax.f32 %v1217, %v1306
      %1424 = vmax.xlane.f32.xlu0 %v1423
      %v1425 = vpop.xlane.xlu0 %1424
      %v1426 = vmax.f32 %v1219, %v1308
      %1427 = vmax.xlane.f32.xlu0 %v1426
      %v1428 = vpop.xlane.xlu0 %1427
      %v1429 = vmax.f32 %v1222, %v1311
      %1430 = vmax.xlane.f32.xlu0 %v1429
      %v1431 = vpop.xlane.xlu0 %1430
      %v1432 = vmax.f32 %v1224, %v1313
      %1433 = vmax.xlane.f32.xlu0 %v1432
      %v1434 = vpop.xlane.xlu0 %1433
      %v1435 = vmax.f32 %v1227, %v1316
      %1436 = vmax.xlane.f32.xlu0 %v1435
      %v1437 = vpop.xlane.xlu0 %1436
      %v1438 = vmax.f32 %v1229, %v1318
      %1439 = vmax.xlane.f32.xlu0 %v1438
      %v1440 = vpop.xlane.xlu0 %1439
      %v1441 = vmax.f32 %v1232, %v1321
      %1442 = vmax.xlane.f32.xlu0 %v1441
      %v1443 = vpop.xlane.xlu0 %1442
      %v1444 = vmax.f32 %v1234, %v1323
      %1445 = vmax.xlane.f32.xlu0 %v1444
      %v1446 = vpop.xlane.xlu0 %1445
      %v1447 = vmax.f32 %v1237, %v1326
      %1448 = vmax.xlane.f32.xlu0 %v1447
      %v1449 = vpop.xlane.xlu0 %1448
      %v1450 = vmax.f32 %v1239, %v1328
      %1451 = vmax.xlane.f32.xlu0 %v1450
      %v1452 = vpop.xlane.xlu0 %1451
      %v1453 = vmax.f32 %v1242, %v1331
      %1454 = vmax.xlane.f32.xlu0 %v1453
      %v1455 = vpop.xlane.xlu0 %1454
      %v1456 = vmax.f32 %v1244, %v1333
      %1457 = vmax.xlane.f32.xlu0 %v1456
      %v1458 = vpop.xlane.xlu0 %1457
      %v1459 = vmax.f32 %v1247, %v1336
      %1460 = vmax.xlane.f32.xlu0 %v1459
      %v1461 = vpop.xlane.xlu0 %1460
      %v1462 = vmax.f32 %v1249, %v1338
      %1463 = vmax.xlane.f32.xlu0 %v1462
      %v1464 = vpop.xlane.xlu0 %1463
      %v1465 = vmax.f32 %v1252, %v1341
      %1466 = vmax.xlane.f32.xlu0 %v1465
      %v1467 = vpop.xlane.xlu0 %1466
      %v1468 = vmax.f32 %v1254, %v1343
      %1469 = vmax.xlane.f32.xlu0 %v1468
      %v1470 = vpop.xlane.xlu0 %1469
      %v1471 = vmax.f32 %v1257, %v1346
      %1472 = vmax.xlane.f32.xlu0 %v1471
      %v1473 = vpop.xlane.xlu0 %1472
      %v1474 = vmax.f32 %v1259, %v1348
      %1475 = vmax.xlane.f32.xlu0 %v1474
      %v1476 = vpop.xlane.xlu0 %1475
      %v1477 = vmax.f32 %v1262, %v1351
      %1478 = vmax.xlane.f32.xlu0 %v1477
      %v1479 = vpop.xlane.xlu0 %1478
      %v1480 = vmax.f32 %v1264, %v1353
      %1481 = vmax.xlane.f32.xlu0 %v1480
      %v1482 = vpop.xlane.xlu0 %1481
      %v1483 = vmax.f32 %v1355, %v1389
      %v1484 = vmax.f32 %v1356, %v1392
      %v1485 = vmax.f32 %v1357, %v1395
      %v1486 = vmax.f32 %v1358, %v1398
      %v1487 = vmax.f32 %v1359, %v1401
      %v1488 = vmax.f32 %v1360, %v1404
      %v1489 = vmax.f32 %v1361, %v1407
      %v1490 = vmax.f32 %v1362, %v1410
      %v1491 = vmax.f32 %v1363, %v1413
      %v1492 = vmax.f32 %v1364, %v1416
      %v1493 = vmax.f32 %v1365, %v1419
      %v1494 = vmax.f32 %v1366, %v1422
      %v1495 = vmax.f32 %v1367, %v1425
      %v1496 = vmax.f32 %v1368, %v1428
      %v1497 = vmax.f32 %v1369, %v1431
      %v1498 = vmax.f32 %v1370, %v1434
      %v1499 = vmax.f32 %v1371, %v1437
      %v1500 = vmax.f32 %v1372, %v1440
      %v1501 = vmax.f32 %v1373, %v1443
      %v1502 = vmax.f32 %v1374, %v1446
      %v1503 = vmax.f32 %v1375, %v1449
      %v1504 = vmax.f32 %v1376, %v1452
      %v1505 = vmax.f32 %v1377, %v1455
      %v1506 = vmax.f32 %v1378, %v1458
      %v1507 = vmax.f32 %v1379, %v1461
      %v1508 = vmax.f32 %v1380, %v1464
      %v1509 = vmax.f32 %v1381, %v1467
      %v1510 = vmax.f32 %v1382, %v1470
      %v1511 = vmax.f32 %v1383, %v1473
      %v1512 = vmax.f32 %v1384, %v1476
      %v1513 = vmax.f32 %v1385, %v1479
      %v1514 = vmax.f32 %v1386, %v1482
      %v1515 = vsub.f32 %v1355, %v1483
      %v1516 = vsub.f32 %v1356, %v1484
      %v1517 = vsub.f32 %v1357, %v1485
      %v1518 = vsub.f32 %v1358, %v1486
      %v1519 = vsub.f32 %v1359, %v1487
      %v1520 = vsub.f32 %v1360, %v1488
      %v1521 = vsub.f32 %v1361, %v1489
      %v1522 = vsub.f32 %v1362, %v1490
      %v1523 = vsub.f32 %v1363, %v1491
      %v1524 = vsub.f32 %v1364, %v1492
      %v1525 = vsub.f32 %v1365, %v1493
      %v1526 = vsub.f32 %v1366, %v1494
      %v1527 = vsub.f32 %v1367, %v1495
      %v1528 = vsub.f32 %v1368, %v1496
      %v1529 = vsub.f32 %v1369, %v1497
      %v1530 = vsub.f32 %v1370, %v1498
      %v1531 = vsub.f32 %v1371, %v1499
      %v1532 = vsub.f32 %v1372, %v1500
      %v1533 = vsub.f32 %v1373, %v1501
      %v1534 = vsub.f32 %v1374, %v1502
      %v1535 = vsub.f32 %v1375, %v1503
      %v1536 = vsub.f32 %v1376, %v1504
      %v1537 = vsub.f32 %v1377, %v1505
      %v1538 = vsub.f32 %v1378, %v1506
      %v1539 = vsub.f32 %v1379, %v1507
      %v1540 = vsub.f32 %v1380, %v1508
      %v1541 = vsub.f32 %v1381, %v1509
      %v1542 = vsub.f32 %v1382, %v1510
      %v1543 = vsub.f32 %v1383, %v1511
      %v1544 = vsub.f32 %v1384, %v1512
      %v1545 = vsub.f32 %v1385, %v1513
      %v1546 = vsub.f32 %v1386, %v1514
      %v1547 = vmul.f32 %v1515, 1.442695
      %v1548 = vpow.pop %v1547
      %v1549 = vmul.f32 %v1516, 1.442695
      %v1550 = vpow.pop %v1549
      %v1551 = vmul.f32 %v1517, 1.442695
      %v1552 = vpow.pop %v1551
      %v1553 = vmul.f32 %v1518, 1.442695
      %v1554 = vpow.pop %v1553
      %v1555 = vmul.f32 %v1519, 1.442695
      %v1556 = vpow.pop %v1555
      %v1557 = vmul.f32 %v1520, 1.442695
      %v1558 = vpow.pop %v1557
      %v1559 = vmul.f32 %v1521, 1.442695
      %v1560 = vpow.pop %v1559
      %v1561 = vmul.f32 %v1522, 1.442695
      %v1562 = vpow.pop %v1561
      %v1563 = vmul.f32 %v1523, 1.442695
      %v1564 = vpow.pop %v1563
      %v1565 = vmul.f32 %v1524, 1.442695
      %v1566 = vpow.pop %v1565
      %v1567 = vmul.f32 %v1525, 1.442695
      %v1568 = vpow.pop %v1567
      %v1569 = vmul.f32 %v1526, 1.442695
      %v1570 = vpow.pop %v1569
      %v1571 = vmul.f32 %v1527, 1.442695
      %v1572 = vpow.pop %v1571
      %v1573 = vmul.f32 %v1528, 1.442695
      %v1574 = vpow.pop %v1573
      %v1575 = vmul.f32 %v1529, 1.442695
      %v1576 = vpow.pop %v1575
      %v1577 = vmul.f32 %v1530, 1.442695
      %v1578 = vpow.pop %v1577
      %v1579 = vmul.f32 %v1531, 1.442695
      %v1580 = vpow.pop %v1579
      %v1581 = vmul.f32 %v1532, 1.442695
      %v1582 = vpow.pop %v1581
      %v1583 = vmul.f32 %v1533, 1.442695
      %v1584 = vpow.pop %v1583
      %v1585 = vmul.f32 %v1534, 1.442695
      %v1586 = vpow.pop %v1585
      %v1587 = vmul.f32 %v1535, 1.442695
      %v1588 = vpow.pop %v1587
      %v1589 = vmul.f32 %v1536, 1.442695
      %v1590 = vpow.pop %v1589
      %v1591 = vmul.f32 %v1537, 1.442695
      %v1592 = vpow.pop %v1591
      %v1593 = vmul.f32 %v1538, 1.442695
      %v1594 = vpow.pop %v1593
      %v1595 = vmul.f32 %v1539, 1.442695
      %v1596 = vpow.pop %v1595
      %v1597 = vmul.f32 %v1540, 1.442695
      %v1598 = vpow.pop %v1597
      %v1599 = vmul.f32 %v1541, 1.442695
      %v1600 = vpow.pop %v1599
      %v1601 = vmul.f32 %v1542, 1.442695
      %v1602 = vpow.pop %v1601
      %v1603 = vmul.f32 %v1543, 1.442695
      %v1604 = vpow.pop %v1603
      %v1605 = vmul.f32 %v1544, 1.442695
      %v1606 = vpow.pop %v1605
      %v1607 = vmul.f32 %v1545, 1.442695
      %v1608 = vpow.pop %v1607
      %v1609 = vmul.f32 %v1546, 1.442695
      %v1610 = vpow.pop %v1609
      %1612 = vset.pattern.permute.xlu0 0
      %1613 = vperm.xlu0 %1612, %v1483
      %v1614 = vpop.permute.xlu0 %1613
      %1617 = vset.pattern.permute.xlu0 0
      %1618 = vperm.xlu0 %1617, %v1484
      %v1619 = vpop.permute.xlu0 %1618
      %1622 = vset.pattern.permute.xlu0 0
      %1623 = vperm.xlu0 %1622, %v1485
      %v1624 = vpop.permute.xlu0 %1623
      %1627 = vset.pattern.permute.xlu0 0
      %1628 = vperm.xlu0 %1627, %v1486
      %v1629 = vpop.permute.xlu0 %1628
      %1632 = vset.pattern.permute.xlu0 0
      %1633 = vperm.xlu0 %1632, %v1487
      %v1634 = vpop.permute.xlu0 %1633
      %1637 = vset.pattern.permute.xlu0 0
      %1638 = vperm.xlu0 %1637, %v1488
      %v1639 = vpop.permute.xlu0 %1638
      %1642 = vset.pattern.permute.xlu0 0
      %1643 = vperm.xlu0 %1642, %v1489
      %v1644 = vpop.permute.xlu0 %1643
      %1647 = vset.pattern.permute.xlu0 0
      %1648 = vperm.xlu0 %1647, %v1490
      %v1649 = vpop.permute.xlu0 %1648
      %1652 = vset.pattern.permute.xlu0 0
      %1653 = vperm.xlu0 %1652, %v1491
      %v1654 = vpop.permute.xlu0 %1653
      %1657 = vset.pattern.permute.xlu0 0
      %1658 = vperm.xlu0 %1657, %v1492
      %v1659 = vpop.permute.xlu0 %1658
      %1662 = vset.pattern.permute.xlu0 0
      %1663 = vperm.xlu0 %1662, %v1493
      %v1664 = vpop.permute.xlu0 %1663
      %1667 = vset.pattern.permute.xlu0 0
      %1668 = vperm.xlu0 %1667, %v1494
      %v1669 = vpop.permute.xlu0 %1668
      %1672 = vset.pattern.permute.xlu0 0
      %1673 = vperm.xlu0 %1672, %v1495
      %v1674 = vpop.permute.xlu0 %1673
      %1677 = vset.pattern.permute.xlu0 0
      %1678 = vperm.xlu0 %1677, %v1496
      %v1679 = vpop.permute.xlu0 %1678
      %1682 = vset.pattern.permute.xlu0 0
      %1683 = vperm.xlu0 %1682, %v1497
      %v1684 = vpop.permute.xlu0 %1683
      %1687 = vset.pattern.permute.xlu0 0
      %1688 = vperm.xlu0 %1687, %v1498
      %v1689 = vpop.permute.xlu0 %1688
      %1692 = vset.pattern.permute.xlu0 0
      %1693 = vperm.xlu0 %1692, %v1499
      %v1694 = vpop.permute.xlu0 %1693
      %1697 = vset.pattern.permute.xlu0 0
      %1698 = vperm.xlu0 %1697, %v1500
      %v1699 = vpop.permute.xlu0 %1698
      %1702 = vset.pattern.permute.xlu0 0
      %1703 = vperm.xlu0 %1702, %v1501
      %v1704 = vpop.permute.xlu0 %1703
      %1707 = vset.pattern.permute.xlu0 0
      %1708 = vperm.xlu0 %1707, %v1502
      %v1709 = vpop.permute.xlu0 %1708
      %1712 = vset.pattern.permute.xlu0 0
      %1713 = vperm.xlu0 %1712, %v1503
      %v1714 = vpop.permute.xlu0 %1713
      %1717 = vset.pattern.permute.xlu0 0
      %1718 = vperm.xlu0 %1717, %v1504
      %v1719 = vpop.permute.xlu0 %1718
      %1722 = vset.pattern.permute.xlu0 0
      %1723 = vperm.xlu0 %1722, %v1505
      %v1724 = vpop.permute.xlu0 %1723
      %1727 = vset.pattern.permute.xlu0 0
      %1728 = vperm.xlu0 %1727, %v1506
      %v1729 = vpop.permute.xlu0 %1728
      %1732 = vset.pattern.permute.xlu0 0
      %1733 = vperm.xlu0 %1732, %v1507
      %v1734 = vpop.permute.xlu0 %1733
      %1737 = vset.pattern.permute.xlu0 0
      %1738 = vperm.xlu0 %1737, %v1508
      %v1739 = vpop.permute.xlu0 %1738
      %1742 = vset.pattern.permute.xlu0 0
      %1743 = vperm.xlu0 %1742, %v1509
      %v1744 = vpop.permute.xlu0 %1743
      %1747 = vset.pattern.permute.xlu0 0
      %1748 = vperm.xlu0 %1747, %v1510
      %v1749 = vpop.permute.xlu0 %1748
      %1752 = vset.pattern.permute.xlu0 0
      %1753 = vperm.xlu0 %1752, %v1511
      %v1754 = vpop.permute.xlu0 %1753
      %1757 = vset.pattern.permute.xlu0 0
      %1758 = vperm.xlu0 %1757, %v1512
      %v1759 = vpop.permute.xlu0 %1758
      %1762 = vset.pattern.permute.xlu0 0
      %1763 = vperm.xlu0 %1762, %v1513
      %v1764 = vpop.permute.xlu0 %1763
      %1767 = vset.pattern.permute.xlu0 0
      %1768 = vperm.xlu0 %1767, %v1514
      %v1769 = vpop.permute.xlu0 %1768
      %v1771 = vsub.f32 %v1187, %v1614
      %v1772 = vsub.f32 %v1276, %v1614
      %v1773 = vsub.f32 %v1189, %v1619
      %v1774 = vsub.f32 %v1278, %v1619
      %v1775 = vsub.f32 %v1192, %v1624
      %v1776 = vsub.f32 %v1281, %v1624
      %v1777 = vsub.f32 %v1194, %v1629
      %v1778 = vsub.f32 %v1283, %v1629
      %v1779 = vsub.f32 %v1197, %v1634
      %v1780 = vsub.f32 %v1286, %v1634
      %v1781 = vsub.f32 %v1199, %v1639
      %v1782 = vsub.f32 %v1288, %v1639
      %v1783 = vsub.f32 %v1202, %v1644
      %v1784 = vsub.f32 %v1291, %v1644
      %v1785 = vsub.f32 %v1204, %v1649
      %v1786 = vsub.f32 %v1293, %v1649
      %v1787 = vsub.f32 %v1207, %v1654
      %v1788 = vsub.f32 %v1296, %v1654
      %v1789 = vsub.f32 %v1209, %v1659
      %v1790 = vsub.f32 %v1298, %v1659
      %v1791 = vsub.f32 %v1212, %v1664
      %v1792 = vsub.f32 %v1301, %v1664
      %v1793 = vsub.f32 %v1214, %v1669
      %v1794 = vsub.f32 %v1303, %v1669
      %v1795 = vsub.f32 %v1217, %v1674
      %v1796 = vsub.f32 %v1306, %v1674
      %v1797 = vsub.f32 %v1219, %v1679
      %v1798 = vsub.f32 %v1308, %v1679
      %v1799 = vsub.f32 %v1222, %v1684
      %v1800 = vsub.f32 %v1311, %v1684
      %v1801 = vsub.f32 %v1224, %v1689
      %v1802 = vsub.f32 %v1313, %v1689
      %v1803 = vsub.f32 %v1227, %v1694
      %v1804 = vsub.f32 %v1316, %v1694
      %v1805 = vsub.f32 %v1229, %v1699
      %v1806 = vsub.f32 %v1318, %v1699
      %v1807 = vsub.f32 %v1232, %v1704
      %v1808 = vsub.f32 %v1321, %v1704
      %v1809 = vsub.f32 %v1234, %v1709
      %v1810 = vsub.f32 %v1323, %v1709
      %v1811 = vsub.f32 %v1237, %v1714
      %v1812 = vsub.f32 %v1326, %v1714
      %v1813 = vsub.f32 %v1239, %v1719
      %v1814 = vsub.f32 %v1328, %v1719
      %v1815 = vsub.f32 %v1242, %v1724
      %v1816 = vsub.f32 %v1331, %v1724
      %v1817 = vsub.f32 %v1244, %v1729
      %v1818 = vsub.f32 %v1333, %v1729
      %v1819 = vsub.f32 %v1247, %v1734
      %v1820 = vsub.f32 %v1336, %v1734
      %v1821 = vsub.f32 %v1249, %v1739
      %v1822 = vsub.f32 %v1338, %v1739
      %v1823 = vsub.f32 %v1252, %v1744
      %v1824 = vsub.f32 %v1341, %v1744
      %v1825 = vsub.f32 %v1254, %v1749
      %v1826 = vsub.f32 %v1343, %v1749
      %v1827 = vsub.f32 %v1257, %v1754
      %v1828 = vsub.f32 %v1346, %v1754
      %v1829 = vsub.f32 %v1259, %v1759
      %v1830 = vsub.f32 %v1348, %v1759
      %v1831 = vsub.f32 %v1262, %v1764
      %v1832 = vsub.f32 %v1351, %v1764
      %v1833 = vsub.f32 %v1264, %v1769
      %v1834 = vsub.f32 %v1353, %v1769
      %v1835 = vmul.f32 %v1771, 1.442695
      %v1836 = vpow.pop %v1835
      %v1837 = vmul.f32 %v1772, 1.442695
      %v1838 = vpow.pop %v1837
      %v1839 = vmul.f32 %v1773, 1.442695
      %v1840 = vpow.pop %v1839
      %v1841 = vmul.f32 %v1774, 1.442695
      %v1842 = vpow.pop %v1841
      %v1843 = vmul.f32 %v1775, 1.442695
      %v1844 = vpow.pop %v1843
      %v1845 = vmul.f32 %v1776, 1.442695
      %v1846 = vpow.pop %v1845
      %v1847 = vmul.f32 %v1777, 1.442695
      %v1848 = vpow.pop %v1847
      %v1849 = vmul.f32 %v1778, 1.442695
      %v1850 = vpow.pop %v1849
      %v1851 = vmul.f32 %v1779, 1.442695
      %v1852 = vpow.pop %v1851
      %v1853 = vmul.f32 %v1780, 1.442695
      %v1854 = vpow.pop %v1853
      %v1855 = vmul.f32 %v1781, 1.442695
      %v1856 = vpow.pop %v1855
      %v1857 = vmul.f32 %v1782, 1.442695
      %v1858 = vpow.pop %v1857
      %v1859 = vmul.f32 %v1783, 1.442695
      %v1860 = vpow.pop %v1859
      %v1861 = vmul.f32 %v1784, 1.442695
      %v1862 = vpow.pop %v1861
      %v1863 = vmul.f32 %v1785, 1.442695
      %v1864 = vpow.pop %v1863
      %v1865 = vmul.f32 %v1786, 1.442695
      %v1866 = vpow.pop %v1865
      %v1867 = vmul.f32 %v1787, 1.442695
      %v1868 = vpow.pop %v1867
      %v1869 = vmul.f32 %v1788, 1.442695
      %v1870 = vpow.pop %v1869
      %v1871 = vmul.f32 %v1789, 1.442695
      %v1872 = vpow.pop %v1871
      %v1873 = vmul.f32 %v1790, 1.442695
      %v1874 = vpow.pop %v1873
      %v1875 = vmul.f32 %v1791, 1.442695
      %v1876 = vpow.pop %v1875
      %v1877 = vmul.f32 %v1792, 1.442695
      %v1878 = vpow.pop %v1877
      %v1879 = vmul.f32 %v1793, 1.442695
      %v1880 = vpow.pop %v1879
      %v1881 = vmul.f32 %v1794, 1.442695
      %v1882 = vpow.pop %v1881
      %v1883 = vmul.f32 %v1795, 1.442695
      %v1884 = vpow.pop %v1883
      %v1885 = vmul.f32 %v1796, 1.442695
      %v1886 = vpow.pop %v1885
      %v1887 = vmul.f32 %v1797, 1.442695
      %v1888 = vpow.pop %v1887
      %v1889 = vmul.f32 %v1798, 1.442695
      %v1890 = vpow.pop %v1889
      %v1891 = vmul.f32 %v1799, 1.442695
      %v1892 = vpow.pop %v1891
      %v1893 = vmul.f32 %v1800, 1.442695
      %v1894 = vpow.pop %v1893
      %v1895 = vmul.f32 %v1801, 1.442695
      %v1896 = vpow.pop %v1895
      %v1897 = vmul.f32 %v1802, 1.442695
      %v1898 = vpow.pop %v1897
      %v1899 = vmul.f32 %v1803, 1.442695
      %v1900 = vpow.pop %v1899
      %v1901 = vmul.f32 %v1804, 1.442695
      %v1902 = vpow.pop %v1901
      %v1903 = vmul.f32 %v1805, 1.442695
      %v1904 = vpow.pop %v1903
      %v1905 = vmul.f32 %v1806, 1.442695
      %v1906 = vpow.pop %v1905
      %v1907 = vmul.f32 %v1807, 1.442695
      %v1908 = vpow.pop %v1907
      %v1909 = vmul.f32 %v1808, 1.442695
      %v1910 = vpow.pop %v1909
      %v1911 = vmul.f32 %v1809, 1.442695
      %v1912 = vpow.pop %v1911
      %v1913 = vmul.f32 %v1810, 1.442695
      %v1914 = vpow.pop %v1913
      %v1915 = vmul.f32 %v1811, 1.442695
      %v1916 = vpow.pop %v1915
      %v1917 = vmul.f32 %v1812, 1.442695
      %v1918 = vpow.pop %v1917
      %v1919 = vmul.f32 %v1813, 1.442695
      %v1920 = vpow.pop %v1919
      %v1921 = vmul.f32 %v1814, 1.442695
      %v1922 = vpow.pop %v1921
      %v1923 = vmul.f32 %v1815, 1.442695
      %v1924 = vpow.pop %v1923
      %v1925 = vmul.f32 %v1816, 1.442695
      %v1926 = vpow.pop %v1925
      %v1927 = vmul.f32 %v1817, 1.442695
      %v1928 = vpow.pop %v1927
      %v1929 = vmul.f32 %v1818, 1.442695
      %v1930 = vpow.pop %v1929
      %v1931 = vmul.f32 %v1819, 1.442695
      %v1932 = vpow.pop %v1931
      %v1933 = vmul.f32 %v1820, 1.442695
      %v1934 = vpow.pop %v1933
      %v1935 = vmul.f32 %v1821, 1.442695
      %v1936 = vpow.pop %v1935
      %v1937 = vmul.f32 %v1822, 1.442695
      %v1938 = vpow.pop %v1937
      %v1939 = vmul.f32 %v1823, 1.442695
      %v1940 = vpow.pop %v1939
      %v1941 = vmul.f32 %v1824, 1.442695
      %v1942 = vpow.pop %v1941
      %v1943 = vmul.f32 %v1825, 1.442695
      %v1944 = vpow.pop %v1943
      %v1945 = vmul.f32 %v1826, 1.442695
      %v1946 = vpow.pop %v1945
      %v1947 = vmul.f32 %v1827, 1.442695
      %v1948 = vpow.pop %v1947
      %v1949 = vmul.f32 %v1828, 1.442695
      %v1950 = vpow.pop %v1949
      %v1951 = vmul.f32 %v1829, 1.442695
      %v1952 = vpow.pop %v1951
      %v1953 = vmul.f32 %v1830, 1.442695
      %v1954 = vpow.pop %v1953
      %v1955 = vmul.f32 %v1831, 1.442695
      %v1956 = vpow.pop %v1955
      %v1957 = vmul.f32 %v1832, 1.442695
      %v1958 = vpow.pop %v1957
      %v1959 = vmul.f32 %v1833, 1.442695
      %v1960 = vpow.pop %v1959
      %v1961 = vmul.f32 %v1834, 1.442695
      %v1962 = vpow.pop %v1961
      %v1963 = vld [vmem:[#allocation4] sm:$0xff]
      %v1964 = vld [vmem:[#allocation4 + $0x8] sm:$0xff]
      %v1965 = vld [vmem:[#allocation4 + $0x10] sm:$0xff]
      %v1966 = vld [vmem:[#allocation4 + $0x18] sm:$0xff]
      %v1967 = vld [vmem:[#allocation4 + $0x20] sm:$0xff]
      %v1968 = vld [vmem:[#allocation4 + $0x28] sm:$0xff]
      %v1969 = vld [vmem:[#allocation4 + $0x30] sm:$0xff]
      %v1970 = vld [vmem:[#allocation4 + $0x38] sm:$0xff]
      %v1971 = vld [vmem:[#allocation4 + $0x40] sm:$0xff]
      %v1972 = vld [vmem:[#allocation4 + $0x48] sm:$0xff]
      %v1973 = vld [vmem:[#allocation4 + $0x50] sm:$0xff]
      %v1974 = vld [vmem:[#allocation4 + $0x58] sm:$0xff]
      %v1975 = vld [vmem:[#allocation4 + $0x60] sm:$0xff]
      %v1976 = vld [vmem:[#allocation4 + $0x68] sm:$0xff]
      %v1977 = vld [vmem:[#allocation4 + $0x70] sm:$0xff]
      %v1978 = vld [vmem:[#allocation4 + $0x78] sm:$0xff]
      %v1979 = vld [vmem:[#allocation4 + $0x80] sm:$0xff]
      %v1980 = vld [vmem:[#allocation4 + $0x88] sm:$0xff]
      %v1981 = vld [vmem:[#allocation4 + $0x90] sm:$0xff]
      %v1982 = vld [vmem:[#allocation4 + $0x98] sm:$0xff]
      %v1983 = vld [vmem:[#allocation4 + $0xa0] sm:$0xff]
      %v1984 = vld [vmem:[#allocation4 + $0xa8] sm:$0xff]
      %v1985 = vld [vmem:[#allocation4 + $0xb0] sm:$0xff]
      %v1986 = vld [vmem:[#allocation4 + $0xb8] sm:$0xff]
      %v1987 = vld [vmem:[#allocation4 + $0xc0] sm:$0xff]
      %v1988 = vld [vmem:[#allocation4 + $0xc8] sm:$0xff]
      %v1989 = vld [vmem:[#allocation4 + $0xd0] sm:$0xff]
      %v1990 = vld [vmem:[#allocation4 + $0xd8] sm:$0xff]
      %v1991 = vld [vmem:[#allocation4 + $0xe0] sm:$0xff]
      %v1992 = vld [vmem:[#allocation4 + $0xe8] sm:$0xff]
      %v1993 = vld [vmem:[#allocation4 + $0xf0] sm:$0xff]
      %v1994 = vld [vmem:[#allocation4 + $0xf8] sm:$0xff]
      %v1995 = vmul.f32 %v1548, %v1963
      %v1996 = vmul.f32 %v1550, %v1964
      %v1997 = vmul.f32 %v1552, %v1965
      %v1998 = vmul.f32 %v1554, %v1966
      %v1999 = vmul.f32 %v1556, %v1967
      %v2000 = vmul.f32 %v1558, %v1968
      %v2001 = vmul.f32 %v1560, %v1969
      %v2002 = vmul.f32 %v1562, %v1970
      %v2003 = vmul.f32 %v1564, %v1971
      %v2004 = vmul.f32 %v1566, %v1972
      %v2005 = vmul.f32 %v1568, %v1973
      %v2006 = vmul.f32 %v1570, %v1974
      %v2007 = vmul.f32 %v1572, %v1975
      %v2008 = vmul.f32 %v1574, %v1976
      %v2009 = vmul.f32 %v1576, %v1977
      %v2010 = vmul.f32 %v1578, %v1978
      %v2011 = vmul.f32 %v1580, %v1979
      %v2012 = vmul.f32 %v1582, %v1980
      %v2013 = vmul.f32 %v1584, %v1981
      %v2014 = vmul.f32 %v1586, %v1982
      %v2015 = vmul.f32 %v1588, %v1983
      %v2016 = vmul.f32 %v1590, %v1984
      %v2017 = vmul.f32 %v1592, %v1985
      %v2018 = vmul.f32 %v1594, %v1986
      %v2019 = vmul.f32 %v1596, %v1987
      %v2020 = vmul.f32 %v1598, %v1988
      %v2021 = vmul.f32 %v1600, %v1989
      %v2022 = vmul.f32 %v1602, %v1990
      %v2023 = vmul.f32 %v1604, %v1991
      %v2024 = vmul.f32 %v1606, %v1992
      %v2025 = vmul.f32 %v1608, %v1993
      %v2026 = vmul.f32 %v1610, %v1994
      %v2027 = vadd.f32 %v1836, %v1838
      %2028 = vadd.xlane.f32.xlu0 %v2027
      %v2029 = vpop.xlane.xlu0 %2028
      %v2030 = vadd.f32 %v1840, %v1842
      %2031 = vadd.xlane.f32.xlu0 %v2030
      %v2032 = vpop.xlane.xlu0 %2031
      %v2033 = vadd.f32 %v1844, %v1846
      %2034 = vadd.xlane.f32.xlu0 %v2033
      %v2035 = vpop.xlane.xlu0 %2034
      %v2036 = vadd.f32 %v1848, %v1850
      %2037 = vadd.xlane.f32.xlu0 %v2036
      %v2038 = vpop.xlane.xlu0 %2037
      %v2039 = vadd.f32 %v1852, %v1854
      %2040 = vadd.xlane.f32.xlu0 %v2039
      %v2041 = vpop.xlane.xlu0 %2040
      %v2042 = vadd.f32 %v1856, %v1858
      %2043 = vadd.xlane.f32.xlu0 %v2042
      %v2044 = vpop.xlane.xlu0 %2043
      %v2045 = vadd.f32 %v1860, %v1862
      %2046 = vadd.xlane.f32.xlu0 %v2045
      %v2047 = vpop.xlane.xlu0 %2046
      %v2048 = vadd.f32 %v1864, %v1866
      %2049 = vadd.xlane.f32.xlu0 %v2048
      %v2050 = vpop.xlane.xlu0 %2049
      %v2051 = vadd.f32 %v1868, %v1870
      %2052 = vadd.xlane.f32.xlu0 %v2051
      %v2053 = vpop.xlane.xlu0 %2052
      %v2054 = vadd.f32 %v1872, %v1874
      %2055 = vadd.xlane.f32.xlu0 %v2054
      %v2056 = vpop.xlane.xlu0 %2055
      %v2057 = vadd.f32 %v1876, %v1878
      %2058 = vadd.xlane.f32.xlu0 %v2057
      %v2059 = vpop.xlane.xlu0 %2058
      %v2060 = vadd.f32 %v1880, %v1882
      %2061 = vadd.xlane.f32.xlu0 %v2060
      %v2062 = vpop.xlane.xlu0 %2061
      %v2063 = vadd.f32 %v1884, %v1886
      %2064 = vadd.xlane.f32.xlu0 %v2063
      %v2065 = vpop.xlane.xlu0 %2064
      %v2066 = vadd.f32 %v1888, %v1890
      %2067 = vadd.xlane.f32.xlu0 %v2066
      %v2068 = vpop.xlane.xlu0 %2067
      %v2069 = vadd.f32 %v1892, %v1894
      %2070 = vadd.xlane.f32.xlu0 %v2069
      %v2071 = vpop.xlane.xlu0 %2070
      %v2072 = vadd.f32 %v1896, %v1898
      %2073 = vadd.xlane.f32.xlu0 %v2072
      %v2074 = vpop.xlane.xlu0 %2073
      %v2075 = vadd.f32 %v1900, %v1902
      %2076 = vadd.xlane.f32.xlu0 %v2075
      %v2077 = vpop.xlane.xlu0 %2076
      %v2078 = vadd.f32 %v1904, %v1906
      %2079 = vadd.xlane.f32.xlu0 %v2078
      %v2080 = vpop.xlane.xlu0 %2079
      %v2081 = vadd.f32 %v1908, %v1910
      %2082 = vadd.xlane.f32.xlu0 %v2081
      %v2083 = vpop.xlane.xlu0 %2082
      %v2084 = vadd.f32 %v1912, %v1914
      %2085 = vadd.xlane.f32.xlu0 %v2084
      %v2086 = vpop.xlane.xlu0 %2085
      %v2087 = vadd.f32 %v1916, %v1918
      %2088 = vadd.xlane.f32.xlu0 %v2087
      %v2089 = vpop.xlane.xlu0 %2088
      %v2090 = vadd.f32 %v1920, %v1922
      %2091 = vadd.xlane.f32.xlu0 %v2090
      %v2092 = vpop.xlane.xlu0 %2091
      %v2093 = vadd.f32 %v1924, %v1926
      %2094 = vadd.xlane.f32.xlu0 %v2093
      %v2095 = vpop.xlane.xlu0 %2094
      %v2096 = vadd.f32 %v1928, %v1930
      %2097 = vadd.xlane.f32.xlu0 %v2096
      %v2098 = vpop.xlane.xlu0 %2097
      %v2099 = vadd.f32 %v1932, %v1934
      %2100 = vadd.xlane.f32.xlu0 %v2099
      %v2101 = vpop.xlane.xlu0 %2100
      %v2102 = vadd.f32 %v1936, %v1938
      %2103 = vadd.xlane.f32.xlu0 %v2102
      %v2104 = vpop.xlane.xlu0 %2103
      %v2105 = vadd.f32 %v1940, %v1942
      %2106 = vadd.xlane.f32.xlu0 %v2105
      %v2107 = vpop.xlane.xlu0 %2106
      %v2108 = vadd.f32 %v1944, %v1946
      %2109 = vadd.xlane.f32.xlu0 %v2108
      %v2110 = vpop.xlane.xlu0 %2109
      %v2111 = vadd.f32 %v1948, %v1950
      %2112 = vadd.xlane.f32.xlu0 %v2111
      %v2113 = vpop.xlane.xlu0 %2112
      %v2114 = vadd.f32 %v1952, %v1954
      %2115 = vadd.xlane.f32.xlu0 %v2114
      %v2116 = vpop.xlane.xlu0 %2115
      %v2117 = vadd.f32 %v1956, %v1958
      %2118 = vadd.xlane.f32.xlu0 %v2117
      %v2119 = vpop.xlane.xlu0 %2118
      %v2120 = vadd.f32 %v1960, %v1962
      %2121 = vadd.xlane.f32.xlu0 %v2120
      %v2122 = vpop.xlane.xlu0 %2121
      %v2123 = vadd.f32 %v1995, %v2029
      %v2124 = vadd.f32 %v1996, %v2032
      %v2125 = vadd.f32 %v1997, %v2035
      %v2126 = vadd.f32 %v1998, %v2038
      %v2127 = vadd.f32 %v1999, %v2041
      %v2128 = vadd.f32 %v2000, %v2044
      %v2129 = vadd.f32 %v2001, %v2047
      %v2130 = vadd.f32 %v2002, %v2050
      %v2131 = vadd.f32 %v2003, %v2053
      %v2132 = vadd.f32 %v2004, %v2056
      %v2133 = vadd.f32 %v2005, %v2059
      %v2134 = vadd.f32 %v2006, %v2062
      %v2135 = vadd.f32 %v2007, %v2065
      %v2136 = vadd.f32 %v2008, %v2068
      %v2137 = vadd.f32 %v2009, %v2071
      %v2138 = vadd.f32 %v2010, %v2074
      %v2139 = vadd.f32 %v2011, %v2077
      %v2140 = vadd.f32 %v2012, %v2080
      %v2141 = vadd.f32 %v2013, %v2083
      %v2142 = vadd.f32 %v2014, %v2086
      %v2143 = vadd.f32 %v2015, %v2089
      %v2144 = vadd.f32 %v2016, %v2092
      %v2145 = vadd.f32 %v2017, %v2095
      %v2146 = vadd.f32 %v2018, %v2098
      %v2147 = vadd.f32 %v2019, %v2101
      %v2148 = vadd.f32 %v2020, %v2104
      %v2149 = vadd.f32 %v2021, %v2107
      %v2150 = vadd.f32 %v2022, %v2110
      %v2151 = vadd.f32 %v2023, %v2113
      %v2152 = vadd.f32 %v2024, %v2116
      %v2153 = vadd.f32 %v2025, %v2119
      %v2154 = vadd.f32 %v2026, %v2122
      %vm2155 = vcmask 7168
      %2156 = vst.msk [vmem:[#allocation4] sm:$0xff] %vm2155, %v2123
      %2157 = vst.msk [vmem:[#allocation4 + $0x8] sm:$0xff] %vm2155, %v2124
      %2158 = vst.msk [vmem:[#allocation4 + $0x10] sm:$0xff] %vm2155, %v2125
      %2159 = vst.msk [vmem:[#allocation4 + $0x18] sm:$0xff] %vm2155, %v2126
      %2160 = vst.msk [vmem:[#allocation4 + $0x20] sm:$0xff] %vm2155, %v2127
      %2161 = vst.msk [vmem:[#allocation4 + $0x28] sm:$0xff] %vm2155, %v2128
      %2162 = vst.msk [vmem:[#allocation4 + $0x30] sm:$0xff] %vm2155, %v2129
      %2163 = vst.msk [vmem:[#allocation4 + $0x38] sm:$0xff] %vm2155, %v2130
      %2164 = vst.msk [vmem:[#allocation4 + $0x40] sm:$0xff] %vm2155, %v2131
      %2165 = vst.msk [vmem:[#allocation4 + $0x48] sm:$0xff] %vm2155, %v2132
      %2166 = vst.msk [vmem:[#allocation4 + $0x50] sm:$0xff] %vm2155, %v2133
      %2167 = vst.msk [vmem:[#allocation4 + $0x58] sm:$0xff] %vm2155, %v2134
      %2168 = vst.msk [vmem:[#allocation4 + $0x60] sm:$0xff] %vm2155, %v2135
      %2169 = vst.msk [vmem:[#allocation4 + $0x68] sm:$0xff] %vm2155, %v2136
      %2170 = vst.msk [vmem:[#allocation4 + $0x70] sm:$0xff] %vm2155, %v2137
      %2171 = vst.msk [vmem:[#allocation4 + $0x78] sm:$0xff] %vm2155, %v2138
      %2172 = vst.msk [vmem:[#allocation4 + $0x80] sm:$0xff] %vm2155, %v2139
      %2173 = vst.msk [vmem:[#allocation4 + $0x88] sm:$0xff] %vm2155, %v2140
      %2174 = vst.msk [vmem:[#allocation4 + $0x90] sm:$0xff] %vm2155, %v2141
      %2175 = vst.msk [vmem:[#allocation4 + $0x98] sm:$0xff] %vm2155, %v2142
      %2176 = vst.msk [vmem:[#allocation4 + $0xa0] sm:$0xff] %vm2155, %v2143
      %2177 = vst.msk [vmem:[#allocation4 + $0xa8] sm:$0xff] %vm2155, %v2144
      %2178 = vst.msk [vmem:[#allocation4 + $0xb0] sm:$0xff] %vm2155, %v2145
      %2179 = vst.msk [vmem:[#allocation4 + $0xb8] sm:$0xff] %vm2155, %v2146
      %2180 = vst.msk [vmem:[#allocation4 + $0xc0] sm:$0xff] %vm2155, %v2147
      %2181 = vst.msk [vmem:[#allocation4 + $0xc8] sm:$0xff] %vm2155, %v2148
      %2182 = vst.msk [vmem:[#allocation4 + $0xd0] sm:$0xff] %vm2155, %v2149
      %2183 = vst.msk [vmem:[#allocation4 + $0xd8] sm:$0xff] %vm2155, %v2150
      %2184 = vst.msk [vmem:[#allocation4 + $0xe0] sm:$0xff] %vm2155, %v2151
      %2185 = vst.msk [vmem:[#allocation4 + $0xe8] sm:$0xff] %vm2155, %v2152
      %2186 = vst.msk [vmem:[#allocation4 + $0xf0] sm:$0xff] %vm2155, %v2153
      %2187 = vst.msk [vmem:[#allocation4 + $0xf8] sm:$0xff] %vm2155, %v2154
      %v2188 = vld [vmem:[#allocation5] sm:$0xff]
      %v2189 = vld [vmem:[#allocation5 + $0x8] sm:$0xff]
      %v2190 = vld [vmem:[#allocation5 + $0x10] sm:$0xff]
      %v2191 = vld [vmem:[#allocation5 + $0x18] sm:$0xff]
      %v2192 = vld [vmem:[#allocation5 + $0x20] sm:$0xff]
      %v2193 = vld [vmem:[#allocation5 + $0x28] sm:$0xff]
      %v2194 = vld [vmem:[#allocation5 + $0x30] sm:$0xff]
      %v2195 = vld [vmem:[#allocation5 + $0x38] sm:$0xff]
      %v2196 = vld [vmem:[#allocation5 + $0x40] sm:$0xff]
      %v2197 = vld [vmem:[#allocation5 + $0x48] sm:$0xff]
      %v2198 = vld [vmem:[#allocation5 + $0x50] sm:$0xff]
      %v2199 = vld [vmem:[#allocation5 + $0x58] sm:$0xff]
      %v2200 = vld [vmem:[#allocation5 + $0x60] sm:$0xff]
      %v2201 = vld [vmem:[#allocation5 + $0x68] sm:$0xff]
      %v2202 = vld [vmem:[#allocation5 + $0x70] sm:$0xff]
      %v2203 = vld [vmem:[#allocation5 + $0x78] sm:$0xff]
      %v2204 = vld [vmem:[#allocation5 + $0x80] sm:$0xff]
      %v2205 = vld [vmem:[#allocation5 + $0x88] sm:$0xff]
      %v2206 = vld [vmem:[#allocation5 + $0x90] sm:$0xff]
      %v2207 = vld [vmem:[#allocation5 + $0x98] sm:$0xff]
      %v2208 = vld [vmem:[#allocation5 + $0xa0] sm:$0xff]
      %v2209 = vld [vmem:[#allocation5 + $0xa8] sm:$0xff]
      %v2210 = vld [vmem:[#allocation5 + $0xb0] sm:$0xff]
      %v2211 = vld [vmem:[#allocation5 + $0xb8] sm:$0xff]
      %v2212 = vld [vmem:[#allocation5 + $0xc0] sm:$0xff]
      %v2213 = vld [vmem:[#allocation5 + $0xc8] sm:$0xff]
      %v2214 = vld [vmem:[#allocation5 + $0xd0] sm:$0xff]
      %v2215 = vld [vmem:[#allocation5 + $0xd8] sm:$0xff]
      %v2216 = vld [vmem:[#allocation5 + $0xe0] sm:$0xff]
      %v2217 = vld [vmem:[#allocation5 + $0xe8] sm:$0xff]
      %v2218 = vld [vmem:[#allocation5 + $0xf0] sm:$0xff]
      %v2219 = vld [vmem:[#allocation5 + $0xf8] sm:$0xff]
      %2221 = vset.pattern.permute.xlu0 0
      %2222 = vperm.xlu0 %2221, %v1548
      %v2223 = vpop.permute.xlu0 %2222
      %2226 = vset.pattern.permute.xlu0 0
      %2227 = vperm.xlu0 %2226, %v1550
      %v2228 = vpop.permute.xlu0 %2227
      %2231 = vset.pattern.permute.xlu0 0
      %2232 = vperm.xlu0 %2231, %v1552
      %v2233 = vpop.permute.xlu0 %2232
      %2236 = vset.pattern.permute.xlu0 0
      %2237 = vperm.xlu0 %2236, %v1554
      %v2238 = vpop.permute.xlu0 %2237
      %2241 = vset.pattern.permute.xlu0 0
      %2242 = vperm.xlu0 %2241, %v1556
      %v2243 = vpop.permute.xlu0 %2242
      %2246 = vset.pattern.permute.xlu0 0
      %2247 = vperm.xlu0 %2246, %v1558
      %v2248 = vpop.permute.xlu0 %2247
      %2251 = vset.pattern.permute.xlu0 0
      %2252 = vperm.xlu0 %2251, %v1560
      %v2253 = vpop.permute.xlu0 %2252
      %2256 = vset.pattern.permute.xlu0 0
      %2257 = vperm.xlu0 %2256, %v1562
      %v2258 = vpop.permute.xlu0 %2257
      %2261 = vset.pattern.permute.xlu0 0
      %2262 = vperm.xlu0 %2261, %v1564
      %v2263 = vpop.permute.xlu0 %2262
      %2266 = vset.pattern.permute.xlu0 0
      %2267 = vperm.xlu0 %2266, %v1566
      %v2268 = vpop.permute.xlu0 %2267
      %2271 = vset.pattern.permute.xlu0 0
      %2272 = vperm.xlu0 %2271, %v1568
      %v2273 = vpop.permute.xlu0 %2272
      %2276 = vset.pattern.permute.xlu0 0
      %2277 = vperm.xlu0 %2276, %v1570
      %v2278 = vpop.permute.xlu0 %2277
      %2281 = vset.pattern.permute.xlu0 0
      %2282 = vperm.xlu0 %2281, %v1572
      %v2283 = vpop.permute.xlu0 %2282
      %2286 = vset.pattern.permute.xlu0 0
      %2287 = vperm.xlu0 %2286, %v1574
      %v2288 = vpop.permute.xlu0 %2287
      %2291 = vset.pattern.permute.xlu0 0
      %2292 = vperm.xlu0 %2291, %v1576
      %v2293 = vpop.permute.xlu0 %2292
      %2296 = vset.pattern.permute.xlu0 0
      %2297 = vperm.xlu0 %2296, %v1578
      %v2298 = vpop.permute.xlu0 %2297
      %2301 = vset.pattern.permute.xlu0 0
      %2302 = vperm.xlu0 %2301, %v1580
      %v2303 = vpop.permute.xlu0 %2302
      %2306 = vset.pattern.permute.xlu0 0
      %2307 = vperm.xlu0 %2306, %v1582
      %v2308 = vpop.permute.xlu0 %2307
      %2311 = vset.pattern.permute.xlu0 0
      %2312 = vperm.xlu0 %2311, %v1584
      %v2313 = vpop.permute.xlu0 %2312
      %2316 = vset.pattern.permute.xlu0 0
      %2317 = vperm.xlu0 %2316, %v1586
      %v2318 = vpop.permute.xlu0 %2317
      %2321 = vset.pattern.permute.xlu0 0
      %2322 = vperm.xlu0 %2321, %v1588
      %v2323 = vpop.permute.xlu0 %2322
      %2326 = vset.pattern.permute.xlu0 0
      %2327 = vperm.xlu0 %2326, %v1590
      %v2328 = vpop.permute.xlu0 %2327
      %2331 = vset.pattern.permute.xlu0 0
      %2332 = vperm.xlu0 %2331, %v1592
      %v2333 = vpop.permute.xlu0 %2332
      %2336 = vset.pattern.permute.xlu0 0
      %2337 = vperm.xlu0 %2336, %v1594
      %v2338 = vpop.permute.xlu0 %2337
      %2341 = vset.pattern.permute.xlu0 0
      %2342 = vperm.xlu0 %2341, %v1596
      %v2343 = vpop.permute.xlu0 %2342
      %2346 = vset.pattern.permute.xlu0 0
      %2347 = vperm.xlu0 %2346, %v1598
      %v2348 = vpop.permute.xlu0 %2347
      %2351 = vset.pattern.permute.xlu0 0
      %2352 = vperm.xlu0 %2351, %v1600
      %v2353 = vpop.permute.xlu0 %2352
      %2356 = vset.pattern.permute.xlu0 0
      %2357 = vperm.xlu0 %2356, %v1602
      %v2358 = vpop.permute.xlu0 %2357
      %2361 = vset.pattern.permute.xlu0 0
      %2362 = vperm.xlu0 %2361, %v1604
      %v2363 = vpop.permute.xlu0 %2362
      %2366 = vset.pattern.permute.xlu0 0
      %2367 = vperm.xlu0 %2366, %v1606
      %v2368 = vpop.permute.xlu0 %2367
      %2371 = vset.pattern.permute.xlu0 0
      %2372 = vperm.xlu0 %2371, %v1608
      %v2373 = vpop.permute.xlu0 %2372
      %2376 = vset.pattern.permute.xlu0 0
      %2377 = vperm.xlu0 %2376, %v1610
      %v2378 = vpop.permute.xlu0 %2377
      %v2380 = vmul.f32 %v2223, %v2188
      %v2381 = vmul.f32 %v2228, %v2189
      %v2382 = vmul.f32 %v2233, %v2190
      %v2383 = vmul.f32 %v2238, %v2191
      %v2384 = vmul.f32 %v2243, %v2192
      %v2385 = vmul.f32 %v2248, %v2193
      %v2386 = vmul.f32 %v2253, %v2194
      %v2387 = vmul.f32 %v2258, %v2195
      %v2388 = vmul.f32 %v2263, %v2196
      %v2389 = vmul.f32 %v2268, %v2197
      %v2390 = vmul.f32 %v2273, %v2198
      %v2391 = vmul.f32 %v2278, %v2199
      %v2392 = vmul.f32 %v2283, %v2200
      %v2393 = vmul.f32 %v2288, %v2201
      %v2394 = vmul.f32 %v2293, %v2202
      %v2395 = vmul.f32 %v2298, %v2203
      %v2396 = vmul.f32 %v2303, %v2204
      %v2397 = vmul.f32 %v2308, %v2205
      %v2398 = vmul.f32 %v2313, %v2206
      %v2399 = vmul.f32 %v2318, %v2207
      %v2400 = vmul.f32 %v2323, %v2208
      %v2401 = vmul.f32 %v2328, %v2209
      %v2402 = vmul.f32 %v2333, %v2210
      %v2403 = vmul.f32 %v2338, %v2211
      %v2404 = vmul.f32 %v2343, %v2212
      %v2405 = vmul.f32 %v2348, %v2213
      %v2406 = vmul.f32 %v2353, %v2214
      %v2407 = vmul.f32 %v2358, %v2215
      %v2408 = vmul.f32 %v2363, %v2216
      %v2409 = vmul.f32 %v2368, %v2217
      %v2410 = vmul.f32 %v2373, %v2218
      %v2411 = vmul.f32 %v2378, %v2219
      %v2412 = vpack.c.bf16 %v1840, %v1836
      %v2413 = vpack.c.bf16 %v1842, %v1838
      %v2414 = vpack.c.bf16 %v1848, %v1844
      %v2415 = vpack.c.bf16 %v1850, %v1846
      %v2416 = vpack.c.bf16 %v1856, %v1852
      %v2417 = vpack.c.bf16 %v1858, %v1854
      %v2418 = vpack.c.bf16 %v1864, %v1860
      %v2419 = vpack.c.bf16 %v1866, %v1862
      %v2420 = vpack.c.bf16 %v1872, %v1868
      %v2421 = vpack.c.bf16 %v1874, %v1870
      %v2422 = vpack.c.bf16 %v1880, %v1876
      %v2423 = vpack.c.bf16 %v1882, %v1878
      %v2424 = vpack.c.bf16 %v1888, %v1884
      %v2425 = vpack.c.bf16 %v1890, %v1886
      %v2426 = vpack.c.bf16 %v1896, %v1892
      %v2427 = vpack.c.bf16 %v1898, %v1894
      %v2428 = vpack.c.bf16 %v1904, %v1900
      %v2429 = vpack.c.bf16 %v1906, %v1902
      %v2430 = vpack.c.bf16 %v1912, %v1908
      %v2431 = vpack.c.bf16 %v1914, %v1910
      %v2432 = vpack.c.bf16 %v1920, %v1916
      %v2433 = vpack.c.bf16 %v1922, %v1918
      %v2434 = vpack.c.bf16 %v1928, %v1924
      %v2435 = vpack.c.bf16 %v1930, %v1926
      %v2436 = vpack.c.bf16 %v1936, %v1932
      %v2437 = vpack.c.bf16 %v1938, %v1934
      %v2438 = vpack.c.bf16 %v1944, %v1940
      %v2439 = vpack.c.bf16 %v1946, %v1942
      %v2440 = vpack.c.bf16 %v1952, %v1948
      %v2441 = vpack.c.bf16 %v1954, %v1950
      %v2442 = vpack.c.bf16 %v1960, %v1956
      %v2443 = vpack.c.bf16 %v1962, %v1958
      %v2444 = vld [vmem:[%s467] sm:$0xf]
      %v2445 = vld [vmem:[%s467 + $0x4] sm:$0xf]
      %v2446 = vld [vmem:[%s467 + $0x8] sm:$0xf]
      %v2447 = vld [vmem:[%s467 + $0xc] sm:$0xf]
      %v2448 = vld [vmem:[%s467 + $0x10] sm:$0xf]
      %v2449 = vld [vmem:[%s467 + $0x14] sm:$0xf]
      %v2450 = vld [vmem:[%s467 + $0x18] sm:$0xf]
      %v2451 = vld [vmem:[%s467 + $0x1c] sm:$0xf]
      %v2452 = vld [vmem:[%s467 + $0x20] sm:$0xf]
      %v2453 = vld [vmem:[%s467 + $0x24] sm:$0xf]
      %v2454 = vld [vmem:[%s467 + $0x28] sm:$0xf]
      %v2455 = vld [vmem:[%s467 + $0x2c] sm:$0xf]
      %v2456 = vld [vmem:[%s467 + $0x30] sm:$0xf]
      %v2457 = vld [vmem:[%s467 + $0x34] sm:$0xf]
      %v2458 = vld [vmem:[%s467 + $0x38] sm:$0xf]
      %v2459 = vld [vmem:[%s467 + $0x3c] sm:$0xf]
      %v2460 = vld [vmem:[%s467 + $0x40] sm:$0xf]
      %v2461 = vld [vmem:[%s467 + $0x44] sm:$0xf]
      %v2462 = vld [vmem:[%s467 + $0x48] sm:$0xf]
      %v2463 = vld [vmem:[%s467 + $0x4c] sm:$0xf]
      %v2464 = vld [vmem:[%s467 + $0x50] sm:$0xf]
      %v2465 = vld [vmem:[%s467 + $0x54] sm:$0xf]
      %v2466 = vld [vmem:[%s467 + $0x58] sm:$0xf]
      %v2467 = vld [vmem:[%s467 + $0x5c] sm:$0xf]
      %v2468 = vld [vmem:[%s467 + $0x60] sm:$0xf]
      %v2469 = vld [vmem:[%s467 + $0x64] sm:$0xf]
      %v2470 = vld [vmem:[%s467 + $0x68] sm:$0xf]
      %v2471 = vld [vmem:[%s467 + $0x6c] sm:$0xf]
      %v2472 = vld [vmem:[%s467 + $0x70] sm:$0xf]
      %v2473 = vld [vmem:[%s467 + $0x74] sm:$0xf]
      %v2474 = vld [vmem:[%s467 + $0x78] sm:$0xf]
      %v2475 = vld [vmem:[%s467 + $0x7c] sm:$0xf]
      %v2508 = vunpack.c.l.b16 %v2444
      %v2509 = vunpack.c.l.b16 %v2445
      %v2510 = vunpack.c.l.b16 %v2446
      %v2511 = vunpack.c.l.b16 %v2447
      %v2512 = vunpack.c.l.b16 %v2448
      %v2513 = vunpack.c.l.b16 %v2449
      %v2514 = vunpack.c.l.b16 %v2450
      %v2515 = vunpack.c.l.b16 %v2451
      %v2516 = vunpack.c.l.b16 %v2452
      %v2517 = vunpack.c.l.b16 %v2453
      %v2518 = vunpack.c.l.b16 %v2454
      %v2519 = vunpack.c.l.b16 %v2455
      %v2520 = vunpack.c.l.b16 %v2456
      %v2521 = vunpack.c.l.b16 %v2457
      %v2522 = vunpack.c.l.b16 %v2458
      %v2523 = vunpack.c.l.b16 %v2459
      %v2524 = vunpack.c.l.b16 %v2460
      %v2525 = vunpack.c.l.b16 %v2461
      %v2526 = vunpack.c.l.b16 %v2462
      %v2527 = vunpack.c.l.b16 %v2463
      %v2528 = vunpack.c.l.b16 %v2464
      %v2529 = vunpack.c.l.b16 %v2465
      %v2530 = vunpack.c.l.b16 %v2466
      %v2531 = vunpack.c.l.b16 %v2467
      %v2532 = vunpack.c.l.b16 %v2468
      %v2533 = vunpack.c.l.b16 %v2469
      %v2534 = vunpack.c.l.b16 %v2470
      %v2535 = vunpack.c.l.b16 %v2471
      %v2536 = vunpack.c.l.b16 %v2472
      %v2537 = vunpack.c.l.b16 %v2473
      %v2538 = vunpack.c.l.b16 %v2474
      %v2539 = vunpack.c.l.b16 %v2475
      %v2540 = vpack.c.b16 %v2509, %v2508
      %v2541 = vpack.c.b16 %v2511, %v2510
      %v2542 = vpack.c.b16 %v2513, %v2512
      %v2543 = vpack.c.b16 %v2515, %v2514
      %v2544 = vpack.c.b16 %v2517, %v2516
      %v2545 = vpack.c.b16 %v2519, %v2518
      %v2546 = vpack.c.b16 %v2521, %v2520
      %v2547 = vpack.c.b16 %v2523, %v2522
      %v2548 = vpack.c.b16 %v2525, %v2524
      %v2549 = vpack.c.b16 %v2527, %v2526
      %v2550 = vpack.c.b16 %v2529, %v2528
      %v2551 = vpack.c.b16 %v2531, %v2530
      %v2552 = vpack.c.b16 %v2533, %v2532
      %v2553 = vpack.c.b16 %v2535, %v2534
      %v2554 = vpack.c.b16 %v2537, %v2536
      %v2555 = vpack.c.b16 %v2539, %v2538
      %2572 = vmatpush.bf16.msra.mxu0 %v2547
      %2573 = vmatpush.bf16.msra.mxu0 %v2546
      %2574 = vmatpush.bf16.msra.mxu0 %v2545
      %2575 = vmatpush.bf16.msra.mxu0 %v2544
      %2576 = vmatpush.bf16.msra.mxu0 %v2543
      %2577 = vmatpush.bf16.msra.mxu0 %v2542
      %2578 = vmatpush.bf16.msra.mxu0 %v2541
      %2579 = vmatpush.bf16.msra.mxu0 %v2540
      %2580 = vmatmul.bf16.gmra.mxu0 %v2412
      %v2581 = vpop.f32.mrf.mxu0
      %v2582 = vadd.f32 0.0, %v2581
      %v2583 = vpop.f32.mrf.mxu0
      %v2584 = vadd.f32 0.0, %v2583
      %2585 = vmatmul.bf16.gmra.mxu0 %v2414
      %v2586 = vpop.f32.mrf.mxu0
      %v2587 = vadd.f32 0.0, %v2586
      %v2588 = vpop.f32.mrf.mxu0
      %v2589 = vadd.f32 0.0, %v2588
      %2590 = vmatmul.bf16.gmra.mxu0 %v2416
      %v2591 = vpop.f32.mrf.mxu0
      %v2592 = vadd.f32 0.0, %v2591
      %v2593 = vpop.f32.mrf.mxu0
      %v2594 = vadd.f32 0.0, %v2593
      %2595 = vmatmul.bf16.gmra.mxu0 %v2418
      %v2596 = vpop.f32.mrf.mxu0
      %v2597 = vadd.f32 0.0, %v2596
      %v2598 = vpop.f32.mrf.mxu0
      %v2599 = vadd.f32 0.0, %v2598
      %2600 = vmatmul.bf16.gmra.mxu0 %v2420
      %v2601 = vpop.f32.mrf.mxu0
      %v2602 = vadd.f32 0.0, %v2601
      %v2603 = vpop.f32.mrf.mxu0
      %v2604 = vadd.f32 0.0, %v2603
      %2605 = vmatmul.bf16.gmra.mxu0 %v2422
      %v2606 = vpop.f32.mrf.mxu0
      %v2607 = vadd.f32 0.0, %v2606
      %v2608 = vpop.f32.mrf.mxu0
      %v2609 = vadd.f32 0.0, %v2608
      %2610 = vmatmul.bf16.gmra.mxu0 %v2424
      %v2611 = vpop.f32.mrf.mxu0
      %v2612 = vadd.f32 0.0, %v2611
      %v2613 = vpop.f32.mrf.mxu0
      %v2614 = vadd.f32 0.0, %v2613
      %2615 = vmatmul.bf16.gmra.mxu0 %v2426
      %v2616 = vpop.f32.mrf.mxu0
      %v2617 = vadd.f32 0.0, %v2616
      %v2618 = vpop.f32.mrf.mxu0
      %v2619 = vadd.f32 0.0, %v2618
      %2620 = vmatmul.bf16.gmra.mxu0 %v2428
      %v2621 = vpop.f32.mrf.mxu0
      %v2622 = vadd.f32 0.0, %v2621
      %v2623 = vpop.f32.mrf.mxu0
      %v2624 = vadd.f32 0.0, %v2623
      %2625 = vmatmul.bf16.gmra.mxu0 %v2430
      %v2626 = vpop.f32.mrf.mxu0
      %v2627 = vadd.f32 0.0, %v2626
      %v2628 = vpop.f32.mrf.mxu0
      %v2629 = vadd.f32 0.0, %v2628
      %2630 = vmatmul.bf16.gmra.mxu0 %v2432
      %v2631 = vpop.f32.mrf.mxu0
      %v2632 = vadd.f32 0.0, %v2631
      %v2633 = vpop.f32.mrf.mxu0
      %v2634 = vadd.f32 0.0, %v2633
      %2635 = vmatmul.bf16.gmra.mxu0 %v2434
      %v2636 = vpop.f32.mrf.mxu0
      %v2637 = vadd.f32 0.0, %v2636
      %v2638 = vpop.f32.mrf.mxu0
      %v2639 = vadd.f32 0.0, %v2638
      %2640 = vmatmul.bf16.gmra.mxu0 %v2436
      %v2641 = vpop.f32.mrf.mxu0
      %v2642 = vadd.f32 0.0, %v2641
      %v2643 = vpop.f32.mrf.mxu0
      %v2644 = vadd.f32 0.0, %v2643
      %2645 = vmatmul.bf16.gmra.mxu0 %v2438
      %v2646 = vpop.f32.mrf.mxu0
      %v2647 = vadd.f32 0.0, %v2646
      %v2648 = vpop.f32.mrf.mxu0
      %v2649 = vadd.f32 0.0, %v2648
      %2650 = vmatmul.bf16.gmra.mxu0 %v2440
      %v2651 = vpop.f32.mrf.mxu0
      %v2652 = vadd.f32 0.0, %v2651
      %v2653 = vpop.f32.mrf.mxu0
      %v2654 = vadd.f32 0.0, %v2653
      %2655 = vmatmul.bf16.gmra.mxu0 %v2442
      %v2656 = vpop.f32.mrf.mxu0
      %v2657 = vadd.f32 0.0, %v2656
      %v2658 = vpop.f32.mrf.mxu0
      %v2659 = vadd.f32 0.0, %v2658
      %2660 = vdwg.mxu0
      %2661 = vmatpush.bf16.msra.mxu0 %v2555
      %2662 = vmatpush.bf16.msra.mxu0 %v2554
      %2663 = vmatpush.bf16.msra.mxu0 %v2553
      %2664 = vmatpush.bf16.msra.mxu0 %v2552
      %2665 = vmatpush.bf16.msra.mxu0 %v2551
      %2666 = vmatpush.bf16.msra.mxu0 %v2550
      %2667 = vmatpush.bf16.msra.mxu0 %v2549
      %2668 = vmatpush.bf16.msra.mxu0 %v2548
      %2669 = vmatmul.bf16.gmra.mxu0 %v2413
      %v2670 = vpop.f32.mrf.mxu0
      %v2671 = vadd.f32 %v2582, %v2670
      %v2672 = vpop.f32.mrf.mxu0
      %v2673 = vadd.f32 %v2584, %v2672
      %2674 = vmatmul.bf16.gmra.mxu0 %v2415
      %v2675 = vpop.f32.mrf.mxu0
      %v2676 = vadd.f32 %v2587, %v2675
      %v2677 = vpop.f32.mrf.mxu0
      %v2678 = vadd.f32 %v2589, %v2677
      %2679 = vmatmul.bf16.gmra.mxu0 %v2417
      %v2680 = vpop.f32.mrf.mxu0
      %v2681 = vadd.f32 %v2592, %v2680
      %v2682 = vpop.f32.mrf.mxu0
      %v2683 = vadd.f32 %v2594, %v2682
      %2684 = vmatmul.bf16.gmra.mxu0 %v2419
      %v2685 = vpop.f32.mrf.mxu0
      %v2686 = vadd.f32 %v2597, %v2685
      %v2687 = vpop.f32.mrf.mxu0
      %v2688 = vadd.f32 %v2599, %v2687
      %2689 = vmatmul.bf16.gmra.mxu0 %v2421
      %v2690 = vpop.f32.mrf.mxu0
      %v2691 = vadd.f32 %v2602, %v2690
      %v2692 = vpop.f32.mrf.mxu0
      %v2693 = vadd.f32 %v2604, %v2692
      %2694 = vmatmul.bf16.gmra.mxu0 %v2423
      %v2695 = vpop.f32.mrf.mxu0
      %v2696 = vadd.f32 %v2607, %v2695
      %v2697 = vpop.f32.mrf.mxu0
      %v2698 = vadd.f32 %v2609, %v2697
      %2699 = vmatmul.bf16.gmra.mxu0 %v2425
      %v2700 = vpop.f32.mrf.mxu0
      %v2701 = vadd.f32 %v2612, %v2700
      %v2702 = vpop.f32.mrf.mxu0
      %v2703 = vadd.f32 %v2614, %v2702
      %2704 = vmatmul.bf16.gmra.mxu0 %v2427
      %v2705 = vpop.f32.mrf.mxu0
      %v2706 = vadd.f32 %v2617, %v2705
      %v2707 = vpop.f32.mrf.mxu0
      %v2708 = vadd.f32 %v2619, %v2707
      %2709 = vmatmul.bf16.gmra.mxu0 %v2429
      %v2710 = vpop.f32.mrf.mxu0
      %v2711 = vadd.f32 %v2622, %v2710
      %v2712 = vpop.f32.mrf.mxu0
      %v2713 = vadd.f32 %v2624, %v2712
      %2714 = vmatmul.bf16.gmra.mxu0 %v2431
      %v2715 = vpop.f32.mrf.mxu0
      %v2716 = vadd.f32 %v2627, %v2715
      %v2717 = vpop.f32.mrf.mxu0
      %v2718 = vadd.f32 %v2629, %v2717
      %2719 = vmatmul.bf16.gmra.mxu0 %v2433
      %v2720 = vpop.f32.mrf.mxu0
      %v2721 = vadd.f32 %v2632, %v2720
      %v2722 = vpop.f32.mrf.mxu0
      %v2723 = vadd.f32 %v2634, %v2722
      %2724 = vmatmul.bf16.gmra.mxu0 %v2435
      %v2725 = vpop.f32.mrf.mxu0
      %v2726 = vadd.f32 %v2637, %v2725
      %v2727 = vpop.f32.mrf.mxu0
      %v2728 = vadd.f32 %v2639, %v2727
      %2729 = vmatmul.bf16.gmra.mxu0 %v2437
      %v2730 = vpop.f32.mrf.mxu0
      %v2731 = vadd.f32 %v2642, %v2730
      %v2732 = vpop.f32.mrf.mxu0
      %v2733 = vadd.f32 %v2644, %v2732
      %2734 = vmatmul.bf16.gmra.mxu0 %v2439
      %v2735 = vpop.f32.mrf.mxu0
      %v2736 = vadd.f32 %v2647, %v2735
      %v2737 = vpop.f32.mrf.mxu0
      %v2738 = vadd.f32 %v2649, %v2737
      %2739 = vmatmul.bf16.gmra.mxu0 %v2441
      %v2740 = vpop.f32.mrf.mxu0
      %v2741 = vadd.f32 %v2652, %v2740
      %v2742 = vpop.f32.mrf.mxu0
      %v2743 = vadd.f32 %v2654, %v2742
      %2744 = vmatmul.bf16.gmra.mxu0 %v2443
      %v2745 = vpop.f32.mrf.mxu0
      %v2746 = vadd.f32 %v2657, %v2745
      %v2747 = vpop.f32.mrf.mxu0
      %v2748 = vadd.f32 %v2659, %v2747
      %2749 = vdwg.mxu0
      %v2750 = vadd.f32 %v2380, %v2671
      %v2751 = vadd.f32 %v2381, %v2673
      %v2752 = vadd.f32 %v2382, %v2676
      %v2753 = vadd.f32 %v2383, %v2678
      %v2754 = vadd.f32 %v2384, %v2681
      %v2755 = vadd.f32 %v2385, %v2683
      %v2756 = vadd.f32 %v2386, %v2686
      %v2757 = vadd.f32 %v2387, %v2688
      %v2758 = vadd.f32 %v2388, %v2691
      %v2759 = vadd.f32 %v2389, %v2693
      %v2760 = vadd.f32 %v2390, %v2696
      %v2761 = vadd.f32 %v2391, %v2698
      %v2762 = vadd.f32 %v2392, %v2701
      %v2763 = vadd.f32 %v2393, %v2703
      %v2764 = vadd.f32 %v2394, %v2706
      %v2765 = vadd.f32 %v2395, %v2708
      %v2766 = vadd.f32 %v2396, %v2711
      %v2767 = vadd.f32 %v2397, %v2713
      %v2768 = vadd.f32 %v2398, %v2716
      %v2769 = vadd.f32 %v2399, %v2718
      %v2770 = vadd.f32 %v2400, %v2721
      %v2771 = vadd.f32 %v2401, %v2723
      %v2772 = vadd.f32 %v2402, %v2726
      %v2773 = vadd.f32 %v2403, %v2728
      %v2774 = vadd.f32 %v2404, %v2731
      %v2775 = vadd.f32 %v2405, %v2733
      %v2776 = vadd.f32 %v2406, %v2736
      %v2777 = vadd.f32 %v2407, %v2738
      %v2778 = vadd.f32 %v2408, %v2741
      %v2779 = vadd.f32 %v2409, %v2743
      %v2780 = vadd.f32 %v2410, %v2746
      %v2781 = vadd.f32 %v2411, %v2748
      %2782 = vst [vmem:[#allocation5] sm:$0xff] %v2750
      %2783 = vst [vmem:[#allocation5 + $0x8] sm:$0xff] %v2751
      %2784 = vst [vmem:[#allocation5 + $0x10] sm:$0xff] %v2752
      %2785 = vst [vmem:[#allocation5 + $0x18] sm:$0xff] %v2753
      %2786 = vst [vmem:[#allocation5 + $0x20] sm:$0xff] %v2754
      %2787 = vst [vmem:[#allocation5 + $0x28] sm:$0xff] %v2755
      %2788 = vst [vmem:[#allocation5 + $0x30] sm:$0xff] %v2756
      %2789 = vst [vmem:[#allocation5 + $0x38] sm:$0xff] %v2757
      %2790 = vst [vmem:[#allocation5 + $0x40] sm:$0xff] %v2758
      %2791 = vst [vmem:[#allocation5 + $0x48] sm:$0xff] %v2759
      %2792 = vst [vmem:[#allocation5 + $0x50] sm:$0xff] %v2760
      %2793 = vst [vmem:[#allocation5 + $0x58] sm:$0xff] %v2761
      %2794 = vst [vmem:[#allocation5 + $0x60] sm:$0xff] %v2762
      %2795 = vst [vmem:[#allocation5 + $0x68] sm:$0xff] %v2763
      %2796 = vst [vmem:[#allocation5 + $0x70] sm:$0xff] %v2764
      %2797 = vst [vmem:[#allocation5 + $0x78] sm:$0xff] %v2765
      %2798 = vst [vmem:[#allocation5 + $0x80] sm:$0xff] %v2766
      %2799 = vst [vmem:[#allocation5 + $0x88] sm:$0xff] %v2767
      %2800 = vst [vmem:[#allocation5 + $0x90] sm:$0xff] %v2768
      %2801 = vst [vmem:[#allocation5 + $0x98] sm:$0xff] %v2769
      %2802 = vst [vmem:[#allocation5 + $0xa0] sm:$0xff] %v2770
      %2803 = vst [vmem:[#allocation5 + $0xa8] sm:$0xff] %v2771
      %2804 = vst [vmem:[#allocation5 + $0xb0] sm:$0xff] %v2772
      %2805 = vst [vmem:[#allocation5 + $0xb8] sm:$0xff] %v2773
      %2806 = vst [vmem:[#allocation5 + $0xc0] sm:$0xff] %v2774
      %2807 = vst [vmem:[#allocation5 + $0xc8] sm:$0xff] %v2775
      %2808 = vst [vmem:[#allocation5 + $0xd0] sm:$0xff] %v2776
      %2809 = vst [vmem:[#allocation5 + $0xd8] sm:$0xff] %v2777
      %2810 = vst [vmem:[#allocation5 + $0xe0] sm:$0xff] %v2778
      %2811 = vst [vmem:[#allocation5 + $0xe8] sm:$0xff] %v2779
      %2812 = vst [vmem:[#allocation5 + $0xf0] sm:$0xff] %v2780
      %2813 = vst [vmem:[#allocation5 + $0xf8] sm:$0xff] %v2781
      %2814 = vst.msk [vmem:[#allocation3] sm:$0xff] %vm2155, %v1483
      %2815 = vst.msk [vmem:[#allocation3 + $0x8] sm:$0xff] %vm2155, %v1484
      %2816 = vst.msk [vmem:[#allocation3 + $0x10] sm:$0xff] %vm2155, %v1485
      %2817 = vst.msk [vmem:[#allocation3 + $0x18] sm:$0xff] %vm2155, %v1486
      %2818 = vst.msk [vmem:[#allocation3 + $0x20] sm:$0xff] %vm2155, %v1487
      %2819 = vst.msk [vmem:[#allocation3 + $0x28] sm:$0xff] %vm2155, %v1488
      %2820 = vst.msk [vmem:[#allocation3 + $0x30] sm:$0xff] %vm2155, %v1489
      %2821 = vst.msk [vmem:[#allocation3 + $0x38] sm:$0xff] %vm2155, %v1490
      %2822 = vst.msk [vmem:[#allocation3 + $0x40] sm:$0xff] %vm2155, %v1491
      %2823 = vst.msk [vmem:[#allocation3 + $0x48] sm:$0xff] %vm2155, %v1492
      %2824 = vst.msk [vmem:[#allocation3 + $0x50] sm:$0xff] %vm2155, %v1493
      %2825 = vst.msk [vmem:[#allocation3 + $0x58] sm:$0xff] %vm2155, %v1494
      %2826 = vst.msk [vmem:[#allocation3 + $0x60] sm:$0xff] %vm2155, %v1495
      %2827 = vst.msk [vmem:[#allocation3 + $0x68] sm:$0xff] %vm2155, %v1496
      %2828 = vst.msk [vmem:[#allocation3 + $0x70] sm:$0xff] %vm2155, %v1497
      %2829 = vst.msk [vmem:[#allocation3 + $0x78] sm:$0xff] %vm2155, %v1498
      %2830 = vst.msk [vmem:[#allocation3 + $0x80] sm:$0xff] %vm2155, %v1499
      %2831 = vst.msk [vmem:[#allocation3 + $0x88] sm:$0xff] %vm2155, %v1500
      %2832 = vst.msk [vmem:[#allocation3 + $0x90] sm:$0xff] %vm2155, %v1501
      %2833 = vst.msk [vmem:[#allocation3 + $0x98] sm:$0xff] %vm2155, %v1502
      %2834 = vst.msk [vmem:[#allocation3 + $0xa0] sm:$0xff] %vm2155, %v1503
      %2835 = vst.msk [vmem:[#allocation3 + $0xa8] sm:$0xff] %vm2155, %v1504
      %2836 = vst.msk [vmem:[#allocation3 + $0xb0] sm:$0xff] %vm2155, %v1505
      %2837 = vst.msk [vmem:[#allocation3 + $0xb8] sm:$0xff] %vm2155, %v1506
      %2838 = vst.msk [vmem:[#allocation3 + $0xc0] sm:$0xff] %vm2155, %v1507
      %2839 = vst.msk [vmem:[#allocation3 + $0xc8] sm:$0xff] %vm2155, %v1508
      %2840 = vst.msk [vmem:[#allocation3 + $0xd0] sm:$0xff] %vm2155, %v1509
      %2841 = vst.msk [vmem:[#allocation3 + $0xd8] sm:$0xff] %vm2155, %v1510
      %2842 = vst.msk [vmem:[#allocation3 + $0xe0] sm:$0xff] %vm2155, %v1511
      %2843 = vst.msk [vmem:[#allocation3 + $0xe8] sm:$0xff] %vm2155, %v1512
      %2844 = vst.msk [vmem:[#allocation3 + $0xf0] sm:$0xff] %vm2155, %v1513
      %2845 = vst.msk [vmem:[#allocation3 + $0xf8] sm:$0xff] %vm2155, %v1514
      // Predicated region
      $region61: #{spatial_self_attention.5} parent=55 // pred_check
        %p2846 = pneg %p479
      $region62: #{spatial_self_attention.5} parent=55 // pred_check_branch
        %2848 = sbr.rel (%p2846) target = $region64
      $region63: #{spatial_self_attention.5} parent=55 // pred_region
        %v2849 = vld [vmem:[#allocation4] sm:$0xff]
        %v2850 = vld [vmem:[#allocation4 + $0x8] sm:$0xff]
        %v2851 = vld [vmem:[#allocation4 + $0x10] sm:$0xff]
        %v2852 = vld [vmem:[#allocation4 + $0x18] sm:$0xff]
        %v2853 = vld [vmem:[#allocation4 + $0x20] sm:$0xff]
        %v2854 = vld [vmem:[#allocation4 + $0x28] sm:$0xff]
        %v2855 = vld [vmem:[#allocation4 + $0x30] sm:$0xff]
        %v2856 = vld [vmem:[#allocation4 + $0x38] sm:$0xff]
        %v2857 = vld [vmem:[#allocation4 + $0x40] sm:$0xff]
        %v2858 = vld [vmem:[#allocation4 + $0x48] sm:$0xff]
        %v2859 = vld [vmem:[#allocation4 + $0x50] sm:$0xff]
        %v2860 = vld [vmem:[#allocation4 + $0x58] sm:$0xff]
        %v2861 = vld [vmem:[#allocation4 + $0x60] sm:$0xff]
        %v2862 = vld [vmem:[#allocation4 + $0x68] sm:$0xff]
        %v2863 = vld [vmem:[#allocation4 + $0x70] sm:$0xff]
        %v2864 = vld [vmem:[#allocation4 + $0x78] sm:$0xff]
        %v2865 = vld [vmem:[#allocation4 + $0x80] sm:$0xff]
        %v2866 = vld [vmem:[#allocation4 + $0x88] sm:$0xff]
        %v2867 = vld [vmem:[#allocation4 + $0x90] sm:$0xff]
        %v2868 = vld [vmem:[#allocation4 + $0x98] sm:$0xff]
        %v2869 = vld [vmem:[#allocation4 + $0xa0] sm:$0xff]
        %v2870 = vld [vmem:[#allocation4 + $0xa8] sm:$0xff]
        %v2871 = vld [vmem:[#allocation4 + $0xb0] sm:$0xff]
        %v2872 = vld [vmem:[#allocation4 + $0xb8] sm:$0xff]
        %v2873 = vld [vmem:[#allocation4 + $0xc0] sm:$0xff]
        %v2874 = vld [vmem:[#allocation4 + $0xc8] sm:$0xff]
        %v2875 = vld [vmem:[#allocation4 + $0xd0] sm:$0xff]
        %v2876 = vld [vmem:[#allocation4 + $0xd8] sm:$0xff]
        %v2877 = vld [vmem:[#allocation4 + $0xe0] sm:$0xff]
        %v2878 = vld [vmem:[#allocation4 + $0xe8] sm:$0xff]
        %v2879 = vld [vmem:[#allocation4 + $0xf0] sm:$0xff]
        %v2880 = vld [vmem:[#allocation4 + $0xf8] sm:$0xff]
        %v2881 = vrcp.pop %v2849
        %v2882 = vrcp.pop %v2850
        %v2883 = vrcp.pop %v2851
        %v2884 = vrcp.pop %v2852
        %v2885 = vrcp.pop %v2853
        %v2886 = vrcp.pop %v2854
        %v2887 = vrcp.pop %v2855
        %v2888 = vrcp.pop %v2856
        %v2889 = vrcp.pop %v2857
        %v2890 = vrcp.pop %v2858
        %v2891 = vrcp.pop %v2859
        %v2892 = vrcp.pop %v2860
        %v2893 = vrcp.pop %v2861
        %v2894 = vrcp.pop %v2862
        %v2895 = vrcp.pop %v2863
        %v2896 = vrcp.pop %v2864
        %v2897 = vrcp.pop %v2865
        %v2898 = vrcp.pop %v2866
        %v2899 = vrcp.pop %v2867
        %v2900 = vrcp.pop %v2868
        %v2901 = vrcp.pop %v2869
        %v2902 = vrcp.pop %v2870
        %v2903 = vrcp.pop %v2871
        %v2904 = vrcp.pop %v2872
        %v2905 = vrcp.pop %v2873
        %v2906 = vrcp.pop %v2874
        %v2907 = vrcp.pop %v2875
        %v2908 = vrcp.pop %v2876
        %v2909 = vrcp.pop %v2877
        %v2910 = vrcp.pop %v2878
        %v2911 = vrcp.pop %v2879
        %v2912 = vrcp.pop %v2880
        %v2913 = vld [vmem:[#allocation5] sm:$0xff]
        %v2914 = vld [vmem:[#allocation5 + $0x8] sm:$0xff]
        %v2915 = vld [vmem:[#allocation5 + $0x10] sm:$0xff]
        %v2916 = vld [vmem:[#allocation5 + $0x18] sm:$0xff]
        %v2917 = vld [vmem:[#allocation5 + $0x20] sm:$0xff]
        %v2918 = vld [vmem:[#allocation5 + $0x28] sm:$0xff]
        %v2919 = vld [vmem:[#allocation5 + $0x30] sm:$0xff]
        %v2920 = vld [vmem:[#allocation5 + $0x38] sm:$0xff]
        %v2921 = vld [vmem:[#allocation5 + $0x40] sm:$0xff]
        %v2922 = vld [vmem:[#allocation5 + $0x48] sm:$0xff]
        %v2923 = vld [vmem:[#allocation5 + $0x50] sm:$0xff]
        %v2924 = vld [vmem:[#allocation5 + $0x58] sm:$0xff]
        %v2925 = vld [vmem:[#allocation5 + $0x60] sm:$0xff]
        %v2926 = vld [vmem:[#allocation5 + $0x68] sm:$0xff]
        %v2927 = vld [vmem:[#allocation5 + $0x70] sm:$0xff]
        %v2928 = vld [vmem:[#allocation5 + $0x78] sm:$0xff]
        %v2929 = vld [vmem:[#allocation5 + $0x80] sm:$0xff]
        %v2930 = vld [vmem:[#allocation5 + $0x88] sm:$0xff]
        %v2931 = vld [vmem:[#allocation5 + $0x90] sm:$0xff]
        %v2932 = vld [vmem:[#allocation5 + $0x98] sm:$0xff]
        %v2933 = vld [vmem:[#allocation5 + $0xa0] sm:$0xff]
        %v2934 = vld [vmem:[#allocation5 + $0xa8] sm:$0xff]
        %v2935 = vld [vmem:[#allocation5 + $0xb0] sm:$0xff]
        %v2936 = vld [vmem:[#allocation5 + $0xb8] sm:$0xff]
        %v2937 = vld [vmem:[#allocation5 + $0xc0] sm:$0xff]
        %v2938 = vld [vmem:[#allocation5 + $0xc8] sm:$0xff]
        %v2939 = vld [vmem:[#allocation5 + $0xd0] sm:$0xff]
        %v2940 = vld [vmem:[#allocation5 + $0xd8] sm:$0xff]
        %v2941 = vld [vmem:[#allocation5 + $0xe0] sm:$0xff]
        %v2942 = vld [vmem:[#allocation5 + $0xe8] sm:$0xff]
        %v2943 = vld [vmem:[#allocation5 + $0xf0] sm:$0xff]
        %v2944 = vld [vmem:[#allocation5 + $0xf8] sm:$0xff]
        %2946 = vset.pattern.permute.xlu0 0
        %2947 = vperm.xlu0 %2946, %v2881
        %v2948 = vpop.permute.xlu0 %2947
        %2951 = vset.pattern.permute.xlu0 0
        %2952 = vperm.xlu0 %2951, %v2882
        %v2953 = vpop.permute.xlu0 %2952
        %2956 = vset.pattern.permute.xlu0 0
        %2957 = vperm.xlu0 %2956, %v2883
        %v2958 = vpop.permute.xlu0 %2957
        %2961 = vset.pattern.permute.xlu0 0
        %2962 = vperm.xlu0 %2961, %v2884
        %v2963 = vpop.permute.xlu0 %2962
        %2966 = vset.pattern.permute.xlu0 0
        %2967 = vperm.xlu0 %2966, %v2885
        %v2968 = vpop.permute.xlu0 %2967
        %2971 = vset.pattern.permute.xlu0 0
        %2972 = vperm.xlu0 %2971, %v2886
        %v2973 = vpop.permute.xlu0 %2972
        %2976 = vset.pattern.permute.xlu0 0
        %2977 = vperm.xlu0 %2976, %v2887
        %v2978 = vpop.permute.xlu0 %2977
        %2981 = vset.pattern.permute.xlu0 0
        %2982 = vperm.xlu0 %2981, %v2888
        %v2983 = vpop.permute.xlu0 %2982
        %2986 = vset.pattern.permute.xlu0 0
        %2987 = vperm.xlu0 %2986, %v2889
        %v2988 = vpop.permute.xlu0 %2987
        %2991 = vset.pattern.permute.xlu0 0
        %2992 = vperm.xlu0 %2991, %v2890
        %v2993 = vpop.permute.xlu0 %2992
        %2996 = vset.pattern.permute.xlu0 0
        %2997 = vperm.xlu0 %2996, %v2891
        %v2998 = vpop.permute.xlu0 %2997
        %3001 = vset.pattern.permute.xlu0 0
        %3002 = vperm.xlu0 %3001, %v2892
        %v3003 = vpop.permute.xlu0 %3002
        %3006 = vset.pattern.permute.xlu0 0
        %3007 = vperm.xlu0 %3006, %v2893
        %v3008 = vpop.permute.xlu0 %3007
        %3011 = vset.pattern.permute.xlu0 0
        %3012 = vperm.xlu0 %3011, %v2894
        %v3013 = vpop.permute.xlu0 %3012
        %3016 = vset.pattern.permute.xlu0 0
        %3017 = vperm.xlu0 %3016, %v2895
        %v3018 = vpop.permute.xlu0 %3017
        %3021 = vset.pattern.permute.xlu0 0
        %3022 = vperm.xlu0 %3021, %v2896
        %v3023 = vpop.permute.xlu0 %3022
        %3026 = vset.pattern.permute.xlu0 0
        %3027 = vperm.xlu0 %3026, %v2897
        %v3028 = vpop.permute.xlu0 %3027
        %3031 = vset.pattern.permute.xlu0 0
        %3032 = vperm.xlu0 %3031, %v2898
        %v3033 = vpop.permute.xlu0 %3032
        %3036 = vset.pattern.permute.xlu0 0
        %3037 = vperm.xlu0 %3036, %v2899
        %v3038 = vpop.permute.xlu0 %3037
        %3041 = vset.pattern.permute.xlu0 0
        %3042 = vperm.xlu0 %3041, %v2900
        %v3043 = vpop.permute.xlu0 %3042
        %3046 = vset.pattern.permute.xlu0 0
        %3047 = vperm.xlu0 %3046, %v2901
        %v3048 = vpop.permute.xlu0 %3047
        %3051 = vset.pattern.permute.xlu0 0
        %3052 = vperm.xlu0 %3051, %v2902
        %v3053 = vpop.permute.xlu0 %3052
        %3056 = vset.pattern.permute.xlu0 0
        %3057 = vperm.xlu0 %3056, %v2903
        %v3058 = vpop.permute.xlu0 %3057
        %3061 = vset.pattern.permute.xlu0 0
        %3062 = vperm.xlu0 %3061, %v2904
        %v3063 = vpop.permute.xlu0 %3062
        %3066 = vset.pattern.permute.xlu0 0
        %3067 = vperm.xlu0 %3066, %v2905
        %v3068 = vpop.permute.xlu0 %3067
        %3071 = vset.pattern.permute.xlu0 0
        %3072 = vperm.xlu0 %3071, %v2906
        %v3073 = vpop.permute.xlu0 %3072
        %3076 = vset.pattern.permute.xlu0 0
        %3077 = vperm.xlu0 %3076, %v2907
        %v3078 = vpop.permute.xlu0 %3077
        %3081 = vset.pattern.permute.xlu0 0
        %3082 = vperm.xlu0 %3081, %v2908
        %v3083 = vpop.permute.xlu0 %3082
        %3086 = vset.pattern.permute.xlu0 0
        %3087 = vperm.xlu0 %3086, %v2909
        %v3088 = vpop.permute.xlu0 %3087
        %3091 = vset.pattern.permute.xlu0 0
        %3092 = vperm.xlu0 %3091, %v2910
        %v3093 = vpop.permute.xlu0 %3092
        %3096 = vset.pattern.permute.xlu0 0
        %3097 = vperm.xlu0 %3096, %v2911
        %v3098 = vpop.permute.xlu0 %3097
        %3101 = vset.pattern.permute.xlu0 0
        %3102 = vperm.xlu0 %3101, %v2912
        %v3103 = vpop.permute.xlu0 %3102
        %v3105 = vmul.f32 %v2913, %v2948
        %v3106 = vmul.f32 %v2914, %v2953
        %v3107 = vmul.f32 %v2915, %v2958
        %v3108 = vmul.f32 %v2916, %v2963
        %v3109 = vmul.f32 %v2917, %v2968
        %v3110 = vmul.f32 %v2918, %v2973
        %v3111 = vmul.f32 %v2919, %v2978
        %v3112 = vmul.f32 %v2920, %v2983
        %v3113 = vmul.f32 %v2921, %v2988
        %v3114 = vmul.f32 %v2922, %v2993
        %v3115 = vmul.f32 %v2923, %v2998
        %v3116 = vmul.f32 %v2924, %v3003
        %v3117 = vmul.f32 %v2925, %v3008
        %v3118 = vmul.f32 %v2926, %v3013
        %v3119 = vmul.f32 %v2927, %v3018
        %v3120 = vmul.f32 %v2928, %v3023
        %v3121 = vmul.f32 %v2929, %v3028
        %v3122 = vmul.f32 %v2930, %v3033
        %v3123 = vmul.f32 %v2931, %v3038
        %v3124 = vmul.f32 %v2932, %v3043
        %v3125 = vmul.f32 %v2933, %v3048
        %v3126 = vmul.f32 %v2934, %v3053
        %v3127 = vmul.f32 %v2935, %v3058
        %v3128 = vmul.f32 %v2936, %v3063
        %v3129 = vmul.f32 %v2937, %v3068
        %v3130 = vmul.f32 %v2938, %v3073
        %v3131 = vmul.f32 %v2939, %v3078
        %v3132 = vmul.f32 %v2940, %v3083
        %v3133 = vmul.f32 %v2941, %v3088
        %v3134 = vmul.f32 %v2942, %v3093
        %v3135 = vmul.f32 %v2943, %v3098
        %v3136 = vmul.f32 %v2944, %v3103
        %v3137 = vpack.c.bf16 %v3106, %v3105
        %v3138 = vpack.c.bf16 %v3108, %v3107
        %v3139 = vpack.c.bf16 %v3110, %v3109
        %v3140 = vpack.c.bf16 %v3112, %v3111
        %v3141 = vpack.c.bf16 %v3114, %v3113
        %v3142 = vpack.c.bf16 %v3116, %v3115
        %v3143 = vpack.c.bf16 %v3118, %v3117
        %v3144 = vpack.c.bf16 %v3120, %v3119
        %v3145 = vpack.c.bf16 %v3122, %v3121
        %v3146 = vpack.c.bf16 %v3124, %v3123
        %v3147 = vpack.c.bf16 %v3126, %v3125
        %v3148 = vpack.c.bf16 %v3128, %v3127
        %v3149 = vpack.c.bf16 %v3130, %v3129
        %v3150 = vpack.c.bf16 %v3132, %v3131
        %v3151 = vpack.c.bf16 %v3134, %v3133
        %v3152 = vpack.c.bf16 %v3136, %v3135
        %v3153 = vld [vmem:[%s7] sm:$0xf]
        %v3154 = vld [vmem:[%s7 + $0x4] sm:$0xf]
        %v3155 = vld [vmem:[%s7 + $0x8] sm:$0xf]
        %v3156 = vld [vmem:[%s7 + $0xc] sm:$0xf]
        %v3157 = vld [vmem:[%s7 + $0x10] sm:$0xf]
        %v3158 = vld [vmem:[%s7 + $0x14] sm:$0xf]
        %v3159 = vld [vmem:[%s7 + $0x18] sm:$0xf]
        %v3160 = vld [vmem:[%s7 + $0x1c] sm:$0xf]
        %v3161 = vld [vmem:[%s7 + $0x20] sm:$0xf]
        %v3162 = vld [vmem:[%s7 + $0x24] sm:$0xf]
        %v3163 = vld [vmem:[%s7 + $0x28] sm:$0xf]
        %v3164 = vld [vmem:[%s7 + $0x2c] sm:$0xf]
        %v3165 = vld [vmem:[%s7 + $0x30] sm:$0xf]
        %v3166 = vld [vmem:[%s7 + $0x34] sm:$0xf]
        %v3167 = vld [vmem:[%s7 + $0x38] sm:$0xf]
        %v3168 = vld [vmem:[%s7 + $0x3c] sm:$0xf]
        %v3185 = vunpack.c.l.b16 %v3153
        %v3186 = vunpack.c.l.b16 %v3154
        %v3187 = vunpack.c.l.b16 %v3155
        %v3188 = vunpack.c.l.b16 %v3156
        %v3189 = vunpack.c.l.b16 %v3157
        %v3190 = vunpack.c.l.b16 %v3158
        %v3191 = vunpack.c.l.b16 %v3159
        %v3192 = vunpack.c.l.b16 %v3160
        %v3193 = vunpack.c.l.b16 %v3161
        %v3194 = vunpack.c.l.b16 %v3162
        %v3195 = vunpack.c.l.b16 %v3163
        %v3196 = vunpack.c.l.b16 %v3164
        %v3197 = vunpack.c.l.b16 %v3165
        %v3198 = vunpack.c.l.b16 %v3166
        %v3199 = vunpack.c.l.b16 %v3167
        %v3200 = vunpack.c.l.b16 %v3168
        %v3201 = vpack.c.b16 %v3186, %v3185
        %v3202 = vpack.c.b16 %v3188, %v3187
        %v3203 = vpack.c.b16 %v3190, %v3189
        %v3204 = vpack.c.b16 %v3192, %v3191
        %v3205 = vpack.c.b16 %v3194, %v3193
        %v3206 = vpack.c.b16 %v3196, %v3195
        %v3207 = vpack.c.b16 %v3198, %v3197
        %v3208 = vpack.c.b16 %v3200, %v3199
        %3217 = vmatpush.bf16.msra.mxu0 %v3208
        %3218 = vmatpush.bf16.msra.mxu0 %v3207
        %3219 = vmatpush.bf16.msra.mxu0 %v3206
        %3220 = vmatpush.bf16.msra.mxu0 %v3205
        %3221 = vmatpush.bf16.msra.mxu0 %v3204
        %3222 = vmatpush.bf16.msra.mxu0 %v3203
        %3223 = vmatpush.bf16.msra.mxu0 %v3202
        %3224 = vmatpush.bf16.msra.mxu0 %v3201
        %3225 = vmatmul.bf16.gmra.mxu0 %v3137
        %v3226 = vpop.f32.mrf.mxu0
        %v3227 = vadd.f32 0.0, %v3226
        %v3228 = vpop.f32.mrf.mxu0
        %v3229 = vadd.f32 0.0, %v3228
        %3230 = vmatmul.bf16.gmra.mxu0 %v3138
        %v3231 = vpop.f32.mrf.mxu0
        %v3232 = vadd.f32 0.0, %v3231
        %v3233 = vpop.f32.mrf.mxu0
        %v3234 = vadd.f32 0.0, %v3233
        %3235 = vmatmul.bf16.gmra.mxu0 %v3139
        %v3236 = vpop.f32.mrf.mxu0
        %v3237 = vadd.f32 0.0, %v3236
        %v3238 = vpop.f32.mrf.mxu0
        %v3239 = vadd.f32 0.0, %v3238
        %3240 = vmatmul.bf16.gmra.mxu0 %v3140
        %v3241 = vpop.f32.mrf.mxu0
        %v3242 = vadd.f32 0.0, %v3241
        %v3243 = vpop.f32.mrf.mxu0
        %v3244 = vadd.f32 0.0, %v3243
        %3245 = vmatmul.bf16.gmra.mxu0 %v3141
        %v3246 = vpop.f32.mrf.mxu0
        %v3247 = vadd.f32 0.0, %v3246
        %v3248 = vpop.f32.mrf.mxu0
        %v3249 = vadd.f32 0.0, %v3248
        %3250 = vmatmul.bf16.gmra.mxu0 %v3142
        %v3251 = vpop.f32.mrf.mxu0
        %v3252 = vadd.f32 0.0, %v3251
        %v3253 = vpop.f32.mrf.mxu0
        %v3254 = vadd.f32 0.0, %v3253
        %3255 = vmatmul.bf16.gmra.mxu0 %v3143
        %v3256 = vpop.f32.mrf.mxu0
        %v3257 = vadd.f32 0.0, %v3256
        %v3258 = vpop.f32.mrf.mxu0
        %v3259 = vadd.f32 0.0, %v3258
        %3260 = vmatmul.bf16.gmra.mxu0 %v3144
        %v3261 = vpop.f32.mrf.mxu0
        %v3262 = vadd.f32 0.0, %v3261
        %v3263 = vpop.f32.mrf.mxu0
        %v3264 = vadd.f32 0.0, %v3263
        %3265 = vmatmul.bf16.gmra.mxu0 %v3145
        %v3266 = vpop.f32.mrf.mxu0
        %v3267 = vadd.f32 0.0, %v3266
        %v3268 = vpop.f32.mrf.mxu0
        %v3269 = vadd.f32 0.0, %v3268
        %3270 = vmatmul.bf16.gmra.mxu0 %v3146
        %v3271 = vpop.f32.mrf.mxu0
        %v3272 = vadd.f32 0.0, %v3271
        %v3273 = vpop.f32.mrf.mxu0
        %v3274 = vadd.f32 0.0, %v3273
        %3275 = vmatmul.bf16.gmra.mxu0 %v3147
        %v3276 = vpop.f32.mrf.mxu0
        %v3277 = vadd.f32 0.0, %v3276
        %v3278 = vpop.f32.mrf.mxu0
        %v3279 = vadd.f32 0.0, %v3278
        %3280 = vmatmul.bf16.gmra.mxu0 %v3148
        %v3281 = vpop.f32.mrf.mxu0
        %v3282 = vadd.f32 0.0, %v3281
        %v3283 = vpop.f32.mrf.mxu0
        %v3284 = vadd.f32 0.0, %v3283
        %3285 = vmatmul.bf16.gmra.mxu0 %v3149
        %v3286 = vpop.f32.mrf.mxu0
        %v3287 = vadd.f32 0.0, %v3286
        %v3288 = vpop.f32.mrf.mxu0
        %v3289 = vadd.f32 0.0, %v3288
        %3290 = vmatmul.bf16.gmra.mxu0 %v3150
        %v3291 = vpop.f32.mrf.mxu0
        %v3292 = vadd.f32 0.0, %v3291
        %v3293 = vpop.f32.mrf.mxu0
        %v3294 = vadd.f32 0.0, %v3293
        %3295 = vmatmul.bf16.gmra.mxu0 %v3151
        %v3296 = vpop.f32.mrf.mxu0
        %v3297 = vadd.f32 0.0, %v3296
        %v3298 = vpop.f32.mrf.mxu0
        %v3299 = vadd.f32 0.0, %v3298
        %3300 = vmatmul.bf16.gmra.mxu0 %v3152
        %v3301 = vpop.f32.mrf.mxu0
        %v3302 = vadd.f32 0.0, %v3301
        %v3303 = vpop.f32.mrf.mxu0
        %v3304 = vadd.f32 0.0, %v3303
        %3305 = vdwg.mxu0
        %v3306 = vld [vmem:[%s441] sm:$0xff]
        %v3307 = vld [vmem:[%s441 + $0x8] sm:$0xff]
        %v3308 = vld [vmem:[%s441 + $0x10] sm:$0xff]
        %v3309 = vld [vmem:[%s441 + $0x18] sm:$0xff]
        %v3310 = vld [vmem:[%s441 + $0x20] sm:$0xff]
        %v3311 = vld [vmem:[%s441 + $0x28] sm:$0xff]
        %v3312 = vld [vmem:[%s441 + $0x30] sm:$0xff]
        %v3313 = vld [vmem:[%s441 + $0x38] sm:$0xff]
        %v3314 = vld [vmem:[%s441 + $0x40] sm:$0xff]
        %v3315 = vld [vmem:[%s441 + $0x48] sm:$0xff]
        %v3316 = vld [vmem:[%s441 + $0x50] sm:$0xff]
        %v3317 = vld [vmem:[%s441 + $0x58] sm:$0xff]
        %v3318 = vld [vmem:[%s441 + $0x60] sm:$0xff]
        %v3319 = vld [vmem:[%s441 + $0x68] sm:$0xff]
        %v3320 = vld [vmem:[%s441 + $0x70] sm:$0xff]
        %v3321 = vld [vmem:[%s441 + $0x78] sm:$0xff]
        %v3322 = vld [vmem:[%s441 + $0x80] sm:$0xff]
        %v3323 = vld [vmem:[%s441 + $0x88] sm:$0xff]
        %v3324 = vld [vmem:[%s441 + $0x90] sm:$0xff]
        %v3325 = vld [vmem:[%s441 + $0x98] sm:$0xff]
        %v3326 = vld [vmem:[%s441 + $0xa0] sm:$0xff]
        %v3327 = vld [vmem:[%s441 + $0xa8] sm:$0xff]
        %v3328 = vld [vmem:[%s441 + $0xb0] sm:$0xff]
        %v3329 = vld [vmem:[%s441 + $0xb8] sm:$0xff]
        %v3330 = vld [vmem:[%s441 + $0xc0] sm:$0xff]
        %v3331 = vld [vmem:[%s441 + $0xc8] sm:$0xff]
        %v3332 = vld [vmem:[%s441 + $0xd0] sm:$0xff]
        %v3333 = vld [vmem:[%s441 + $0xd8] sm:$0xff]
        %v3334 = vld [vmem:[%s441 + $0xe0] sm:$0xff]
        %v3335 = vld [vmem:[%s441 + $0xe8] sm:$0xff]
        %v3336 = vld [vmem:[%s441 + $0xf0] sm:$0xff]
        %v3337 = vld [vmem:[%s441 + $0xf8] sm:$0xff]
        %v3338 = vadd.f32 %v3306, %v3227
        %v3339 = vadd.f32 %v3307, %v3229
        %v3340 = vadd.f32 %v3308, %v3232
        %v3341 = vadd.f32 %v3309, %v3234
        %v3342 = vadd.f32 %v3310, %v3237
        %v3343 = vadd.f32 %v3311, %v3239
        %v3344 = vadd.f32 %v3312, %v3242
        %v3345 = vadd.f32 %v3313, %v3244
        %v3346 = vadd.f32 %v3314, %v3247
        %v3347 = vadd.f32 %v3315, %v3249
        %v3348 = vadd.f32 %v3316, %v3252
        %v3349 = vadd.f32 %v3317, %v3254
        %v3350 = vadd.f32 %v3318, %v3257
        %v3351 = vadd.f32 %v3319, %v3259
        %v3352 = vadd.f32 %v3320, %v3262
        %v3353 = vadd.f32 %v3321, %v3264
        %v3354 = vadd.f32 %v3322, %v3267
        %v3355 = vadd.f32 %v3323, %v3269
        %v3356 = vadd.f32 %v3324, %v3272
        %v3357 = vadd.f32 %v3325, %v3274
        %v3358 = vadd.f32 %v3326, %v3277
        %v3359 = vadd.f32 %v3327, %v3279
        %v3360 = vadd.f32 %v3328, %v3282
        %v3361 = vadd.f32 %v3329, %v3284
        %v3362 = vadd.f32 %v3330, %v3287
        %v3363 = vadd.f32 %v3331, %v3289
        %v3364 = vadd.f32 %v3332, %v3292
        %v3365 = vadd.f32 %v3333, %v3294
        %v3366 = vadd.f32 %v3334, %v3297
        %v3367 = vadd.f32 %v3335, %v3299
        %v3368 = vadd.f32 %v3336, %v3302
        %v3369 = vadd.f32 %v3337, %v3304
        %v3370 = vld [vmem:[%s8] sm:$0x1]
        %v3372 = vperm.slane %v3370, 0
        %v3374 = vadd.f32 %v3338, %v3372
        %v3375 = vadd.f32 %v3339, %v3372
        %v3376 = vadd.f32 %v3340, %v3372
        %v3377 = vadd.f32 %v3341, %v3372
        %v3378 = vadd.f32 %v3342, %v3372
        %v3379 = vadd.f32 %v3343, %v3372
        %v3380 = vadd.f32 %v3344, %v3372
        %v3381 = vadd.f32 %v3345, %v3372
        %v3382 = vadd.f32 %v3346, %v3372
        %v3383 = vadd.f32 %v3347, %v3372
        %v3384 = vadd.f32 %v3348, %v3372
        %v3385 = vadd.f32 %v3349, %v3372
        %v3386 = vadd.f32 %v3350, %v3372
        %v3387 = vadd.f32 %v3351, %v3372
        %v3388 = vadd.f32 %v3352, %v3372
        %v3389 = vadd.f32 %v3353, %v3372
        %v3390 = vadd.f32 %v3354, %v3372
        %v3391 = vadd.f32 %v3355, %v3372
        %v3392 = vadd.f32 %v3356, %v3372
        %v3393 = vadd.f32 %v3357, %v3372
        %v3394 = vadd.f32 %v3358, %v3372
        %v3395 = vadd.f32 %v3359, %v3372
        %v3396 = vadd.f32 %v3360, %v3372
        %v3397 = vadd.f32 %v3361, %v3372
        %v3398 = vadd.f32 %v3362, %v3372
        %v3399 = vadd.f32 %v3363, %v3372
        %v3400 = vadd.f32 %v3364, %v3372
        %v3401 = vadd.f32 %v3365, %v3372
        %v3402 = vadd.f32 %v3366, %v3372
        %v3403 = vadd.f32 %v3367, %v3372
        %v3404 = vadd.f32 %v3368, %v3372
        %v3405 = vadd.f32 %v3369, %v3372
        %3406 = vst [vmem:[%s477] sm:$0xff] %v3374
        %3407 = vst [vmem:[%s477 + $0x8] sm:$0xff] %v3375
        %3408 = vst [vmem:[%s477 + $0x10] sm:$0xff] %v3376
        %3409 = vst [vmem:[%s477 + $0x18] sm:$0xff] %v3377
        %3410 = vst [vmem:[%s477 + $0x20] sm:$0xff] %v3378
        %3411 = vst [vmem:[%s477 + $0x28] sm:$0xff] %v3379
        %3412 = vst [vmem:[%s477 + $0x30] sm:$0xff] %v3380
        %3413 = vst [vmem:[%s477 + $0x38] sm:$0xff] %v3381
        %3414 = vst [vmem:[%s477 + $0x40] sm:$0xff] %v3382
        %3415 = vst [vmem:[%s477 + $0x48] sm:$0xff] %v3383
        %3416 = vst [vmem:[%s477 + $0x50] sm:$0xff] %v3384
        %3417 = vst [vmem:[%s477 + $0x58] sm:$0xff] %v3385
        %3418 = vst [vmem:[%s477 + $0x60] sm:$0xff] %v3386
        %3419 = vst [vmem:[%s477 + $0x68] sm:$0xff] %v3387
        %3420 = vst [vmem:[%s477 + $0x70] sm:$0xff] %v3388
        %3421 = vst [vmem:[%s477 + $0x78] sm:$0xff] %v3389
        %3422 = vst [vmem:[%s477 + $0x80] sm:$0xff] %v3390
        %3423 = vst [vmem:[%s477 + $0x88] sm:$0xff] %v3391
        %3424 = vst [vmem:[%s477 + $0x90] sm:$0xff] %v3392
        %3425 = vst [vmem:[%s477 + $0x98] sm:$0xff] %v3393
        %3426 = vst [vmem:[%s477 + $0xa0] sm:$0xff] %v3394
        %3427 = vst [vmem:[%s477 + $0xa8] sm:$0xff] %v3395
        %3428 = vst [vmem:[%s477 + $0xb0] sm:$0xff] %v3396
        %3429 = vst [vmem:[%s477 + $0xb8] sm:$0xff] %v3397
        %3430 = vst [vmem:[%s477 + $0xc0] sm:$0xff] %v3398
        %3431 = vst [vmem:[%s477 + $0xc8] sm:$0xff] %v3399
        %3432 = vst [vmem:[%s477 + $0xd0] sm:$0xff] %v3400
        %3433 = vst [vmem:[%s477 + $0xd8] sm:$0xff] %v3401
        %3434 = vst [vmem:[%s477 + $0xe0] sm:$0xff] %v3402
        %3435 = vst [vmem:[%s477 + $0xe8] sm:$0xff] %v3403
        %3436 = vst [vmem:[%s477 + $0xf0] sm:$0xff] %v3404
        %3437 = vst [vmem:[%s477 + $0xf8] sm:$0xff] %v3405
      $region64: #{spatial_self_attention.5} parent=55 // pred_fallthru
        _
      %s3438 = smul.u32 32, %s26
      %p3439 = scmp.lt.s32.totalorder %s25, 1
      %s3440 = scalar_select %p3439, %s25, 1
      %p3441 = scmp.lt.s32.totalorder %s3438, 31
      %s3442 = scalar_select %p3441, %s3438, 31
      %s3443 = smul.addr %s3440, 32
      %s3444 = sadd.s32 %s3442, %s3443
      %s3445 = smul.addr %s3444, 8
      %s3446 = scalar_lea.vmem %s9, %s3445
      // Predicated region
      $region65: #{spatial_self_attention.5} parent=55 // pred_check
        %p3447 = pneg %p279
      $region66: #{spatial_self_attention.5} parent=55 // pred_check_branch
        %3449 = sbr.rel (%p3447) target = $region68
      $region67: #{spatial_self_attention.5} parent=55 // pred_region
        %s3450 = smul.u32 32, %s26
      $region68: #{spatial_self_attention.5} parent=55 // pred_fallthru
        _
    $region56: #{spatial_self_attention.5} parent=5 // pred_fallthru
      _
    %p3451 = scmp.le.s32.totalorder 2, %s15
    // Predicated region
    $region69: #{spatial_self_attention.5} parent=5 // pred_check
      %p3452 = pneg %p3451
    $region70: #{spatial_self_attention.5} parent=5 // pred_check_branch
      %3454 = sbr.rel (%p3452) target = $region72
    $region71: #{spatial_self_attention.5} parent=5 // pred_region
      %s3455 = ssub.s32 %s15, 2
      // Predicated region
      $region73: #{spatial_self_attention.5} parent=71 // pred_check
        %p3456 = pneg %p285
      $region74: #{spatial_self_attention.5} parent=71 // pred_check_branch
        %3458 = sbr.rel (%p3456) target = $region76
      $region75: #{spatial_self_attention.5} parent=71 // pred_region
        %s3459 = smul.u32 32, %s29
        %p3460 = scmp.lt.s32.totalorder %s28, 1
        %s3461 = scalar_select %p3460, %s28, 1
        %p3462 = scmp.lt.s32.totalorder %s3459, 31
        %s3463 = scalar_select %p3462, %s3459, 31
        %s3464 = smul.addr %s3461, 32
        %s3465 = sadd.s32 %s3463, %s3464
        %s3466 = smul.addr %s3465, 8
        %s3467 = scalar_lea.vmem %s9, %s3466
      $region76: #{spatial_self_attention.5} parent=71 // pred_fallthru
        _
    $region72: #{spatial_self_attention.5} parent=5 // pred_fallthru
      _
  $region6: #{spatial_self_attention.5} parent=0 // loop_footer
    %s19 = sadd.s32 1, %s15
  $region7: #{spatial_self_attention.5} parent=0 // loop_footer_branch
    %14 = sbr.rel target = $region3
  $region8: #{spatial_self_attention.5} parent=0 // loop_exit
    _

</llo_original>
